<compile_context>
chip_gen: v7x
topology: tpu7x:2x2x1
jax: 0.10.0
libtpu: 0.0.40
codegen_flags: <defaults>
</compile_context>

<pallas_src>
import math

import jax
import jax.numpy as jnp
from jax.experimental import pallas as pl
from jax.experimental.pallas import tpu as pltpu

START_TAG = "<START>"
STOP_TAG = "<STOP>"
PAD_TAG = "<PAD>"
tag_to_ix = {"H": 0, "E": 1, "T": 2, "O": 3, START_TAG: 4, STOP_TAG: 5, PAD_TAG: 6}
START_IDX = tag_to_ix[START_TAG]
STOP_IDX = tag_to_ix[STOP_TAG]
TAGSET_SIZE = len(tag_to_ix)


def _const_spec(shape):
    """Whole-array block, same block every grid step (weights stay VMEM-resident)."""
    nd = len(shape)
    return pl.BlockSpec(tuple(shape), lambda i, _nd=nd: (0,) * _nd)


def _per_sentence_spec(shape):
    """Leading axis indexed by the sentence grid axis."""
    nd = len(shape)
    return pl.BlockSpec((1,) + tuple(shape[1:]),
                        lambda i, _nd=nd: (i,) + (0,) * (_nd - 1))


def _sigmoid(z):
    # exact sigmoid via EUP tanh (no VPU divide, numerically safe)
    return 0.5 * (jnp.tanh(0.5 * z) + 1.0)


# ---------------------------------------------------------------------------
# Fused kernel: (folded) embedding -> BiLSTM -> tag projection -> Viterbi
#               -> in-kernel backtracking.   One grid step == one sentence.
# ---------------------------------------------------------------------------
def _fused_kernel(sent_ref, wfold_ref, b_ref, whh_ref, h0_ref, c0_ref,
                  wab_ref, bab_ref, transt_ref, stoprow_ref,
                  score_ref, tagseq_ref):
    L = tagseq_ref.shape[1]
    V = wfold_ref.shape[0]
    hp2 = h0_ref.shape[1]            # 2 * (hidden_dim // 2)
    hp = hp2 // 2
    T = transt_ref.shape[0]

    # ---- embedding + LSTM input projection folded into ONE matmul ----------
    # W_fold = embedding @ W_ih precomputed host-side; the exact-gather one-hot
    # matmul directly yields per-position gate pre-activations.
    sent = sent_ref[0]                                              # (L, 1) int32
    iota_v = jax.lax.broadcasted_iota(jnp.int32, (L, V), 1)
    onehot = (iota_v == sent).astype(jnp.float32)                   # (L, V)
    G = jnp.dot(onehot, wfold_ref[...],
                preferred_element_type=jnp.float32) + b_ref[...]    # (L, 8*hp)

    # Gate-major / direction-minor column layout (built in make_params):
    #   [i_f, i_b, f_f, f_b, g_f, g_b, o_f, o_b], each hp lanes wide.
    col8 = jax.lax.broadcasted_iota(jnp.int32, (1, 8 * hp), 1)
    fwd_mask8 = (col8 % (2 * hp)) < hp                              # fwd columns
    col2 = jax.lax.broadcasted_iota(jnp.int32, (1, 2 * hp), 1)
    fwd_mask2 = col2 < hp

    whh = whh_ref[...]                                              # (2hp, 8hp) block-diag
    h = h0_ref[...]                                                 # (1, 2hp) = [h_f | h_b]
    c = c0_ref[...]

    # fwd/bwd recurrences fused: ONE (1,2hp)x(2hp,8hp) MXU call per timestep.
    # TODO(synk): for large L switch this static unroll to lax.fori_loop with a
    # VMEM scratch for per-step hidden states / backpointers (vreg pressure).
    step_h = []
    for t in range(L):
        tb = L - 1 - t
        g_pre = jnp.where(fwd_mask8, G[t:t + 1, :], G[tb:tb + 1, :])
        g = g_pre + jnp.dot(h, whh, preferred_element_type=jnp.float32)
        i_g = _sigmoid(g[:, 0:2 * hp])
        f_g = _sigmoid(g[:, 2 * hp:4 * hp])
        g_g = jnp.tanh(g[:, 4 * hp:6 * hp])
        o_g = _sigmoid(g[:, 6 * hp:8 * hp])
        c = f_g * c + i_g * g_g
        h = o_g * jnp.tanh(c)
        step_h.append(h)                 # stays in vregs; no masked VMEM stores

    # lstm_out[p] = [h_fwd after pos p | h_bwd after pos p]; the bwd half of
    # position p is produced at loop step L-1-p.  One select, no scratch.
    h_fwd_order = jnp.concatenate(step_h, axis=0)                   # (L, 2hp)
    h_bwd_order = jnp.concatenate(step_h[::-1], axis=0)             # (L, 2hp)
    lstm_out = jnp.where(fwd_mask2, h_fwd_order, h_bwd_order)       # (L, 2hp)

    # ---- hidden2tag: A/B projections fused into ONE matmul -----------------
    # feats[row, step, :] == A[step] + B[row]   (hidden2tag bias folded into A)
    AB = jnp.dot(lstm_out, wab_ref[...],
                 preferred_element_type=jnp.float32) + bab_ref[...]  # (L, 2T)
    A = AB[:, 0:T]
    B = AB[:, T:2 * T]

    # ---- Viterbi forward recursion (L parallel chains, one per row) --------
    # max/argmax over prev-tag unrolled onto the VPU (no XLU lane reductions
    # on the serial path).
    trans_t = transt_ref[...]            # (T, T): trans_t[prev, next]
    tag_iota = jax.lax.broadcasted_iota(jnp.int32, (L, T), 1)
    fv = jnp.where(tag_iota == START_IDX, 0.0, -10000.0).astype(jnp.float32)

    bps = []                             # backpointers kept in vregs (small L)
    for step in range(L):
        best_v = fv[:, 0:1] + trans_t[0:1, :]                       # prev tag 0
        best_i = jnp.zeros((L, T), jnp.int32)
        for p in range(1, T):
            cand = fv[:, p:p + 1] + trans_t[p:p + 1, :]             # (L, T)
            upd = cand > best_v          # strict '>' == first-occurrence argmax
            best_v = jnp.where(upd, cand, best_v)
            best_i = jnp.where(upd, p, best_i)
        bps.append(best_i)
        fv = best_v + A[step:step + 1, :] + B                       # lazy emission add

    # ---- terminal max/argmax (VPU select chain) -----------------------------
    term = fv + stoprow_ref[...]                                    # (L, T)
    best_v = term[:, 0:1]
    cur = jnp.zeros((L, 1), jnp.int32)
    for n in range(1, T):
        cnd = term[:, n:n + 1]
        upd = cnd > best_v
        best_v = jnp.where(upd, cnd, best_v)
        cur = jnp.where(upd, n, cur)
    score_ref[0] = best_v                # path_score per chain (row)

    # ---- in-kernel backtracking ---------------------------------------------
    step_iota = jax.lax.broadcasted_iota(jnp.int32, (L, L), 1)
    tag_mat = jnp.where(step_iota == (L - 1), cur, 0)               # (L, L) int32
    for s in range(L - 1, 0, -1):
        sel = tag_iota == cur                                       # one-hot over tags
        cur = jnp.sum(jnp.where(sel, bps[s], 0), axis=1, keepdims=True)
        tag_mat = jnp.where(step_iota == (s - 1), cur, tag_mat)
    # bps[0] always points back to START_IDX; the torch-side assert is dropped
    # on purpose (it would force a host sync inside jit).
    tagseq_ref[0] = tag_mat


# ---------------------------------------------------------------------------
# Wrappers: sentences batched on the grid, weights resident across grid steps.
# ---------------------------------------------------------------------------
@jax.jit
def forward_batch(sentences, params):
    """sentences: (N, L) int32 -> (path_score (N, L), tag_seq (N, L, L))."""
    N, L = sentences.shape
    sent3d = sentences.reshape(N, L, 1).astype(jnp.int32)
    weight_args = (params["w_fold"], params["b_cat"], params["whh_blk"],
                   params["h0"], params["c0"], params["wab"], params["bab"],
                   params["trans_t"], params["stop_row"])
    score3d, tag_seq = pl.pallas_call(
        _fused_kernel,
        out_shape=(jax.ShapeDtypeStruct((N, L, 1), jnp.float32),
                   jax.ShapeDtypeStruct((N, L, L), jnp.int32)),
        grid=(N,),
        in_specs=[_per_sentence_spec((N, L, 1))]
                 + [_const_spec(w.shape) for w in weight_args],
        out_specs=(_per_sentence_spec((N, L, 1)),
                   _per_sentence_spec((N, L, L))),
        compiler_params=pltpu.CompilerParams(
            dimension_semantics=("arbitrary",)),
        # TODO(synk): once V/E/L grow, set vmem_limit_bytes explicitly and move
        # the folded embedding table to HBM (memory_space=pl.ANY) with a row
        # gather instead of the one-hot matmul (v7x has only 64 MiB VMEM).
        # TODO(synk): on v7x the fwd/bwd chains (and Viterbi rows) could be
        # split across the two TensorCores via core_map / a parallel axis.
    )(sent3d, *weight_args)
    return score3d[:, :, 0], tag_seq


def forward(sentence, params):
    """batch_size == 1 path of the torch module: (L,) -> ((L,), (L, L))."""
    score, tag_seq = forward_batch(sentence.reshape(1, -1), params)
    return score[0], tag_seq[0]


# ---------------------------------------------------------------------------
# Deterministic synthetic parameter construction (shapes from __init__),
# pre-laid-out for the fused kernel.
# ---------------------------------------------------------------------------
def make_params(key, vocab_size, embedding_dim, hidden_dim):
    hp = hidden_dim // 2
    H = hidden_dim                      # per-position lstm_out width (= 2 * hp)
    T = TAGSET_SIZE
    ks = jax.random.split(key, 16)
    k_lstm = 1.0 / math.sqrt(hp)
    k_lin = 1.0 / math.sqrt(hidden_dim * 2)

    def uni(k, shape, bound):
        return jax.random.uniform(k, shape, jnp.float32, -bound, bound)

    embedding = jax.random.normal(ks[0], (vocab_size, embedding_dim), jnp.float32)

    # PyTorch LSTM weights: W_ih (4*hp, E), W_hh (4*hp, hp), gate order [i, f, g, o].
    wih_f = uni(ks[1], (4 * hp, embedding_dim), k_lstm)
    whh_f = uni(ks[2], (4 * hp, hp), k_lstm)
    b_f = uni(ks[3], (4 * hp,), k_lstm) + uni(ks[4], (4 * hp,), k_lstm)   # b_ih + b_hh
    wih_b = uni(ks[5], (4 * hp, embedding_dim), k_lstm)
    whh_b = uni(ks[6], (4 * hp, hp), k_lstm)
    b_b = uni(ks[7], (4 * hp,), k_lstm) + uni(ks[8], (4 * hp,), k_lstm)

    # hidden2tag: Linear(hidden_dim*2, tagset_size)
    w_tag = uni(ks[9], (T, hidden_dim * 2), k_lin)
    b_tag = uni(ks[10], (T,), k_lin)

    # CRF transitions
    transitions = jax.random.normal(ks[11], (T, T), jnp.float32)
    transitions = transitions.at[START_IDX, :].set(-10000.0)
    transitions = transitions.at[:, STOP_IDX].set(-10000.0)

    # init_hidden(): torch resamples randn h0/c0 every forward call.
    # TODO(synk): fixed deterministic sample here (parity note vs torch).
    h0 = jax.random.normal(ks[12], (2, hp), jnp.float32)
    c0 = jax.random.normal(ks[13], (2, hp), jnp.float32)

    def gate_interleave(f_cols, b_cols):
        # f_cols, b_cols: (X, 4*hp) with PyTorch gate-column order [i, f, g, o].
        # -> (X, 8*hp) gate-major / direction-minor: [i_f,i_b,f_f,f_b,g_f,g_b,o_f,o_b]
        cols = []
        for g in range(4):
            cols.append(f_cols[:, g * hp:(g + 1) * hp])
            cols.append(b_cols[:, g * hp:(g + 1) * hp])
        return jnp.concatenate(cols, axis=1)

    # Fold embedding into the input projection: one (L,V)x(V,8*hp) matmul in-kernel.
    wih_cat = gate_interleave(jnp.transpose(wih_f), jnp.transpose(wih_b))  # (E, 8hp)
    w_fold = jnp.dot(embedding, wih_cat)                                   # (V, 8hp)
    b_cat = gate_interleave(b_f.reshape(1, 4 * hp), b_b.reshape(1, 4 * hp))  # (1, 8hp)

    # Block-diagonal hidden-hidden weights: [h_f | h_b] @ whh_blk gives both
    # directions' gate pre-activations in one MXU call per timestep.
    zero4 = jnp.zeros((hp, 4 * hp), jnp.float32)
    whh_blk = jnp.concatenate(
        [gate_interleave(jnp.transpose(whh_f), zero4),
         gate_interleave(zero4, jnp.transpose(whh_b))], axis=0)            # (2hp, 8hp)

    # hidden2tag split + combined: feats[row, step] = lstm[step]@wa + lstm[row]@wb + b
    wa = jnp.transpose(w_tag[:, :H])                                       # (2hp, T)
    wb = jnp.transpose(w_tag[:, H:])                                       # (2hp, T)
    wab = jnp.concatenate([wa, wb], axis=1)                                # (2hp, 2T)
    bab = jnp.concatenate([b_tag, jnp.zeros((T,), jnp.float32)]).reshape(1, 2 * T)

    return dict(
        w_fold=w_fold, b_cat=b_cat, whh_blk=whh_blk,
        h0=jnp.concatenate([h0[0:1], h0[1:2]], axis=1),    # (1, 2hp) = [h_f | h_b]
        c0=jnp.concatenate([c0[0:1], c0[1:2]], axis=1),
        wab=wab, bab=bab,
        trans_t=jnp.transpose(transitions),                # trans_t[prev, next]
        stop_row=transitions[STOP_IDX:STOP_IDX + 1, :],    # (1, T)
    )


if __name__ == "__main__":
    vocab_size = 20
    embedding_dim = 32
    hidden_dim = 32
    seq_len = 8
    num_sentences = 2

    key = jax.random.PRNGKey(0)
    k_param, k_sent = jax.random.split(key)
    params = make_params(k_param, vocab_size, embedding_dim, hidden_dim)
    sentences = jax.random.randint(k_sent, (num_sentences, seq_len), 0, vocab_size,
                                   dtype=jnp.int32)

    # batched path: weights stay VMEM-resident across the sentence grid axis
    scores, tag_seqs = forward_batch(sentences, params)
    jax.block_until_ready((scores, tag_seqs))
    assert scores.shape == (num_sentences, seq_len)
    assert tag_seqs.shape == (num_sentences, seq_len, seq_len)

    # single-sentence (batch_size == 1) path matching the torch forward()
    score1, tag_seq1 = forward(sentences[0], params)
    jax.block_until_ready((score1, tag_seq1))
    assert score1.shape == (seq_len,)
    assert tag_seq1.shape == (seq_len, seq_len)

    print("KERNEL_OK")
</pallas_src>

<mosaic_0001>
module attributes {stable_mosaic.version = 11 : i64} {
  func.func @_fused_kernel(%arg0: i32, %arg1: memref<1x8x1xi32, #tpu.memory_space<vmem>>, %arg2: memref<20x128xf32, #tpu.memory_space<vmem>>, %arg3: memref<1x128xf32, #tpu.memory_space<vmem>>, %arg4: memref<32x128xf32, #tpu.memory_space<vmem>>, %arg5: memref<1x32xf32, #tpu.memory_space<vmem>>, %arg6: memref<1x32xf32, #tpu.memory_space<vmem>>, %arg7: memref<32x14xf32, #tpu.memory_space<vmem>>, %arg8: memref<1x14xf32, #tpu.memory_space<vmem>>, %arg9: memref<7x7xf32, #tpu.memory_space<vmem>>, %arg10: memref<1x7xf32, #tpu.memory_space<vmem>>, %arg11: memref<1x8x1xf32, #tpu.memory_space<vmem>>, %arg12: memref<1x8x8xi32, #tpu.memory_space<vmem>>) attributes {dimension_semantics = [#tpu.dimension_semantics<arbitrary>], iteration_bounds = array<i64: 2>, scalar_prefetch = 0 : i64, scratch_operands = 0 : i64, tpu.core_type = #tpu.core_type<tc>, window_params = [{transform_indices = @transform_0, window_bounds = array<i64: 1, 8, 1>}, {pipeline_mode = #tpu.pipeline_mode<synchronous>, transform_indices = @transform_1, window_bounds = array<i64: 20, 128>}, {pipeline_mode = #tpu.pipeline_mode<synchronous>, transform_indices = @transform_2, window_bounds = array<i64: 1, 128>}, {pipeline_mode = #tpu.pipeline_mode<synchronous>, transform_indices = @transform_3, window_bounds = array<i64: 32, 128>}, {pipeline_mode = #tpu.pipeline_mode<synchronous>, transform_indices = @transform_4, window_bounds = array<i64: 1, 32>}, {pipeline_mode = #tpu.pipeline_mode<synchronous>, transform_indices = @transform_5, window_bounds = array<i64: 1, 32>}, {pipeline_mode = #tpu.pipeline_mode<synchronous>, transform_indices = @transform_6, window_bounds = array<i64: 32, 14>}, {pipeline_mode = #tpu.pipeline_mode<synchronous>, transform_indices = @transform_7, window_bounds = array<i64: 1, 14>}, {pipeline_mode = #tpu.pipeline_mode<synchronous>, transform_indices = @transform_8, window_bounds = array<i64: 7, 7>}, {pipeline_mode = #tpu.pipeline_mode<synchronous>, transform_indices = @transform_9, window_bounds = array<i64: 1, 7>}, {transform_indices = @transform_10, window_bounds = array<i64: 1, 8, 1>}, {transform_indices = @transform_11, window_bounds = array<i64: 1, 8, 8>}]} {
    %c0 = arith.constant 0 : index
    %c0_0 = arith.constant 0 : index
    %c0_1 = arith.constant 0 : index
    %0 = vector.load %arg1[%c0, %c0_0, %c0_1] : memref<1x8x1xi32, #tpu.memory_space<vmem>>, vector<1x8x1xi32>
    %1 = vector.shape_cast %0 : vector<1x8x1xi32> to vector<8x1xi32>
    %2 = tpu.iota {dimensions = array<i32: 1>} : vector<8x20xi32>
    %3 = vector.broadcast %1 : vector<8x1xi32> to vector<8x20xi32>
    %4 = arith.cmpi eq, %2, %3 : vector<8x20xi32>
    %5 = arith.extui %4 : vector<8x20xi1> to vector<8x20xi32>
    %6 = arith.sitofp %5 : vector<8x20xi32> to vector<8x20xf32>
    %c0_2 = arith.constant 0 : index
    %c0_3 = arith.constant 0 : index
    %7 = vector.load %arg2[%c0_2, %c0_3] : memref<20x128xf32, #tpu.memory_space<vmem>>, vector<20x128xf32>
    %cst = arith.constant dense<0.000000e+00> : vector<8x128xf32>
    %8 = tpu.matmul %6, %7, %cst {dimension_numbers = #tpu.dot_dimension_numbers<[1], [0], [0], [1], [0, 0, 1, 1], [], []>} : vector<8x20xf32>, vector<20x128xf32>, vector<8x128xf32> -> vector<8x128xf32>
    %c0_4 = arith.constant 0 : index
    %c0_5 = arith.constant 0 : index
    %9 = vector.load %arg3[%c0_4, %c0_5] : memref<1x128xf32, #tpu.memory_space<vmem>>, vector<1x128xf32>
    %10 = vector.broadcast %9 : vector<1x128xf32> to vector<8x128xf32>
    %11 = arith.addf %8, %10 : vector<8x128xf32>
    %12 = tpu.iota {dimensions = array<i32: 1>} : vector<1x128xi32>
    %c32_i32 = arith.constant 32 : i32
    %c0_i32 = arith.constant 0 : i32
    %13 = arith.cmpi eq, %c32_i32, %c0_i32 : i32
    %c1_i32 = arith.constant 1 : i32
    %14 = arith.select %13, %c1_i32, %c32_i32 : i32
    %15 = vector.broadcast %14 : i32 to vector<1x128xi32>
    %16 = arith.remsi %12, %15 : vector<1x128xi32>
    %c0_i32_6 = arith.constant 0 : i32
    %17 = vector.broadcast %c0_i32_6 : i32 to vector<1x128xi32>
    %18 = arith.cmpi ne, %16, %17 : vector<1x128xi32>
    %c0_i32_7 = arith.constant 0 : i32
    %19 = vector.broadcast %c0_i32_7 : i32 to vector<1x128xi32>
    %20 = arith.cmpi slt, %16, %19 : vector<1x128xi32>
    %c0_i32_8 = arith.constant 0 : i32
    %21 = arith.cmpi slt, %14, %c0_i32_8 : i32
    %22 = vector.broadcast %21 : i1 to vector<1x128xi1>
    %23 = vector.broadcast %22 : vector<1x128xi1> to vector<1x128xi1>
    %24 = arith.xori %20, %23 : vector<1x128xi1>
    %25 = arith.andi %24, %18 : vector<1x128xi1>
    %26 = vector.broadcast %14 : i32 to vector<1x128xi32>
    %27 = arith.addi %16, %26 : vector<1x128xi32>
    %28 = arith.select %25, %27, %16 : vector<1x128xi1>, vector<1x128xi32>
    %c16_i32 = arith.constant 16 : i32
    %29 = vector.broadcast %c16_i32 : i32 to vector<1x128xi32>
    %30 = arith.cmpi slt, %28, %29 : vector<1x128xi32>
    %31 = tpu.iota {dimensions = array<i32: 1>} : vector<1x32xi32>
    %c16_i32_9 = arith.constant 16 : i32
    %32 = vector.broadcast %c16_i32_9 : i32 to vector<1x32xi32>
    %33 = arith.cmpi slt, %31, %32 : vector<1x32xi32>
    %c0_10 = arith.constant 0 : index
    %c0_11 = arith.constant 0 : index
    %34 = vector.load %arg4[%c0_10, %c0_11] : memref<32x128xf32, #tpu.memory_space<vmem>>, vector<32x128xf32>
    %c0_12 = arith.constant 0 : index
    %c0_13 = arith.constant 0 : index
    %35 = vector.load %arg5[%c0_12, %c0_13] : memref<1x32xf32, #tpu.memory_space<vmem>>, vector<1x32xf32>
    %c0_14 = arith.constant 0 : index
    %c0_15 = arith.constant 0 : index
    %36 = vector.load %arg6[%c0_14, %c0_15] : memref<1x32xf32, #tpu.memory_space<vmem>>, vector<1x32xf32>
    %37 = vector.extract_strided_slice %11 {offsets = [0, 0], sizes = [1, 128], strides = [1, 1]} : vector<8x128xf32> to vector<1x128xf32>
    %38 = vector.extract_strided_slice %11 {offsets = [7, 0], sizes = [1, 128], strides = [1, 1]} : vector<8x128xf32> to vector<1x128xf32>
    %39 = arith.select %30, %37, %38 : vector<1x128xi1>, vector<1x128xf32>
    %cst_16 = arith.constant dense<0.000000e+00> : vector<1x128xf32>
    %40 = tpu.matmul %35, %34, %cst_16 {dimension_numbers = #tpu.dot_dimension_numbers<[1], [0], [0], [1], [0, 0, 1, 1], [], []>} : vector<1x32xf32>, vector<32x128xf32>, vector<1x128xf32> -> vector<1x128xf32>
    %41 = arith.addf %39, %40 : vector<1x128xf32>
    %42 = vector.extract_strided_slice %41 {offsets = [0, 0], sizes = [1, 32], strides = [1, 1]} : vector<1x128xf32> to vector<1x32xf32>
    %cst_17 = arith.constant 5.000000e-01 : f32
    %43 = vector.broadcast %cst_17 : f32 to vector<1x32xf32>
    %44 = arith.mulf %43, %42 : vector<1x32xf32>
    %45 = math.tanh %44 : vector<1x32xf32>
    %cst_18 = arith.constant 1.000000e+00 : f32
    %46 = vector.broadcast %cst_18 : f32 to vector<1x32xf32>
    %47 = arith.addf %45, %46 : vector<1x32xf32>
    %cst_19 = arith.constant 5.000000e-01 : f32
    %48 = vector.broadcast %cst_19 : f32 to vector<1x32xf32>
    %49 = arith.mulf %48, %47 : vector<1x32xf32>
    %50 = vector.extract_strided_slice %41 {offsets = [0, 32], sizes = [1, 32], strides = [1, 1]} : vector<1x128xf32> to vector<1x32xf32>
    %cst_20 = arith.constant 5.000000e-01 : f32
    %51 = vector.broadcast %cst_20 : f32 to vector<1x32xf32>
    %52 = arith.mulf %51, %50 : vector<1x32xf32>
    %53 = math.tanh %52 : vector<1x32xf32>
    %cst_21 = arith.constant 1.000000e+00 : f32
    %54 = vector.broadcast %cst_21 : f32 to vector<1x32xf32>
    %55 = arith.addf %53, %54 : vector<1x32xf32>
    %cst_22 = arith.constant 5.000000e-01 : f32
    %56 = vector.broadcast %cst_22 : f32 to vector<1x32xf32>
    %57 = arith.mulf %56, %55 : vector<1x32xf32>
    %58 = vector.extract_strided_slice %41 {offsets = [0, 64], sizes = [1, 32], strides = [1, 1]} : vector<1x128xf32> to vector<1x32xf32>
    %59 = math.tanh %58 : vector<1x32xf32>
    %60 = vector.extract_strided_slice %41 {offsets = [0, 96], sizes = [1, 32], strides = [1, 1]} : vector<1x128xf32> to vector<1x32xf32>
    %cst_23 = arith.constant 5.000000e-01 : f32
    %61 = vector.broadcast %cst_23 : f32 to vector<1x32xf32>
    %62 = arith.mulf %61, %60 : vector<1x32xf32>
    %63 = math.tanh %62 : vector<1x32xf32>
    %cst_24 = arith.constant 1.000000e+00 : f32
    %64 = vector.broadcast %cst_24 : f32 to vector<1x32xf32>
    %65 = arith.addf %63, %64 : vector<1x32xf32>
    %cst_25 = arith.constant 5.000000e-01 : f32
    %66 = vector.broadcast %cst_25 : f32 to vector<1x32xf32>
    %67 = arith.mulf %66, %65 : vector<1x32xf32>
    %68 = arith.mulf %57, %36 : vector<1x32xf32>
    %69 = arith.mulf %49, %59 : vector<1x32xf32>
    %70 = arith.addf %68, %69 : vector<1x32xf32>
    %71 = math.tanh %70 : vector<1x32xf32>
    %72 = arith.mulf %67, %71 : vector<1x32xf32>
    %73 = vector.extract_strided_slice %11 {offsets = [1, 0], sizes = [1, 128], strides = [1, 1]} : vector<8x128xf32> to vector<1x128xf32>
    %74 = vector.extract_strided_slice %11 {offsets = [6, 0], sizes = [1, 128], strides = [1, 1]} : vector<8x128xf32> to vector<1x128xf32>
    %75 = arith.select %30, %73, %74 : vector<1x128xi1>, vector<1x128xf32>
    %cst_26 = arith.constant dense<0.000000e+00> : vector<1x128xf32>
    %76 = tpu.matmul %72, %34, %cst_26 {dimension_numbers = #tpu.dot_dimension_numbers<[1], [0], [0], [1], [0, 0, 1, 1], [], []>} : vector<1x32xf32>, vector<32x128xf32>, vector<1x128xf32> -> vector<1x128xf32>
    %77 = arith.addf %75, %76 : vector<1x128xf32>
    %78 = vector.extract_strided_slice %77 {offsets = [0, 0], sizes = [1, 32], strides = [1, 1]} : vector<1x128xf32> to vector<1x32xf32>
    %cst_27 = arith.constant 5.000000e-01 : f32
    %79 = vector.broadcast %cst_27 : f32 to vector<1x32xf32>
    %80 = arith.mulf %79, %78 : vector<1x32xf32>
    %81 = math.tanh %80 : vector<1x32xf32>
    %cst_28 = arith.constant 1.000000e+00 : f32
    %82 = vector.broadcast %cst_28 : f32 to vector<1x32xf32>
    %83 = arith.addf %81, %82 : vector<1x32xf32>
    %cst_29 = arith.constant 5.000000e-01 : f32
    %84 = vector.broadcast %cst_29 : f32 to vector<1x32xf32>
    %85 = arith.mulf %84, %83 : vector<1x32xf32>
    %86 = vector.extract_strided_slice %77 {offsets = [0, 32], sizes = [1, 32], strides = [1, 1]} : vector<1x128xf32> to vector<1x32xf32>
    %cst_30 = arith.constant 5.000000e-01 : f32
    %87 = vector.broadcast %cst_30 : f32 to vector<1x32xf32>
    %88 = arith.mulf %87, %86 : vector<1x32xf32>
    %89 = math.tanh %88 : vector<1x32xf32>
    %cst_31 = arith.constant 1.000000e+00 : f32
    %90 = vector.broadcast %cst_31 : f32 to vector<1x32xf32>
    %91 = arith.addf %89, %90 : vector<1x32xf32>
    %cst_32 = arith.constant 5.000000e-01 : f32
    %92 = vector.broadcast %cst_32 : f32 to vector<1x32xf32>
    %93 = arith.mulf %92, %91 : vector<1x32xf32>
    %94 = vector.extract_strided_slice %77 {offsets = [0, 64], sizes = [1, 32], strides = [1, 1]} : vector<1x128xf32> to vector<1x32xf32>
    %95 = math.tanh %94 : vector<1x32xf32>
    %96 = vector.extract_strided_slice %77 {offsets = [0, 96], sizes = [1, 32], strides = [1, 1]} : vector<1x128xf32> to vector<1x32xf32>
    %cst_33 = arith.constant 5.000000e-01 : f32
    %97 = vector.broadcast %cst_33 : f32 to vector<1x32xf32>
    %98 = arith.mulf %97, %96 : vector<1x32xf32>
    %99 = math.tanh %98 : vector<1x32xf32>
    %cst_34 = arith.constant 1.000000e+00 : f32
    %100 = vector.broadcast %cst_34 : f32 to vector<1x32xf32>
    %101 = arith.addf %99, %100 : vector<1x32xf32>
    %cst_35 = arith.constant 5.000000e-01 : f32
    %102 = vector.broadcast %cst_35 : f32 to vector<1x32xf32>
    %103 = arith.mulf %102, %101 : vector<1x32xf32>
    %104 = arith.mulf %93, %70 : vector<1x32xf32>
    %105 = arith.mulf %85, %95 : vector<1x32xf32>
    %106 = arith.addf %104, %105 : vector<1x32xf32>
    %107 = math.tanh %106 : vector<1x32xf32>
    %108 = arith.mulf %103, %107 : vector<1x32xf32>
    %109 = vector.extract_strided_slice %11 {offsets = [2, 0], sizes = [1, 128], strides = [1, 1]} : vector<8x128xf32> to vector<1x128xf32>
    %110 = vector.extract_strided_slice %11 {offsets = [5, 0], sizes = [1, 128], strides = [1, 1]} : vector<8x128xf32> to vector<1x128xf32>
    %111 = arith.select %30, %109, %110 : vector<1x128xi1>, vector<1x128xf32>
    %cst_36 = arith.constant dense<0.000000e+00> : vector<1x128xf32>
    %112 = tpu.matmul %108, %34, %cst_36 {dimension_numbers = #tpu.dot_dimension_numbers<[1], [0], [0], [1], [0, 0, 1, 1], [], []>} : vector<1x32xf32>, vector<32x128xf32>, vector<1x128xf32> -> vector<1x128xf32>
    %113 = arith.addf %111, %112 : vector<1x128xf32>
    %114 = vector.extract_strided_slice %113 {offsets = [0, 0], sizes = [1, 32], strides = [1, 1]} : vector<1x128xf32> to vector<1x32xf32>
    %cst_37 = arith.constant 5.000000e-01 : f32
    %115 = vector.broadcast %cst_37 : f32 to vector<1x32xf32>
    %116 = arith.mulf %115, %114 : vector<1x32xf32>
    %117 = math.tanh %116 : vector<1x32xf32>
    %cst_38 = arith.constant 1.000000e+00 : f32
    %118 = vector.broadcast %cst_38 : f32 to vector<1x32xf32>
    %119 = arith.addf %117, %118 : vector<1x32xf32>
    %cst_39 = arith.constant 5.000000e-01 : f32
    %120 = vector.broadcast %cst_39 : f32 to vector<1x32xf32>
    %121 = arith.mulf %120, %119 : vector<1x32xf32>
    %122 = vector.extract_strided_slice %113 {offsets = [0, 32], sizes = [1, 32], strides = [1, 1]} : vector<1x128xf32> to vector<1x32xf32>
    %cst_40 = arith.constant 5.000000e-01 : f32
    %123 = vector.broadcast %cst_40 : f32 to vector<1x32xf32>
    %124 = arith.mulf %123, %122 : vector<1x32xf32>
    %125 = math.tanh %124 : vector<1x32xf32>
    %cst_41 = arith.constant 1.000000e+00 : f32
    %126 = vector.broadcast %cst_41 : f32 to vector<1x32xf32>
    %127 = arith.addf %125, %126 : vector<1x32xf32>
    %cst_42 = arith.constant 5.000000e-01 : f32
    %128 = vector.broadcast %cst_42 : f32 to vector<1x32xf32>
    %129 = arith.mulf %128, %127 : vector<1x32xf32>
    %130 = vector.extract_strided_slice %113 {offsets = [0, 64], sizes = [1, 32], strides = [1, 1]} : vector<1x128xf32> to vector<1x32xf32>
    %131 = math.tanh %130 : vector<1x32xf32>
    %132 = vector.extract_strided_slice %113 {offsets = [0, 96], sizes = [1, 32], strides = [1, 1]} : vector<1x128xf32> to vector<1x32xf32>
    %cst_43 = arith.constant 5.000000e-01 : f32
    %133 = vector.broadcast %cst_43 : f32 to vector<1x32xf32>
    %134 = arith.mulf %133, %132 : vector<1x32xf32>
    %135 = math.tanh %134 : vector<1x32xf32>
    %cst_44 = arith.constant 1.000000e+00 : f32
    %136 = vector.broadcast %cst_44 : f32 to vector<1x32xf32>
    %137 = arith.addf %135, %136 : vector<1x32xf32>
    %cst_45 = arith.constant 5.000000e-01 : f32
    %138 = vector.broadcast %cst_45 : f32 to vector<1x32xf32>
    %139 = arith.mulf %138, %137 : vector<1x32xf32>
    %140 = arith.mulf %129, %106 : vector<1x32xf32>
    %141 = arith.mulf %121, %131 : vector<1x32xf32>
    %142 = arith.addf %140, %141 : vector<1x32xf32>
    %143 = math.tanh %142 : vector<1x32xf32>
    %144 = arith.mulf %139, %143 : vector<1x32xf32>
    %145 = vector.extract_strided_slice %11 {offsets = [3, 0], sizes = [1, 128], strides = [1, 1]} : vector<8x128xf32> to vector<1x128xf32>
    %146 = vector.extract_strided_slice %11 {offsets = [4, 0], sizes = [1, 128], strides = [1, 1]} : vector<8x128xf32> to vector<1x128xf32>
    %147 = arith.select %30, %145, %146 : vector<1x128xi1>, vector<1x128xf32>
    %cst_46 = arith.constant dense<0.000000e+00> : vector<1x128xf32>
    %148 = tpu.matmul %144, %34, %cst_46 {dimension_numbers = #tpu.dot_dimension_numbers<[1], [0], [0], [1], [0, 0, 1, 1], [], []>} : vector<1x32xf32>, vector<32x128xf32>, vector<1x128xf32> -> vector<1x128xf32>
    %149 = arith.addf %147, %148 : vector<1x128xf32>
    %150 = vector.extract_strided_slice %149 {offsets = [0, 0], sizes = [1, 32], strides = [1, 1]} : vector<1x128xf32> to vector<1x32xf32>
    %cst_47 = arith.constant 5.000000e-01 : f32
    %151 = vector.broadcast %cst_47 : f32 to vector<1x32xf32>
    %152 = arith.mulf %151, %150 : vector<1x32xf32>
    %153 = math.tanh %152 : vector<1x32xf32>
    %cst_48 = arith.constant 1.000000e+00 : f32
    %154 = vector.broadcast %cst_48 : f32 to vector<1x32xf32>
    %155 = arith.addf %153, %154 : vector<1x32xf32>
    %cst_49 = arith.constant 5.000000e-01 : f32
    %156 = vector.broadcast %cst_49 : f32 to vector<1x32xf32>
    %157 = arith.mulf %156, %155 : vector<1x32xf32>
    %158 = vector.extract_strided_slice %149 {offsets = [0, 32], sizes = [1, 32], strides = [1, 1]} : vector<1x128xf32> to vector<1x32xf32>
    %cst_50 = arith.constant 5.000000e-01 : f32
    %159 = vector.broadcast %cst_50 : f32 to vector<1x32xf32>
    %160 = arith.mulf %159, %158 : vector<1x32xf32>
    %161 = math.tanh %160 : vector<1x32xf32>
    %cst_51 = arith.constant 1.000000e+00 : f32
    %162 = vector.broadcast %cst_51 : f32 to vector<1x32xf32>
    %163 = arith.addf %161, %162 : vector<1x32xf32>
    %cst_52 = arith.constant 5.000000e-01 : f32
    %164 = vector.broadcast %cst_52 : f32 to vector<1x32xf32>
    %165 = arith.mulf %164, %163 : vector<1x32xf32>
    %166 = vector.extract_strided_slice %149 {offsets = [0, 64], sizes = [1, 32], strides = [1, 1]} : vector<1x128xf32> to vector<1x32xf32>
    %167 = math.tanh %166 : vector<1x32xf32>
    %168 = vector.extract_strided_slice %149 {offsets = [0, 96], sizes = [1, 32], strides = [1, 1]} : vector<1x128xf32> to vector<1x32xf32>
    %cst_53 = arith.constant 5.000000e-01 : f32
    %169 = vector.broadcast %cst_53 : f32 to vector<1x32xf32>
    %170 = arith.mulf %169, %168 : vector<1x32xf32>
    %171 = math.tanh %170 : vector<1x32xf32>
    %cst_54 = arith.constant 1.000000e+00 : f32
    %172 = vector.broadcast %cst_54 : f32 to vector<1x32xf32>
    %173 = arith.addf %171, %172 : vector<1x32xf32>
    %cst_55 = arith.constant 5.000000e-01 : f32
    %174 = vector.broadcast %cst_55 : f32 to vector<1x32xf32>
    %175 = arith.mulf %174, %173 : vector<1x32xf32>
    %176 = arith.mulf %165, %142 : vector<1x32xf32>
    %177 = arith.mulf %157, %167 : vector<1x32xf32>
    %178 = arith.addf %176, %177 : vector<1x32xf32>
    %179 = math.tanh %178 : vector<1x32xf32>
    %180 = arith.mulf %175, %179 : vector<1x32xf32>
    %181 = vector.extract_strided_slice %11 {offsets = [4, 0], sizes = [1, 128], strides = [1, 1]} : vector<8x128xf32> to vector<1x128xf32>
    %182 = vector.extract_strided_slice %11 {offsets = [3, 0], sizes = [1, 128], strides = [1, 1]} : vector<8x128xf32> to vector<1x128xf32>
    %183 = arith.select %30, %181, %182 : vector<1x128xi1>, vector<1x128xf32>
    %cst_56 = arith.constant dense<0.000000e+00> : vector<1x128xf32>
    %184 = tpu.matmul %180, %34, %cst_56 {dimension_numbers = #tpu.dot_dimension_numbers<[1], [0], [0], [1], [0, 0, 1, 1], [], []>} : vector<1x32xf32>, vector<32x128xf32>, vector<1x128xf32> -> vector<1x128xf32>
    %185 = arith.addf %183, %184 : vector<1x128xf32>
    %186 = vector.extract_strided_slice %185 {offsets = [0, 0], sizes = [1, 32], strides = [1, 1]} : vector<1x128xf32> to vector<1x32xf32>
    %cst_57 = arith.constant 5.000000e-01 : f32
    %187 = vector.broadcast %cst_57 : f32 to vector<1x32xf32>
    %188 = arith.mulf %187, %186 : vector<1x32xf32>
    %189 = math.tanh %188 : vector<1x32xf32>
    %cst_58 = arith.constant 1.000000e+00 : f32
    %190 = vector.broadcast %cst_58 : f32 to vector<1x32xf32>
    %191 = arith.addf %189, %190 : vector<1x32xf32>
    %cst_59 = arith.constant 5.000000e-01 : f32
    %192 = vector.broadcast %cst_59 : f32 to vector<1x32xf32>
    %193 = arith.mulf %192, %191 : vector<1x32xf32>
    %194 = vector.extract_strided_slice %185 {offsets = [0, 32], sizes = [1, 32], strides = [1, 1]} : vector<1x128xf32> to vector<1x32xf32>
    %cst_60 = arith.constant 5.000000e-01 : f32
    %195 = vector.broadcast %cst_60 : f32 to vector<1x32xf32>
    %196 = arith.mulf %195, %194 : vector<1x32xf32>
    %197 = math.tanh %196 : vector<1x32xf32>
    %cst_61 = arith.constant 1.000000e+00 : f32
    %198 = vector.broadcast %cst_61 : f32 to vector<1x32xf32>
    %199 = arith.addf %197, %198 : vector<1x32xf32>
    %cst_62 = arith.constant 5.000000e-01 : f32
    %200 = vector.broadcast %cst_62 : f32 to vector<1x32xf32>
    %201 = arith.mulf %200, %199 : vector<1x32xf32>
    %202 = vector.extract_strided_slice %185 {offsets = [0, 64], sizes = [1, 32], strides = [1, 1]} : vector<1x128xf32> to vector<1x32xf32>
    %203 = math.tanh %202 : vector<1x32xf32>
    %204 = vector.extract_strided_slice %185 {offsets = [0, 96], sizes = [1, 32], strides = [1, 1]} : vector<1x128xf32> to vector<1x32xf32>
    %cst_63 = arith.constant 5.000000e-01 : f32
    %205 = vector.broadcast %cst_63 : f32 to vector<1x32xf32>
    %206 = arith.mulf %205, %204 : vector<1x32xf32>
    %207 = math.tanh %206 : vector<1x32xf32>
    %cst_64 = arith.constant 1.000000e+00 : f32
    %208 = vector.broadcast %cst_64 : f32 to vector<1x32xf32>
    %209 = arith.addf %207, %208 : vector<1x32xf32>
    %cst_65 = arith.constant 5.000000e-01 : f32
    %210 = vector.broadcast %cst_65 : f32 to vector<1x32xf32>
    %211 = arith.mulf %210, %209 : vector<1x32xf32>
    %212 = arith.mulf %201, %178 : vector<1x32xf32>
    %213 = arith.mulf %193, %203 : vector<1x32xf32>
    %214 = arith.addf %212, %213 : vector<1x32xf32>
    %215 = math.tanh %214 : vector<1x32xf32>
    %216 = arith.mulf %211, %215 : vector<1x32xf32>
    %217 = vector.extract_strided_slice %11 {offsets = [5, 0], sizes = [1, 128], strides = [1, 1]} : vector<8x128xf32> to vector<1x128xf32>
    %218 = vector.extract_strided_slice %11 {offsets = [2, 0], sizes = [1, 128], strides = [1, 1]} : vector<8x128xf32> to vector<1x128xf32>
    %219 = arith.select %30, %217, %218 : vector<1x128xi1>, vector<1x128xf32>
    %cst_66 = arith.constant dense<0.000000e+00> : vector<1x128xf32>
    %220 = tpu.matmul %216, %34, %cst_66 {dimension_numbers = #tpu.dot_dimension_numbers<[1], [0], [0], [1], [0, 0, 1, 1], [], []>} : vector<1x32xf32>, vector<32x128xf32>, vector<1x128xf32> -> vector<1x128xf32>
    %221 = arith.addf %219, %220 : vector<1x128xf32>
    %222 = vector.extract_strided_slice %221 {offsets = [0, 0], sizes = [1, 32], strides = [1, 1]} : vector<1x128xf32> to vector<1x32xf32>
    %cst_67 = arith.constant 5.000000e-01 : f32
    %223 = vector.broadcast %cst_67 : f32 to vector<1x32xf32>
    %224 = arith.mulf %223, %222 : vector<1x32xf32>
    %225 = math.tanh %224 : vector<1x32xf32>
    %cst_68 = arith.constant 1.000000e+00 : f32
    %226 = vector.broadcast %cst_68 : f32 to vector<1x32xf32>
    %227 = arith.addf %225, %226 : vector<1x32xf32>
    %cst_69 = arith.constant 5.000000e-01 : f32
    %228 = vector.broadcast %cst_69 : f32 to vector<1x32xf32>
    %229 = arith.mulf %228, %227 : vector<1x32xf32>
    %230 = vector.extract_strided_slice %221 {offsets = [0, 32], sizes = [1, 32], strides = [1, 1]} : vector<1x128xf32> to vector<1x32xf32>
    %cst_70 = arith.constant 5.000000e-01 : f32
    %231 = vector.broadcast %cst_70 : f32 to vector<1x32xf32>
    %232 = arith.mulf %231, %230 : vector<1x32xf32>
    %233 = math.tanh %232 : vector<1x32xf32>
    %cst_71 = arith.constant 1.000000e+00 : f32
    %234 = vector.broadcast %cst_71 : f32 to vector<1x32xf32>
    %235 = arith.addf %233, %234 : vector<1x32xf32>
    %cst_72 = arith.constant 5.000000e-01 : f32
    %236 = vector.broadcast %cst_72 : f32 to vector<1x32xf32>
    %237 = arith.mulf %236, %235 : vector<1x32xf32>
    %238 = vector.extract_strided_slice %221 {offsets = [0, 64], sizes = [1, 32], strides = [1, 1]} : vector<1x128xf32> to vector<1x32xf32>
    %239 = math.tanh %238 : vector<1x32xf32>
    %240 = vector.extract_strided_slice %221 {offsets = [0, 96], sizes = [1, 32], strides = [1, 1]} : vector<1x128xf32> to vector<1x32xf32>
    %cst_73 = arith.constant 5.000000e-01 : f32
    %241 = vector.broadcast %cst_73 : f32 to vector<1x32xf32>
    %242 = arith.mulf %241, %240 : vector<1x32xf32>
    %243 = math.tanh %242 : vector<1x32xf32>
    %cst_74 = arith.constant 1.000000e+00 : f32
    %244 = vector.broadcast %cst_74 : f32 to vector<1x32xf32>
    %245 = arith.addf %243, %244 : vector<1x32xf32>
    %cst_75 = arith.constant 5.000000e-01 : f32
    %246 = vector.broadcast %cst_75 : f32 to vector<1x32xf32>
    %247 = arith.mulf %246, %245 : vector<1x32xf32>
    %248 = arith.mulf %237, %214 : vector<1x32xf32>
    %249 = arith.mulf %229, %239 : vector<1x32xf32>
    %250 = arith.addf %248, %249 : vector<1x32xf32>
    %251 = math.tanh %250 : vector<1x32xf32>
    %252 = arith.mulf %247, %251 : vector<1x32xf32>
    %253 = vector.extract_strided_slice %11 {offsets = [6, 0], sizes = [1, 128], strides = [1, 1]} : vector<8x128xf32> to vector<1x128xf32>
    %254 = vector.extract_strided_slice %11 {offsets = [1, 0], sizes = [1, 128], strides = [1, 1]} : vector<8x128xf32> to vector<1x128xf32>
    %255 = arith.select %30, %253, %254 : vector<1x128xi1>, vector<1x128xf32>
    %cst_76 = arith.constant dense<0.000000e+00> : vector<1x128xf32>
    %256 = tpu.matmul %252, %34, %cst_76 {dimension_numbers = #tpu.dot_dimension_numbers<[1], [0], [0], [1], [0, 0, 1, 1], [], []>} : vector<1x32xf32>, vector<32x128xf32>, vector<1x128xf32> -> vector<1x128xf32>
    %257 = arith.addf %255, %256 : vector<1x128xf32>
    %258 = vector.extract_strided_slice %257 {offsets = [0, 0], sizes = [1, 32], strides = [1, 1]} : vector<1x128xf32> to vector<1x32xf32>
    %cst_77 = arith.constant 5.000000e-01 : f32
    %259 = vector.broadcast %cst_77 : f32 to vector<1x32xf32>
    %260 = arith.mulf %259, %258 : vector<1x32xf32>
    %261 = math.tanh %260 : vector<1x32xf32>
    %cst_78 = arith.constant 1.000000e+00 : f32
    %262 = vector.broadcast %cst_78 : f32 to vector<1x32xf32>
    %263 = arith.addf %261, %262 : vector<1x32xf32>
    %cst_79 = arith.constant 5.000000e-01 : f32
    %264 = vector.broadcast %cst_79 : f32 to vector<1x32xf32>
    %265 = arith.mulf %264, %263 : vector<1x32xf32>
    %266 = vector.extract_strided_slice %257 {offsets = [0, 32], sizes = [1, 32], strides = [1, 1]} : vector<1x128xf32> to vector<1x32xf32>
    %cst_80 = arith.constant 5.000000e-01 : f32
    %267 = vector.broadcast %cst_80 : f32 to vector<1x32xf32>
    %268 = arith.mulf %267, %266 : vector<1x32xf32>
    %269 = math.tanh %268 : vector<1x32xf32>
    %cst_81 = arith.constant 1.000000e+00 : f32
    %270 = vector.broadcast %cst_81 : f32 to vector<1x32xf32>
    %271 = arith.addf %269, %270 : vector<1x32xf32>
    %cst_82 = arith.constant 5.000000e-01 : f32
    %272 = vector.broadcast %cst_82 : f32 to vector<1x32xf32>
    %273 = arith.mulf %272, %271 : vector<1x32xf32>
    %274 = vector.extract_strided_slice %257 {offsets = [0, 64], sizes = [1, 32], strides = [1, 1]} : vector<1x128xf32> to vector<1x32xf32>
    %275 = math.tanh %274 : vector<1x32xf32>
    %276 = vector.extract_strided_slice %257 {offsets = [0, 96], sizes = [1, 32], strides = [1, 1]} : vector<1x128xf32> to vector<1x32xf32>
    %cst_83 = arith.constant 5.000000e-01 : f32
    %277 = vector.broadcast %cst_83 : f32 to vector<1x32xf32>
    %278 = arith.mulf %277, %276 : vector<1x32xf32>
    %279 = math.tanh %278 : vector<1x32xf32>
    %cst_84 = arith.constant 1.000000e+00 : f32
    %280 = vector.broadcast %cst_84 : f32 to vector<1x32xf32>
    %281 = arith.addf %279, %280 : vector<1x32xf32>
    %cst_85 = arith.constant 5.000000e-01 : f32
    %282 = vector.broadcast %cst_85 : f32 to vector<1x32xf32>
    %283 = arith.mulf %282, %281 : vector<1x32xf32>
    %284 = arith.mulf %273, %250 : vector<1x32xf32>
    %285 = arith.mulf %265, %275 : vector<1x32xf32>
    %286 = arith.addf %284, %285 : vector<1x32xf32>
    %287 = math.tanh %286 : vector<1x32xf32>
    %288 = arith.mulf %283, %287 : vector<1x32xf32>
    %289 = vector.extract_strided_slice %11 {offsets = [7, 0], sizes = [1, 128], strides = [1, 1]} : vector<8x128xf32> to vector<1x128xf32>
    %290 = vector.extract_strided_slice %11 {offsets = [0, 0], sizes = [1, 128], strides = [1, 1]} : vector<8x128xf32> to vector<1x128xf32>
    %291 = arith.select %30, %289, %290 : vector<1x128xi1>, vector<1x128xf32>
    %cst_86 = arith.constant dense<0.000000e+00> : vector<1x128xf32>
    %292 = tpu.matmul %288, %34, %cst_86 {dimension_numbers = #tpu.dot_dimension_numbers<[1], [0], [0], [1], [0, 0, 1, 1], [], []>} : vector<1x32xf32>, vector<32x128xf32>, vector<1x128xf32> -> vector<1x128xf32>
    %293 = arith.addf %291, %292 : vector<1x128xf32>
    %294 = vector.extract_strided_slice %293 {offsets = [0, 0], sizes = [1, 32], strides = [1, 1]} : vector<1x128xf32> to vector<1x32xf32>
    %cst_87 = arith.constant 5.000000e-01 : f32
    %295 = vector.broadcast %cst_87 : f32 to vector<1x32xf32>
    %296 = arith.mulf %295, %294 : vector<1x32xf32>
    %297 = math.tanh %296 : vector<1x32xf32>
    %cst_88 = arith.constant 1.000000e+00 : f32
    %298 = vector.broadcast %cst_88 : f32 to vector<1x32xf32>
    %299 = arith.addf %297, %298 : vector<1x32xf32>
    %cst_89 = arith.constant 5.000000e-01 : f32
    %300 = vector.broadcast %cst_89 : f32 to vector<1x32xf32>
    %301 = arith.mulf %300, %299 : vector<1x32xf32>
    %302 = vector.extract_strided_slice %293 {offsets = [0, 32], sizes = [1, 32], strides = [1, 1]} : vector<1x128xf32> to vector<1x32xf32>
    %cst_90 = arith.constant 5.000000e-01 : f32
    %303 = vector.broadcast %cst_90 : f32 to vector<1x32xf32>
    %304 = arith.mulf %303, %302 : vector<1x32xf32>
    %305 = math.tanh %304 : vector<1x32xf32>
    %cst_91 = arith.constant 1.000000e+00 : f32
    %306 = vector.broadcast %cst_91 : f32 to vector<1x32xf32>
    %307 = arith.addf %305, %306 : vector<1x32xf32>
    %cst_92 = arith.constant 5.000000e-01 : f32
    %308 = vector.broadcast %cst_92 : f32 to vector<1x32xf32>
    %309 = arith.mulf %308, %307 : vector<1x32xf32>
    %310 = vector.extract_strided_slice %293 {offsets = [0, 64], sizes = [1, 32], strides = [1, 1]} : vector<1x128xf32> to vector<1x32xf32>
    %311 = math.tanh %310 : vector<1x32xf32>
    %312 = vector.extract_strided_slice %293 {offsets = [0, 96], sizes = [1, 32], strides = [1, 1]} : vector<1x128xf32> to vector<1x32xf32>
    %cst_93 = arith.constant 5.000000e-01 : f32
    %313 = vector.broadcast %cst_93 : f32 to vector<1x32xf32>
    %314 = arith.mulf %313, %312 : vector<1x32xf32>
    %315 = math.tanh %314 : vector<1x32xf32>
    %cst_94 = arith.constant 1.000000e+00 : f32
    %316 = vector.broadcast %cst_94 : f32 to vector<1x32xf32>
    %317 = arith.addf %315, %316 : vector<1x32xf32>
    %cst_95 = arith.constant 5.000000e-01 : f32
    %318 = vector.broadcast %cst_95 : f32 to vector<1x32xf32>
    %319 = arith.mulf %318, %317 : vector<1x32xf32>
    %320 = arith.mulf %309, %286 : vector<1x32xf32>
    %321 = arith.mulf %301, %311 : vector<1x32xf32>
    %322 = arith.addf %320, %321 : vector<1x32xf32>
    %323 = math.tanh %322 : vector<1x32xf32>
    %324 = arith.mulf %319, %323 : vector<1x32xf32>
    %325 = tpu.concatenate %72, %108, %144, %180, %216, %252, %288, %324 in 0 : vector<1x32xf32>, vector<1x32xf32>, vector<1x32xf32>, vector<1x32xf32>, vector<1x32xf32>, vector<1x32xf32>, vector<1x32xf32>, vector<1x32xf32> -> vector<8x32xf32>
    %326 = tpu.concatenate %324, %288, %252, %216, %180, %144, %108, %72 in 0 : vector<1x32xf32>, vector<1x32xf32>, vector<1x32xf32>, vector<1x32xf32>, vector<1x32xf32>, vector<1x32xf32>, vector<1x32xf32>, vector<1x32xf32> -> vector<8x32xf32>
    %327 = vector.shape_cast %33 : vector<1x32xi1> to vector<1x32xi1>
    %328 = vector.broadcast %327 : vector<1x32xi1> to vector<8x32xi1>
    %329 = arith.select %328, %325, %326 : vector<8x32xi1>, vector<8x32xf32>
    %c0_96 = arith.constant 0 : index
    %c0_97 = arith.constant 0 : index
    %330 = vector.load %arg7[%c0_96, %c0_97] : memref<32x14xf32, #tpu.memory_space<vmem>>, vector<32x14xf32>
    %cst_98 = arith.constant dense<0.000000e+00> : vector<8x14xf32>
    %331 = tpu.matmul %329, %330, %cst_98 {dimension_numbers = #tpu.dot_dimension_numbers<[1], [0], [0], [1], [0, 0, 1, 1], [], []>} : vector<8x32xf32>, vector<32x14xf32>, vector<8x14xf32> -> vector<8x14xf32>
    %c0_99 = arith.constant 0 : index
    %c0_100 = arith.constant 0 : index
    %332 = vector.load %arg8[%c0_99, %c0_100] : memref<1x14xf32, #tpu.memory_space<vmem>>, vector<1x14xf32>
    %333 = vector.broadcast %332 : vector<1x14xf32> to vector<8x14xf32>
    %334 = arith.addf %331, %333 : vector<8x14xf32>
    %335 = vector.extract_strided_slice %334 {offsets = [0, 0], sizes = [8, 7], strides = [1, 1]} : vector<8x14xf32> to vector<8x7xf32>
    %336 = vector.extract_strided_slice %334 {offsets = [0, 7], sizes = [8, 7], strides = [1, 1]} : vector<8x14xf32> to vector<8x7xf32>
    %c0_101 = arith.constant 0 : index
    %c0_102 = arith.constant 0 : index
    %337 = vector.load %arg9[%c0_101, %c0_102] : memref<7x7xf32, #tpu.memory_space<vmem>>, vector<7x7xf32>
    %338 = tpu.iota {dimensions = array<i32: 1>} : vector<8x7xi32>
    %c4_i32 = arith.constant 4 : i32
    %339 = vector.broadcast %c4_i32 : i32 to vector<8x7xi32>
    %340 = arith.cmpi eq, %338, %339 : vector<8x7xi32>
    %cst_103 = arith.constant 0.000000e+00 : f32
    %cst_104 = arith.constant -1.000000e+04 : f32
    %341 = vector.broadcast %cst_103 : f32 to vector<8x7xf32>
    %342 = vector.broadcast %cst_104 : f32 to vector<8x7xf32>
    %343 = arith.select %340, %341, %342 : vector<8x7xi1>, vector<8x7xf32>
    %344 = vector.extract_strided_slice %343 {offsets = [0, 0], sizes = [8, 1], strides = [1, 1]} : vector<8x7xf32> to vector<8x1xf32>
    %345 = vector.extract_strided_slice %337 {offsets = [0, 0], sizes = [1, 7], strides = [1, 1]} : vector<7x7xf32> to vector<1x7xf32>
    %346 = vector.broadcast %344 : vector<8x1xf32> to vector<8x7xf32>
    %347 = vector.broadcast %345 : vector<1x7xf32> to vector<8x7xf32>
    %348 = arith.addf %346, %347 : vector<8x7xf32>
    %349 = vector.extract_strided_slice %343 {offsets = [0, 1], sizes = [8, 1], strides = [1, 1]} : vector<8x7xf32> to vector<8x1xf32>
    %350 = vector.extract_strided_slice %337 {offsets = [1, 0], sizes = [1, 7], strides = [1, 1]} : vector<7x7xf32> to vector<1x7xf32>
    %351 = vector.broadcast %349 : vector<8x1xf32> to vector<8x7xf32>
    %352 = vector.broadcast %350 : vector<1x7xf32> to vector<8x7xf32>
    %353 = arith.addf %351, %352 : vector<8x7xf32>
    %354 = arith.cmpf ogt, %353, %348 : vector<8x7xf32>
    %355 = arith.select %354, %353, %348 : vector<8x7xi1>, vector<8x7xf32>
    %356 = vector.extract_strided_slice %343 {offsets = [0, 2], sizes = [8, 1], strides = [1, 1]} : vector<8x7xf32> to vector<8x1xf32>
    %357 = vector.extract_strided_slice %337 {offsets = [2, 0], sizes = [1, 7], strides = [1, 1]} : vector<7x7xf32> to vector<1x7xf32>
    %358 = vector.broadcast %356 : vector<8x1xf32> to vector<8x7xf32>
    %359 = vector.broadcast %357 : vector<1x7xf32> to vector<8x7xf32>
    %360 = arith.addf %358, %359 : vector<8x7xf32>
    %361 = arith.cmpf ogt, %360, %355 : vector<8x7xf32>
    %362 = arith.select %361, %360, %355 : vector<8x7xi1>, vector<8x7xf32>
    %363 = vector.extract_strided_slice %343 {offsets = [0, 3], sizes = [8, 1], strides = [1, 1]} : vector<8x7xf32> to vector<8x1xf32>
    %364 = vector.extract_strided_slice %337 {offsets = [3, 0], sizes = [1, 7], strides = [1, 1]} : vector<7x7xf32> to vector<1x7xf32>
    %365 = vector.broadcast %363 : vector<8x1xf32> to vector<8x7xf32>
    %366 = vector.broadcast %364 : vector<1x7xf32> to vector<8x7xf32>
    %367 = arith.addf %365, %366 : vector<8x7xf32>
    %368 = arith.cmpf ogt, %367, %362 : vector<8x7xf32>
    %369 = arith.select %368, %367, %362 : vector<8x7xi1>, vector<8x7xf32>
    %370 = vector.extract_strided_slice %343 {offsets = [0, 4], sizes = [8, 1], strides = [1, 1]} : vector<8x7xf32> to vector<8x1xf32>
    %371 = vector.extract_strided_slice %337 {offsets = [4, 0], sizes = [1, 7], strides = [1, 1]} : vector<7x7xf32> to vector<1x7xf32>
    %372 = vector.broadcast %370 : vector<8x1xf32> to vector<8x7xf32>
    %373 = vector.broadcast %371 : vector<1x7xf32> to vector<8x7xf32>
    %374 = arith.addf %372, %373 : vector<8x7xf32>
    %375 = arith.cmpf ogt, %374, %369 : vector<8x7xf32>
    %376 = arith.select %375, %374, %369 : vector<8x7xi1>, vector<8x7xf32>
    %377 = vector.extract_strided_slice %343 {offsets = [0, 5], sizes = [8, 1], strides = [1, 1]} : vector<8x7xf32> to vector<8x1xf32>
    %378 = vector.extract_strided_slice %337 {offsets = [5, 0], sizes = [1, 7], strides = [1, 1]} : vector<7x7xf32> to vector<1x7xf32>
    %379 = vector.broadcast %377 : vector<8x1xf32> to vector<8x7xf32>
    %380 = vector.broadcast %378 : vector<1x7xf32> to vector<8x7xf32>
    %381 = arith.addf %379, %380 : vector<8x7xf32>
    %382 = arith.cmpf ogt, %381, %376 : vector<8x7xf32>
    %383 = arith.select %382, %381, %376 : vector<8x7xi1>, vector<8x7xf32>
    %384 = vector.extract_strided_slice %343 {offsets = [0, 6], sizes = [8, 1], strides = [1, 1]} : vector<8x7xf32> to vector<8x1xf32>
    %385 = vector.extract_strided_slice %337 {offsets = [6, 0], sizes = [1, 7], strides = [1, 1]} : vector<7x7xf32> to vector<1x7xf32>
    %386 = vector.broadcast %384 : vector<8x1xf32> to vector<8x7xf32>
    %387 = vector.broadcast %385 : vector<1x7xf32> to vector<8x7xf32>
    %388 = arith.addf %386, %387 : vector<8x7xf32>
    %389 = arith.cmpf ogt, %388, %383 : vector<8x7xf32>
    %390 = arith.select %389, %388, %383 : vector<8x7xi1>, vector<8x7xf32>
    %391 = vector.extract_strided_slice %335 {offsets = [0, 0], sizes = [1, 7], strides = [1, 1]} : vector<8x7xf32> to vector<1x7xf32>
    %392 = vector.broadcast %391 : vector<1x7xf32> to vector<8x7xf32>
    %393 = arith.addf %390, %392 : vector<8x7xf32>
    %394 = arith.addf %393, %336 : vector<8x7xf32>
    %395 = vector.extract_strided_slice %394 {offsets = [0, 0], sizes = [8, 1], strides = [1, 1]} : vector<8x7xf32> to vector<8x1xf32>
    %396 = vector.extract_strided_slice %337 {offsets = [0, 0], sizes = [1, 7], strides = [1, 1]} : vector<7x7xf32> to vector<1x7xf32>
    %397 = vector.broadcast %395 : vector<8x1xf32> to vector<8x7xf32>
    %398 = vector.broadcast %396 : vector<1x7xf32> to vector<8x7xf32>
    %399 = arith.addf %397, %398 : vector<8x7xf32>
    %c0_i32_105 = arith.constant 0 : i32
    %400 = vector.broadcast %c0_i32_105 : i32 to vector<8x7xi32>
    %401 = vector.extract_strided_slice %394 {offsets = [0, 1], sizes = [8, 1], strides = [1, 1]} : vector<8x7xf32> to vector<8x1xf32>
    %402 = vector.extract_strided_slice %337 {offsets = [1, 0], sizes = [1, 7], strides = [1, 1]} : vector<7x7xf32> to vector<1x7xf32>
    %403 = vector.broadcast %401 : vector<8x1xf32> to vector<8x7xf32>
    %404 = vector.broadcast %402 : vector<1x7xf32> to vector<8x7xf32>
    %405 = arith.addf %403, %404 : vector<8x7xf32>
    %406 = arith.cmpf ogt, %405, %399 : vector<8x7xf32>
    %407 = arith.select %406, %405, %399 : vector<8x7xi1>, vector<8x7xf32>
    %c1_i32_106 = arith.constant 1 : i32
    %408 = vector.broadcast %c1_i32_106 : i32 to vector<8x7xi32>
    %409 = arith.select %406, %408, %400 : vector<8x7xi1>, vector<8x7xi32>
    %410 = vector.extract_strided_slice %394 {offsets = [0, 2], sizes = [8, 1], strides = [1, 1]} : vector<8x7xf32> to vector<8x1xf32>
    %411 = vector.extract_strided_slice %337 {offsets = [2, 0], sizes = [1, 7], strides = [1, 1]} : vector<7x7xf32> to vector<1x7xf32>
    %412 = vector.broadcast %410 : vector<8x1xf32> to vector<8x7xf32>
    %413 = vector.broadcast %411 : vector<1x7xf32> to vector<8x7xf32>
    %414 = arith.addf %412, %413 : vector<8x7xf32>
    %415 = arith.cmpf ogt, %414, %407 : vector<8x7xf32>
    %416 = arith.select %415, %414, %407 : vector<8x7xi1>, vector<8x7xf32>
    %c2_i32 = arith.constant 2 : i32
    %417 = vector.broadcast %c2_i32 : i32 to vector<8x7xi32>
    %418 = arith.select %415, %417, %409 : vector<8x7xi1>, vector<8x7xi32>
    %419 = vector.extract_strided_slice %394 {offsets = [0, 3], sizes = [8, 1], strides = [1, 1]} : vector<8x7xf32> to vector<8x1xf32>
    %420 = vector.extract_strided_slice %337 {offsets = [3, 0], sizes = [1, 7], strides = [1, 1]} : vector<7x7xf32> to vector<1x7xf32>
    %421 = vector.broadcast %419 : vector<8x1xf32> to vector<8x7xf32>
    %422 = vector.broadcast %420 : vector<1x7xf32> to vector<8x7xf32>
    %423 = arith.addf %421, %422 : vector<8x7xf32>
    %424 = arith.cmpf ogt, %423, %416 : vector<8x7xf32>
    %425 = arith.select %424, %423, %416 : vector<8x7xi1>, vector<8x7xf32>
    %c3_i32 = arith.constant 3 : i32
    %426 = vector.broadcast %c3_i32 : i32 to vector<8x7xi32>
    %427 = arith.select %424, %426, %418 : vector<8x7xi1>, vector<8x7xi32>
    %428 = vector.extract_strided_slice %394 {offsets = [0, 4], sizes = [8, 1], strides = [1, 1]} : vector<8x7xf32> to vector<8x1xf32>
    %429 = vector.extract_strided_slice %337 {offsets = [4, 0], sizes = [1, 7], strides = [1, 1]} : vector<7x7xf32> to vector<1x7xf32>
    %430 = vector.broadcast %428 : vector<8x1xf32> to vector<8x7xf32>
    %431 = vector.broadcast %429 : vector<1x7xf32> to vector<8x7xf32>
    %432 = arith.addf %430, %431 : vector<8x7xf32>
    %433 = arith.cmpf ogt, %432, %425 : vector<8x7xf32>
    %434 = arith.select %433, %432, %425 : vector<8x7xi1>, vector<8x7xf32>
    %c4_i32_107 = arith.constant 4 : i32
    %435 = vector.broadcast %c4_i32_107 : i32 to vector<8x7xi32>
    %436 = arith.select %433, %435, %427 : vector<8x7xi1>, vector<8x7xi32>
    %437 = vector.extract_strided_slice %394 {offsets = [0, 5], sizes = [8, 1], strides = [1, 1]} : vector<8x7xf32> to vector<8x1xf32>
    %438 = vector.extract_strided_slice %337 {offsets = [5, 0], sizes = [1, 7], strides = [1, 1]} : vector<7x7xf32> to vector<1x7xf32>
    %439 = vector.broadcast %437 : vector<8x1xf32> to vector<8x7xf32>
    %440 = vector.broadcast %438 : vector<1x7xf32> to vector<8x7xf32>
    %441 = arith.addf %439, %440 : vector<8x7xf32>
    %442 = arith.cmpf ogt, %441, %434 : vector<8x7xf32>
    %443 = arith.select %442, %441, %434 : vector<8x7xi1>, vector<8x7xf32>
    %c5_i32 = arith.constant 5 : i32
    %444 = vector.broadcast %c5_i32 : i32 to vector<8x7xi32>
    %445 = arith.select %442, %444, %436 : vector<8x7xi1>, vector<8x7xi32>
    %446 = vector.extract_strided_slice %394 {offsets = [0, 6], sizes = [8, 1], strides = [1, 1]} : vector<8x7xf32> to vector<8x1xf32>
    %447 = vector.extract_strided_slice %337 {offsets = [6, 0], sizes = [1, 7], strides = [1, 1]} : vector<7x7xf32> to vector<1x7xf32>
    %448 = vector.broadcast %446 : vector<8x1xf32> to vector<8x7xf32>
    %449 = vector.broadcast %447 : vector<1x7xf32> to vector<8x7xf32>
    %450 = arith.addf %448, %449 : vector<8x7xf32>
    %451 = arith.cmpf ogt, %450, %443 : vector<8x7xf32>
    %452 = arith.select %451, %450, %443 : vector<8x7xi1>, vector<8x7xf32>
    %c6_i32 = arith.constant 6 : i32
    %453 = vector.broadcast %c6_i32 : i32 to vector<8x7xi32>
    %454 = arith.select %451, %453, %445 : vector<8x7xi1>, vector<8x7xi32>
    %455 = vector.extract_strided_slice %335 {offsets = [1, 0], sizes = [1, 7], strides = [1, 1]} : vector<8x7xf32> to vector<1x7xf32>
    %456 = vector.broadcast %455 : vector<1x7xf32> to vector<8x7xf32>
    %457 = arith.addf %452, %456 : vector<8x7xf32>
    %458 = arith.addf %457, %336 : vector<8x7xf32>
    %459 = vector.extract_strided_slice %458 {offsets = [0, 0], sizes = [8, 1], strides = [1, 1]} : vector<8x7xf32> to vector<8x1xf32>
    %460 = vector.extract_strided_slice %337 {offsets = [0, 0], sizes = [1, 7], strides = [1, 1]} : vector<7x7xf32> to vector<1x7xf32>
    %461 = vector.broadcast %459 : vector<8x1xf32> to vector<8x7xf32>
    %462 = vector.broadcast %460 : vector<1x7xf32> to vector<8x7xf32>
    %463 = arith.addf %461, %462 : vector<8x7xf32>
    %c0_i32_108 = arith.constant 0 : i32
    %464 = vector.broadcast %c0_i32_108 : i32 to vector<8x7xi32>
    %465 = vector.extract_strided_slice %458 {offsets = [0, 1], sizes = [8, 1], strides = [1, 1]} : vector<8x7xf32> to vector<8x1xf32>
    %466 = vector.extract_strided_slice %337 {offsets = [1, 0], sizes = [1, 7], strides = [1, 1]} : vector<7x7xf32> to vector<1x7xf32>
    %467 = vector.broadcast %465 : vector<8x1xf32> to vector<8x7xf32>
    %468 = vector.broadcast %466 : vector<1x7xf32> to vector<8x7xf32>
    %469 = arith.addf %467, %468 : vector<8x7xf32>
    %470 = arith.cmpf ogt, %469, %463 : vector<8x7xf32>
    %471 = arith.select %470, %469, %463 : vector<8x7xi1>, vector<8x7xf32>
    %c1_i32_109 = arith.constant 1 : i32
    %472 = vector.broadcast %c1_i32_109 : i32 to vector<8x7xi32>
    %473 = arith.select %470, %472, %464 : vector<8x7xi1>, vector<8x7xi32>
    %474 = vector.extract_strided_slice %458 {offsets = [0, 2], sizes = [8, 1], strides = [1, 1]} : vector<8x7xf32> to vector<8x1xf32>
    %475 = vector.extract_strided_slice %337 {offsets = [2, 0], sizes = [1, 7], strides = [1, 1]} : vector<7x7xf32> to vector<1x7xf32>
    %476 = vector.broadcast %474 : vector<8x1xf32> to vector<8x7xf32>
    %477 = vector.broadcast %475 : vector<1x7xf32> to vector<8x7xf32>
    %478 = arith.addf %476, %477 : vector<8x7xf32>
    %479 = arith.cmpf ogt, %478, %471 : vector<8x7xf32>
    %480 = arith.select %479, %478, %471 : vector<8x7xi1>, vector<8x7xf32>
    %c2_i32_110 = arith.constant 2 : i32
    %481 = vector.broadcast %c2_i32_110 : i32 to vector<8x7xi32>
    %482 = arith.select %479, %481, %473 : vector<8x7xi1>, vector<8x7xi32>
    %483 = vector.extract_strided_slice %458 {offsets = [0, 3], sizes = [8, 1], strides = [1, 1]} : vector<8x7xf32> to vector<8x1xf32>
    %484 = vector.extract_strided_slice %337 {offsets = [3, 0], sizes = [1, 7], strides = [1, 1]} : vector<7x7xf32> to vector<1x7xf32>
    %485 = vector.broadcast %483 : vector<8x1xf32> to vector<8x7xf32>
    %486 = vector.broadcast %484 : vector<1x7xf32> to vector<8x7xf32>
    %487 = arith.addf %485, %486 : vector<8x7xf32>
    %488 = arith.cmpf ogt, %487, %480 : vector<8x7xf32>
    %489 = arith.select %488, %487, %480 : vector<8x7xi1>, vector<8x7xf32>
    %c3_i32_111 = arith.constant 3 : i32
    %490 = vector.broadcast %c3_i32_111 : i32 to vector<8x7xi32>
    %491 = arith.select %488, %490, %482 : vector<8x7xi1>, vector<8x7xi32>
    %492 = vector.extract_strided_slice %458 {offsets = [0, 4], sizes = [8, 1], strides = [1, 1]} : vector<8x7xf32> to vector<8x1xf32>
    %493 = vector.extract_strided_slice %337 {offsets = [4, 0], sizes = [1, 7], strides = [1, 1]} : vector<7x7xf32> to vector<1x7xf32>
    %494 = vector.broadcast %492 : vector<8x1xf32> to vector<8x7xf32>
    %495 = vector.broadcast %493 : vector<1x7xf32> to vector<8x7xf32>
    %496 = arith.addf %494, %495 : vector<8x7xf32>
    %497 = arith.cmpf ogt, %496, %489 : vector<8x7xf32>
    %498 = arith.select %497, %496, %489 : vector<8x7xi1>, vector<8x7xf32>
    %c4_i32_112 = arith.constant 4 : i32
    %499 = vector.broadcast %c4_i32_112 : i32 to vector<8x7xi32>
    %500 = arith.select %497, %499, %491 : vector<8x7xi1>, vector<8x7xi32>
    %501 = vector.extract_strided_slice %458 {offsets = [0, 5], sizes = [8, 1], strides = [1, 1]} : vector<8x7xf32> to vector<8x1xf32>
    %502 = vector.extract_strided_slice %337 {offsets = [5, 0], sizes = [1, 7], strides = [1, 1]} : vector<7x7xf32> to vector<1x7xf32>
    %503 = vector.broadcast %501 : vector<8x1xf32> to vector<8x7xf32>
    %504 = vector.broadcast %502 : vector<1x7xf32> to vector<8x7xf32>
    %505 = arith.addf %503, %504 : vector<8x7xf32>
    %506 = arith.cmpf ogt, %505, %498 : vector<8x7xf32>
    %507 = arith.select %506, %505, %498 : vector<8x7xi1>, vector<8x7xf32>
    %c5_i32_113 = arith.constant 5 : i32
    %508 = vector.broadcast %c5_i32_113 : i32 to vector<8x7xi32>
    %509 = arith.select %506, %508, %500 : vector<8x7xi1>, vector<8x7xi32>
    %510 = vector.extract_strided_slice %458 {offsets = [0, 6], sizes = [8, 1], strides = [1, 1]} : vector<8x7xf32> to vector<8x1xf32>
    %511 = vector.extract_strided_slice %337 {offsets = [6, 0], sizes = [1, 7], strides = [1, 1]} : vector<7x7xf32> to vector<1x7xf32>
    %512 = vector.broadcast %510 : vector<8x1xf32> to vector<8x7xf32>
    %513 = vector.broadcast %511 : vector<1x7xf32> to vector<8x7xf32>
    %514 = arith.addf %512, %513 : vector<8x7xf32>
    %515 = arith.cmpf ogt, %514, %507 : vector<8x7xf32>
    %516 = arith.select %515, %514, %507 : vector<8x7xi1>, vector<8x7xf32>
    %c6_i32_114 = arith.constant 6 : i32
    %517 = vector.broadcast %c6_i32_114 : i32 to vector<8x7xi32>
    %518 = arith.select %515, %517, %509 : vector<8x7xi1>, vector<8x7xi32>
    %519 = vector.extract_strided_slice %335 {offsets = [2, 0], sizes = [1, 7], strides = [1, 1]} : vector<8x7xf32> to vector<1x7xf32>
    %520 = vector.broadcast %519 : vector<1x7xf32> to vector<8x7xf32>
    %521 = arith.addf %516, %520 : vector<8x7xf32>
    %522 = arith.addf %521, %336 : vector<8x7xf32>
    %523 = vector.extract_strided_slice %522 {offsets = [0, 0], sizes = [8, 1], strides = [1, 1]} : vector<8x7xf32> to vector<8x1xf32>
    %524 = vector.extract_strided_slice %337 {offsets = [0, 0], sizes = [1, 7], strides = [1, 1]} : vector<7x7xf32> to vector<1x7xf32>
    %525 = vector.broadcast %523 : vector<8x1xf32> to vector<8x7xf32>
    %526 = vector.broadcast %524 : vector<1x7xf32> to vector<8x7xf32>
    %527 = arith.addf %525, %526 : vector<8x7xf32>
    %c0_i32_115 = arith.constant 0 : i32
    %528 = vector.broadcast %c0_i32_115 : i32 to vector<8x7xi32>
    %529 = vector.extract_strided_slice %522 {offsets = [0, 1], sizes = [8, 1], strides = [1, 1]} : vector<8x7xf32> to vector<8x1xf32>
    %530 = vector.extract_strided_slice %337 {offsets = [1, 0], sizes = [1, 7], strides = [1, 1]} : vector<7x7xf32> to vector<1x7xf32>
    %531 = vector.broadcast %529 : vector<8x1xf32> to vector<8x7xf32>
    %532 = vector.broadcast %530 : vector<1x7xf32> to vector<8x7xf32>
    %533 = arith.addf %531, %532 : vector<8x7xf32>
    %534 = arith.cmpf ogt, %533, %527 : vector<8x7xf32>
    %535 = arith.select %534, %533, %527 : vector<8x7xi1>, vector<8x7xf32>
    %c1_i32_116 = arith.constant 1 : i32
    %536 = vector.broadcast %c1_i32_116 : i32 to vector<8x7xi32>
    %537 = arith.select %534, %536, %528 : vector<8x7xi1>, vector<8x7xi32>
    %538 = vector.extract_strided_slice %522 {offsets = [0, 2], sizes = [8, 1], strides = [1, 1]} : vector<8x7xf32> to vector<8x1xf32>
    %539 = vector.extract_strided_slice %337 {offsets = [2, 0], sizes = [1, 7], strides = [1, 1]} : vector<7x7xf32> to vector<1x7xf32>
    %540 = vector.broadcast %538 : vector<8x1xf32> to vector<8x7xf32>
    %541 = vector.broadcast %539 : vector<1x7xf32> to vector<8x7xf32>
    %542 = arith.addf %540, %541 : vector<8x7xf32>
    %543 = arith.cmpf ogt, %542, %535 : vector<8x7xf32>
    %544 = arith.select %543, %542, %535 : vector<8x7xi1>, vector<8x7xf32>
    %c2_i32_117 = arith.constant 2 : i32
    %545 = vector.broadcast %c2_i32_117 : i32 to vector<8x7xi32>
    %546 = arith.select %543, %545, %537 : vector<8x7xi1>, vector<8x7xi32>
    %547 = vector.extract_strided_slice %522 {offsets = [0, 3], sizes = [8, 1], strides = [1, 1]} : vector<8x7xf32> to vector<8x1xf32>
    %548 = vector.extract_strided_slice %337 {offsets = [3, 0], sizes = [1, 7], strides = [1, 1]} : vector<7x7xf32> to vector<1x7xf32>
    %549 = vector.broadcast %547 : vector<8x1xf32> to vector<8x7xf32>
    %550 = vector.broadcast %548 : vector<1x7xf32> to vector<8x7xf32>
    %551 = arith.addf %549, %550 : vector<8x7xf32>
    %552 = arith.cmpf ogt, %551, %544 : vector<8x7xf32>
    %553 = arith.select %552, %551, %544 : vector<8x7xi1>, vector<8x7xf32>
    %c3_i32_118 = arith.constant 3 : i32
    %554 = vector.broadcast %c3_i32_118 : i32 to vector<8x7xi32>
    %555 = arith.select %552, %554, %546 : vector<8x7xi1>, vector<8x7xi32>
    %556 = vector.extract_strided_slice %522 {offsets = [0, 4], sizes = [8, 1], strides = [1, 1]} : vector<8x7xf32> to vector<8x1xf32>
    %557 = vector.extract_strided_slice %337 {offsets = [4, 0], sizes = [1, 7], strides = [1, 1]} : vector<7x7xf32> to vector<1x7xf32>
    %558 = vector.broadcast %556 : vector<8x1xf32> to vector<8x7xf32>
    %559 = vector.broadcast %557 : vector<1x7xf32> to vector<8x7xf32>
    %560 = arith.addf %558, %559 : vector<8x7xf32>
    %561 = arith.cmpf ogt, %560, %553 : vector<8x7xf32>
    %562 = arith.select %561, %560, %553 : vector<8x7xi1>, vector<8x7xf32>
    %c4_i32_119 = arith.constant 4 : i32
    %563 = vector.broadcast %c4_i32_119 : i32 to vector<8x7xi32>
    %564 = arith.select %561, %563, %555 : vector<8x7xi1>, vector<8x7xi32>
    %565 = vector.extract_strided_slice %522 {offsets = [0, 5], sizes = [8, 1], strides = [1, 1]} : vector<8x7xf32> to vector<8x1xf32>
    %566 = vector.extract_strided_slice %337 {offsets = [5, 0], sizes = [1, 7], strides = [1, 1]} : vector<7x7xf32> to vector<1x7xf32>
    %567 = vector.broadcast %565 : vector<8x1xf32> to vector<8x7xf32>
    %568 = vector.broadcast %566 : vector<1x7xf32> to vector<8x7xf32>
    %569 = arith.addf %567, %568 : vector<8x7xf32>
    %570 = arith.cmpf ogt, %569, %562 : vector<8x7xf32>
    %571 = arith.select %570, %569, %562 : vector<8x7xi1>, vector<8x7xf32>
    %c5_i32_120 = arith.constant 5 : i32
    %572 = vector.broadcast %c5_i32_120 : i32 to vector<8x7xi32>
    %573 = arith.select %570, %572, %564 : vector<8x7xi1>, vector<8x7xi32>
    %574 = vector.extract_strided_slice %522 {offsets = [0, 6], sizes = [8, 1], strides = [1, 1]} : vector<8x7xf32> to vector<8x1xf32>
    %575 = vector.extract_strided_slice %337 {offsets = [6, 0], sizes = [1, 7], strides = [1, 1]} : vector<7x7xf32> to vector<1x7xf32>
    %576 = vector.broadcast %574 : vector<8x1xf32> to vector<8x7xf32>
    %577 = vector.broadcast %575 : vector<1x7xf32> to vector<8x7xf32>
    %578 = arith.addf %576, %577 : vector<8x7xf32>
    %579 = arith.cmpf ogt, %578, %571 : vector<8x7xf32>
    %580 = arith.select %579, %578, %571 : vector<8x7xi1>, vector<8x7xf32>
    %c6_i32_121 = arith.constant 6 : i32
    %581 = vector.broadcast %c6_i32_121 : i32 to vector<8x7xi32>
    %582 = arith.select %579, %581, %573 : vector<8x7xi1>, vector<8x7xi32>
    %583 = vector.extract_strided_slice %335 {offsets = [3, 0], sizes = [1, 7], strides = [1, 1]} : vector<8x7xf32> to vector<1x7xf32>
    %584 = vector.broadcast %583 : vector<1x7xf32> to vector<8x7xf32>
    %585 = arith.addf %580, %584 : vector<8x7xf32>
    %586 = arith.addf %585, %336 : vector<8x7xf32>
    %587 = vector.extract_strided_slice %586 {offsets = [0, 0], sizes = [8, 1], strides = [1, 1]} : vector<8x7xf32> to vector<8x1xf32>
    %588 = vector.extract_strided_slice %337 {offsets = [0, 0], sizes = [1, 7], strides = [1, 1]} : vector<7x7xf32> to vector<1x7xf32>
    %589 = vector.broadcast %587 : vector<8x1xf32> to vector<8x7xf32>
    %590 = vector.broadcast %588 : vector<1x7xf32> to vector<8x7xf32>
    %591 = arith.addf %589, %590 : vector<8x7xf32>
    %c0_i32_122 = arith.constant 0 : i32
    %592 = vector.broadcast %c0_i32_122 : i32 to vector<8x7xi32>
    %593 = vector.extract_strided_slice %586 {offsets = [0, 1], sizes = [8, 1], strides = [1, 1]} : vector<8x7xf32> to vector<8x1xf32>
    %594 = vector.extract_strided_slice %337 {offsets = [1, 0], sizes = [1, 7], strides = [1, 1]} : vector<7x7xf32> to vector<1x7xf32>
    %595 = vector.broadcast %593 : vector<8x1xf32> to vector<8x7xf32>
    %596 = vector.broadcast %594 : vector<1x7xf32> to vector<8x7xf32>
    %597 = arith.addf %595, %596 : vector<8x7xf32>
    %598 = arith.cmpf ogt, %597, %591 : vector<8x7xf32>
    %599 = arith.select %598, %597, %591 : vector<8x7xi1>, vector<8x7xf32>
    %c1_i32_123 = arith.constant 1 : i32
    %600 = vector.broadcast %c1_i32_123 : i32 to vector<8x7xi32>
    %601 = arith.select %598, %600, %592 : vector<8x7xi1>, vector<8x7xi32>
    %602 = vector.extract_strided_slice %586 {offsets = [0, 2], sizes = [8, 1], strides = [1, 1]} : vector<8x7xf32> to vector<8x1xf32>
    %603 = vector.extract_strided_slice %337 {offsets = [2, 0], sizes = [1, 7], strides = [1, 1]} : vector<7x7xf32> to vector<1x7xf32>
    %604 = vector.broadcast %602 : vector<8x1xf32> to vector<8x7xf32>
    %605 = vector.broadcast %603 : vector<1x7xf32> to vector<8x7xf32>
    %606 = arith.addf %604, %605 : vector<8x7xf32>
    %607 = arith.cmpf ogt, %606, %599 : vector<8x7xf32>
    %608 = arith.select %607, %606, %599 : vector<8x7xi1>, vector<8x7xf32>
    %c2_i32_124 = arith.constant 2 : i32
    %609 = vector.broadcast %c2_i32_124 : i32 to vector<8x7xi32>
    %610 = arith.select %607, %609, %601 : vector<8x7xi1>, vector<8x7xi32>
    %611 = vector.extract_strided_slice %586 {offsets = [0, 3], sizes = [8, 1], strides = [1, 1]} : vector<8x7xf32> to vector<8x1xf32>
    %612 = vector.extract_strided_slice %337 {offsets = [3, 0], sizes = [1, 7], strides = [1, 1]} : vector<7x7xf32> to vector<1x7xf32>
    %613 = vector.broadcast %611 : vector<8x1xf32> to vector<8x7xf32>
    %614 = vector.broadcast %612 : vector<1x7xf32> to vector<8x7xf32>
    %615 = arith.addf %613, %614 : vector<8x7xf32>
    %616 = arith.cmpf ogt, %615, %608 : vector<8x7xf32>
    %617 = arith.select %616, %615, %608 : vector<8x7xi1>, vector<8x7xf32>
    %c3_i32_125 = arith.constant 3 : i32
    %618 = vector.broadcast %c3_i32_125 : i32 to vector<8x7xi32>
    %619 = arith.select %616, %618, %610 : vector<8x7xi1>, vector<8x7xi32>
    %620 = vector.extract_strided_slice %586 {offsets = [0, 4], sizes = [8, 1], strides = [1, 1]} : vector<8x7xf32> to vector<8x1xf32>
    %621 = vector.extract_strided_slice %337 {offsets = [4, 0], sizes = [1, 7], strides = [1, 1]} : vector<7x7xf32> to vector<1x7xf32>
    %622 = vector.broadcast %620 : vector<8x1xf32> to vector<8x7xf32>
    %623 = vector.broadcast %621 : vector<1x7xf32> to vector<8x7xf32>
    %624 = arith.addf %622, %623 : vector<8x7xf32>
    %625 = arith.cmpf ogt, %624, %617 : vector<8x7xf32>
    %626 = arith.select %625, %624, %617 : vector<8x7xi1>, vector<8x7xf32>
    %c4_i32_126 = arith.constant 4 : i32
    %627 = vector.broadcast %c4_i32_126 : i32 to vector<8x7xi32>
    %628 = arith.select %625, %627, %619 : vector<8x7xi1>, vector<8x7xi32>
    %629 = vector.extract_strided_slice %586 {offsets = [0, 5], sizes = [8, 1], strides = [1, 1]} : vector<8x7xf32> to vector<8x1xf32>
    %630 = vector.extract_strided_slice %337 {offsets = [5, 0], sizes = [1, 7], strides = [1, 1]} : vector<7x7xf32> to vector<1x7xf32>
    %631 = vector.broadcast %629 : vector<8x1xf32> to vector<8x7xf32>
    %632 = vector.broadcast %630 : vector<1x7xf32> to vector<8x7xf32>
    %633 = arith.addf %631, %632 : vector<8x7xf32>
    %634 = arith.cmpf ogt, %633, %626 : vector<8x7xf32>
    %635 = arith.select %634, %633, %626 : vector<8x7xi1>, vector<8x7xf32>
    %c5_i32_127 = arith.constant 5 : i32
    %636 = vector.broadcast %c5_i32_127 : i32 to vector<8x7xi32>
    %637 = arith.select %634, %636, %628 : vector<8x7xi1>, vector<8x7xi32>
    %638 = vector.extract_strided_slice %586 {offsets = [0, 6], sizes = [8, 1], strides = [1, 1]} : vector<8x7xf32> to vector<8x1xf32>
    %639 = vector.extract_strided_slice %337 {offsets = [6, 0], sizes = [1, 7], strides = [1, 1]} : vector<7x7xf32> to vector<1x7xf32>
    %640 = vector.broadcast %638 : vector<8x1xf32> to vector<8x7xf32>
    %641 = vector.broadcast %639 : vector<1x7xf32> to vector<8x7xf32>
    %642 = arith.addf %640, %641 : vector<8x7xf32>
    %643 = arith.cmpf ogt, %642, %635 : vector<8x7xf32>
    %644 = arith.select %643, %642, %635 : vector<8x7xi1>, vector<8x7xf32>
    %c6_i32_128 = arith.constant 6 : i32
    %645 = vector.broadcast %c6_i32_128 : i32 to vector<8x7xi32>
    %646 = arith.select %643, %645, %637 : vector<8x7xi1>, vector<8x7xi32>
    %647 = vector.extract_strided_slice %335 {offsets = [4, 0], sizes = [1, 7], strides = [1, 1]} : vector<8x7xf32> to vector<1x7xf32>
    %648 = vector.broadcast %647 : vector<1x7xf32> to vector<8x7xf32>
    %649 = arith.addf %644, %648 : vector<8x7xf32>
    %650 = arith.addf %649, %336 : vector<8x7xf32>
    %651 = vector.extract_strided_slice %650 {offsets = [0, 0], sizes = [8, 1], strides = [1, 1]} : vector<8x7xf32> to vector<8x1xf32>
    %652 = vector.extract_strided_slice %337 {offsets = [0, 0], sizes = [1, 7], strides = [1, 1]} : vector<7x7xf32> to vector<1x7xf32>
    %653 = vector.broadcast %651 : vector<8x1xf32> to vector<8x7xf32>
    %654 = vector.broadcast %652 : vector<1x7xf32> to vector<8x7xf32>
    %655 = arith.addf %653, %654 : vector<8x7xf32>
    %c0_i32_129 = arith.constant 0 : i32
    %656 = vector.broadcast %c0_i32_129 : i32 to vector<8x7xi32>
    %657 = vector.extract_strided_slice %650 {offsets = [0, 1], sizes = [8, 1], strides = [1, 1]} : vector<8x7xf32> to vector<8x1xf32>
    %658 = vector.extract_strided_slice %337 {offsets = [1, 0], sizes = [1, 7], strides = [1, 1]} : vector<7x7xf32> to vector<1x7xf32>
    %659 = vector.broadcast %657 : vector<8x1xf32> to vector<8x7xf32>
    %660 = vector.broadcast %658 : vector<1x7xf32> to vector<8x7xf32>
    %661 = arith.addf %659, %660 : vector<8x7xf32>
    %662 = arith.cmpf ogt, %661, %655 : vector<8x7xf32>
    %663 = arith.select %662, %661, %655 : vector<8x7xi1>, vector<8x7xf32>
    %c1_i32_130 = arith.constant 1 : i32
    %664 = vector.broadcast %c1_i32_130 : i32 to vector<8x7xi32>
    %665 = arith.select %662, %664, %656 : vector<8x7xi1>, vector<8x7xi32>
    %666 = vector.extract_strided_slice %650 {offsets = [0, 2], sizes = [8, 1], strides = [1, 1]} : vector<8x7xf32> to vector<8x1xf32>
    %667 = vector.extract_strided_slice %337 {offsets = [2, 0], sizes = [1, 7], strides = [1, 1]} : vector<7x7xf32> to vector<1x7xf32>
    %668 = vector.broadcast %666 : vector<8x1xf32> to vector<8x7xf32>
    %669 = vector.broadcast %667 : vector<1x7xf32> to vector<8x7xf32>
    %670 = arith.addf %668, %669 : vector<8x7xf32>
    %671 = arith.cmpf ogt, %670, %663 : vector<8x7xf32>
    %672 = arith.select %671, %670, %663 : vector<8x7xi1>, vector<8x7xf32>
    %c2_i32_131 = arith.constant 2 : i32
    %673 = vector.broadcast %c2_i32_131 : i32 to vector<8x7xi32>
    %674 = arith.select %671, %673, %665 : vector<8x7xi1>, vector<8x7xi32>
    %675 = vector.extract_strided_slice %650 {offsets = [0, 3], sizes = [8, 1], strides = [1, 1]} : vector<8x7xf32> to vector<8x1xf32>
    %676 = vector.extract_strided_slice %337 {offsets = [3, 0], sizes = [1, 7], strides = [1, 1]} : vector<7x7xf32> to vector<1x7xf32>
    %677 = vector.broadcast %675 : vector<8x1xf32> to vector<8x7xf32>
    %678 = vector.broadcast %676 : vector<1x7xf32> to vector<8x7xf32>
    %679 = arith.addf %677, %678 : vector<8x7xf32>
    %680 = arith.cmpf ogt, %679, %672 : vector<8x7xf32>
    %681 = arith.select %680, %679, %672 : vector<8x7xi1>, vector<8x7xf32>
    %c3_i32_132 = arith.constant 3 : i32
    %682 = vector.broadcast %c3_i32_132 : i32 to vector<8x7xi32>
    %683 = arith.select %680, %682, %674 : vector<8x7xi1>, vector<8x7xi32>
    %684 = vector.extract_strided_slice %650 {offsets = [0, 4], sizes = [8, 1], strides = [1, 1]} : vector<8x7xf32> to vector<8x1xf32>
    %685 = vector.extract_strided_slice %337 {offsets = [4, 0], sizes = [1, 7], strides = [1, 1]} : vector<7x7xf32> to vector<1x7xf32>
    %686 = vector.broadcast %684 : vector<8x1xf32> to vector<8x7xf32>
    %687 = vector.broadcast %685 : vector<1x7xf32> to vector<8x7xf32>
    %688 = arith.addf %686, %687 : vector<8x7xf32>
    %689 = arith.cmpf ogt, %688, %681 : vector<8x7xf32>
    %690 = arith.select %689, %688, %681 : vector<8x7xi1>, vector<8x7xf32>
    %c4_i32_133 = arith.constant 4 : i32
    %691 = vector.broadcast %c4_i32_133 : i32 to vector<8x7xi32>
    %692 = arith.select %689, %691, %683 : vector<8x7xi1>, vector<8x7xi32>
    %693 = vector.extract_strided_slice %650 {offsets = [0, 5], sizes = [8, 1], strides = [1, 1]} : vector<8x7xf32> to vector<8x1xf32>
    %694 = vector.extract_strided_slice %337 {offsets = [5, 0], sizes = [1, 7], strides = [1, 1]} : vector<7x7xf32> to vector<1x7xf32>
    %695 = vector.broadcast %693 : vector<8x1xf32> to vector<8x7xf32>
    %696 = vector.broadcast %694 : vector<1x7xf32> to vector<8x7xf32>
    %697 = arith.addf %695, %696 : vector<8x7xf32>
    %698 = arith.cmpf ogt, %697, %690 : vector<8x7xf32>
    %699 = arith.select %698, %697, %690 : vector<8x7xi1>, vector<8x7xf32>
    %c5_i32_134 = arith.constant 5 : i32
    %700 = vector.broadcast %c5_i32_134 : i32 to vector<8x7xi32>
    %701 = arith.select %698, %700, %692 : vector<8x7xi1>, vector<8x7xi32>
    %702 = vector.extract_strided_slice %650 {offsets = [0, 6], sizes = [8, 1], strides = [1, 1]} : vector<8x7xf32> to vector<8x1xf32>
    %703 = vector.extract_strided_slice %337 {offsets = [6, 0], sizes = [1, 7], strides = [1, 1]} : vector<7x7xf32> to vector<1x7xf32>
    %704 = vector.broadcast %702 : vector<8x1xf32> to vector<8x7xf32>
    %705 = vector.broadcast %703 : vector<1x7xf32> to vector<8x7xf32>
    %706 = arith.addf %704, %705 : vector<8x7xf32>
    %707 = arith.cmpf ogt, %706, %699 : vector<8x7xf32>
    %708 = arith.select %707, %706, %699 : vector<8x7xi1>, vector<8x7xf32>
    %c6_i32_135 = arith.constant 6 : i32
    %709 = vector.broadcast %c6_i32_135 : i32 to vector<8x7xi32>
    %710 = arith.select %707, %709, %701 : vector<8x7xi1>, vector<8x7xi32>
    %711 = vector.extract_strided_slice %335 {offsets = [5, 0], sizes = [1, 7], strides = [1, 1]} : vector<8x7xf32> to vector<1x7xf32>
    %712 = vector.broadcast %711 : vector<1x7xf32> to vector<8x7xf32>
    %713 = arith.addf %708, %712 : vector<8x7xf32>
    %714 = arith.addf %713, %336 : vector<8x7xf32>
    %715 = vector.extract_strided_slice %714 {offsets = [0, 0], sizes = [8, 1], strides = [1, 1]} : vector<8x7xf32> to vector<8x1xf32>
    %716 = vector.extract_strided_slice %337 {offsets = [0, 0], sizes = [1, 7], strides = [1, 1]} : vector<7x7xf32> to vector<1x7xf32>
    %717 = vector.broadcast %715 : vector<8x1xf32> to vector<8x7xf32>
    %718 = vector.broadcast %716 : vector<1x7xf32> to vector<8x7xf32>
    %719 = arith.addf %717, %718 : vector<8x7xf32>
    %c0_i32_136 = arith.constant 0 : i32
    %720 = vector.broadcast %c0_i32_136 : i32 to vector<8x7xi32>
    %721 = vector.extract_strided_slice %714 {offsets = [0, 1], sizes = [8, 1], strides = [1, 1]} : vector<8x7xf32> to vector<8x1xf32>
    %722 = vector.extract_strided_slice %337 {offsets = [1, 0], sizes = [1, 7], strides = [1, 1]} : vector<7x7xf32> to vector<1x7xf32>
    %723 = vector.broadcast %721 : vector<8x1xf32> to vector<8x7xf32>
    %724 = vector.broadcast %722 : vector<1x7xf32> to vector<8x7xf32>
    %725 = arith.addf %723, %724 : vector<8x7xf32>
    %726 = arith.cmpf ogt, %725, %719 : vector<8x7xf32>
    %727 = arith.select %726, %725, %719 : vector<8x7xi1>, vector<8x7xf32>
    %c1_i32_137 = arith.constant 1 : i32
    %728 = vector.broadcast %c1_i32_137 : i32 to vector<8x7xi32>
    %729 = arith.select %726, %728, %720 : vector<8x7xi1>, vector<8x7xi32>
    %730 = vector.extract_strided_slice %714 {offsets = [0, 2], sizes = [8, 1], strides = [1, 1]} : vector<8x7xf32> to vector<8x1xf32>
    %731 = vector.extract_strided_slice %337 {offsets = [2, 0], sizes = [1, 7], strides = [1, 1]} : vector<7x7xf32> to vector<1x7xf32>
    %732 = vector.broadcast %730 : vector<8x1xf32> to vector<8x7xf32>
    %733 = vector.broadcast %731 : vector<1x7xf32> to vector<8x7xf32>
    %734 = arith.addf %732, %733 : vector<8x7xf32>
    %735 = arith.cmpf ogt, %734, %727 : vector<8x7xf32>
    %736 = arith.select %735, %734, %727 : vector<8x7xi1>, vector<8x7xf32>
    %c2_i32_138 = arith.constant 2 : i32
    %737 = vector.broadcast %c2_i32_138 : i32 to vector<8x7xi32>
    %738 = arith.select %735, %737, %729 : vector<8x7xi1>, vector<8x7xi32>
    %739 = vector.extract_strided_slice %714 {offsets = [0, 3], sizes = [8, 1], strides = [1, 1]} : vector<8x7xf32> to vector<8x1xf32>
    %740 = vector.extract_strided_slice %337 {offsets = [3, 0], sizes = [1, 7], strides = [1, 1]} : vector<7x7xf32> to vector<1x7xf32>
    %741 = vector.broadcast %739 : vector<8x1xf32> to vector<8x7xf32>
    %742 = vector.broadcast %740 : vector<1x7xf32> to vector<8x7xf32>
    %743 = arith.addf %741, %742 : vector<8x7xf32>
    %744 = arith.cmpf ogt, %743, %736 : vector<8x7xf32>
    %745 = arith.select %744, %743, %736 : vector<8x7xi1>, vector<8x7xf32>
    %c3_i32_139 = arith.constant 3 : i32
    %746 = vector.broadcast %c3_i32_139 : i32 to vector<8x7xi32>
    %747 = arith.select %744, %746, %738 : vector<8x7xi1>, vector<8x7xi32>
    %748 = vector.extract_strided_slice %714 {offsets = [0, 4], sizes = [8, 1], strides = [1, 1]} : vector<8x7xf32> to vector<8x1xf32>
    %749 = vector.extract_strided_slice %337 {offsets = [4, 0], sizes = [1, 7], strides = [1, 1]} : vector<7x7xf32> to vector<1x7xf32>
    %750 = vector.broadcast %748 : vector<8x1xf32> to vector<8x7xf32>
    %751 = vector.broadcast %749 : vector<1x7xf32> to vector<8x7xf32>
    %752 = arith.addf %750, %751 : vector<8x7xf32>
    %753 = arith.cmpf ogt, %752, %745 : vector<8x7xf32>
    %754 = arith.select %753, %752, %745 : vector<8x7xi1>, vector<8x7xf32>
    %c4_i32_140 = arith.constant 4 : i32
    %755 = vector.broadcast %c4_i32_140 : i32 to vector<8x7xi32>
    %756 = arith.select %753, %755, %747 : vector<8x7xi1>, vector<8x7xi32>
    %757 = vector.extract_strided_slice %714 {offsets = [0, 5], sizes = [8, 1], strides = [1, 1]} : vector<8x7xf32> to vector<8x1xf32>
    %758 = vector.extract_strided_slice %337 {offsets = [5, 0], sizes = [1, 7], strides = [1, 1]} : vector<7x7xf32> to vector<1x7xf32>
    %759 = vector.broadcast %757 : vector<8x1xf32> to vector<8x7xf32>
    %760 = vector.broadcast %758 : vector<1x7xf32> to vector<8x7xf32>
    %761 = arith.addf %759, %760 : vector<8x7xf32>
    %762 = arith.cmpf ogt, %761, %754 : vector<8x7xf32>
    %763 = arith.select %762, %761, %754 : vector<8x7xi1>, vector<8x7xf32>
    %c5_i32_141 = arith.constant 5 : i32
    %764 = vector.broadcast %c5_i32_141 : i32 to vector<8x7xi32>
    %765 = arith.select %762, %764, %756 : vector<8x7xi1>, vector<8x7xi32>
    %766 = vector.extract_strided_slice %714 {offsets = [0, 6], sizes = [8, 1], strides = [1, 1]} : vector<8x7xf32> to vector<8x1xf32>
    %767 = vector.extract_strided_slice %337 {offsets = [6, 0], sizes = [1, 7], strides = [1, 1]} : vector<7x7xf32> to vector<1x7xf32>
    %768 = vector.broadcast %766 : vector<8x1xf32> to vector<8x7xf32>
    %769 = vector.broadcast %767 : vector<1x7xf32> to vector<8x7xf32>
    %770 = arith.addf %768, %769 : vector<8x7xf32>
    %771 = arith.cmpf ogt, %770, %763 : vector<8x7xf32>
    %772 = arith.select %771, %770, %763 : vector<8x7xi1>, vector<8x7xf32>
    %c6_i32_142 = arith.constant 6 : i32
    %773 = vector.broadcast %c6_i32_142 : i32 to vector<8x7xi32>
    %774 = arith.select %771, %773, %765 : vector<8x7xi1>, vector<8x7xi32>
    %775 = vector.extract_strided_slice %335 {offsets = [6, 0], sizes = [1, 7], strides = [1, 1]} : vector<8x7xf32> to vector<1x7xf32>
    %776 = vector.broadcast %775 : vector<1x7xf32> to vector<8x7xf32>
    %777 = arith.addf %772, %776 : vector<8x7xf32>
    %778 = arith.addf %777, %336 : vector<8x7xf32>
    %779 = vector.extract_strided_slice %778 {offsets = [0, 0], sizes = [8, 1], strides = [1, 1]} : vector<8x7xf32> to vector<8x1xf32>
    %780 = vector.extract_strided_slice %337 {offsets = [0, 0], sizes = [1, 7], strides = [1, 1]} : vector<7x7xf32> to vector<1x7xf32>
    %781 = vector.broadcast %779 : vector<8x1xf32> to vector<8x7xf32>
    %782 = vector.broadcast %780 : vector<1x7xf32> to vector<8x7xf32>
    %783 = arith.addf %781, %782 : vector<8x7xf32>
    %c0_i32_143 = arith.constant 0 : i32
    %784 = vector.broadcast %c0_i32_143 : i32 to vector<8x7xi32>
    %785 = vector.extract_strided_slice %778 {offsets = [0, 1], sizes = [8, 1], strides = [1, 1]} : vector<8x7xf32> to vector<8x1xf32>
    %786 = vector.extract_strided_slice %337 {offsets = [1, 0], sizes = [1, 7], strides = [1, 1]} : vector<7x7xf32> to vector<1x7xf32>
    %787 = vector.broadcast %785 : vector<8x1xf32> to vector<8x7xf32>
    %788 = vector.broadcast %786 : vector<1x7xf32> to vector<8x7xf32>
    %789 = arith.addf %787, %788 : vector<8x7xf32>
    %790 = arith.cmpf ogt, %789, %783 : vector<8x7xf32>
    %791 = arith.select %790, %789, %783 : vector<8x7xi1>, vector<8x7xf32>
    %c1_i32_144 = arith.constant 1 : i32
    %792 = vector.broadcast %c1_i32_144 : i32 to vector<8x7xi32>
    %793 = arith.select %790, %792, %784 : vector<8x7xi1>, vector<8x7xi32>
    %794 = vector.extract_strided_slice %778 {offsets = [0, 2], sizes = [8, 1], strides = [1, 1]} : vector<8x7xf32> to vector<8x1xf32>
    %795 = vector.extract_strided_slice %337 {offsets = [2, 0], sizes = [1, 7], strides = [1, 1]} : vector<7x7xf32> to vector<1x7xf32>
    %796 = vector.broadcast %794 : vector<8x1xf32> to vector<8x7xf32>
    %797 = vector.broadcast %795 : vector<1x7xf32> to vector<8x7xf32>
    %798 = arith.addf %796, %797 : vector<8x7xf32>
    %799 = arith.cmpf ogt, %798, %791 : vector<8x7xf32>
    %800 = arith.select %799, %798, %791 : vector<8x7xi1>, vector<8x7xf32>
    %c2_i32_145 = arith.constant 2 : i32
    %801 = vector.broadcast %c2_i32_145 : i32 to vector<8x7xi32>
    %802 = arith.select %799, %801, %793 : vector<8x7xi1>, vector<8x7xi32>
    %803 = vector.extract_strided_slice %778 {offsets = [0, 3], sizes = [8, 1], strides = [1, 1]} : vector<8x7xf32> to vector<8x1xf32>
    %804 = vector.extract_strided_slice %337 {offsets = [3, 0], sizes = [1, 7], strides = [1, 1]} : vector<7x7xf32> to vector<1x7xf32>
    %805 = vector.broadcast %803 : vector<8x1xf32> to vector<8x7xf32>
    %806 = vector.broadcast %804 : vector<1x7xf32> to vector<8x7xf32>
    %807 = arith.addf %805, %806 : vector<8x7xf32>
    %808 = arith.cmpf ogt, %807, %800 : vector<8x7xf32>
    %809 = arith.select %808, %807, %800 : vector<8x7xi1>, vector<8x7xf32>
    %c3_i32_146 = arith.constant 3 : i32
    %810 = vector.broadcast %c3_i32_146 : i32 to vector<8x7xi32>
    %811 = arith.select %808, %810, %802 : vector<8x7xi1>, vector<8x7xi32>
    %812 = vector.extract_strided_slice %778 {offsets = [0, 4], sizes = [8, 1], strides = [1, 1]} : vector<8x7xf32> to vector<8x1xf32>
    %813 = vector.extract_strided_slice %337 {offsets = [4, 0], sizes = [1, 7], strides = [1, 1]} : vector<7x7xf32> to vector<1x7xf32>
    %814 = vector.broadcast %812 : vector<8x1xf32> to vector<8x7xf32>
    %815 = vector.broadcast %813 : vector<1x7xf32> to vector<8x7xf32>
    %816 = arith.addf %814, %815 : vector<8x7xf32>
    %817 = arith.cmpf ogt, %816, %809 : vector<8x7xf32>
    %818 = arith.select %817, %816, %809 : vector<8x7xi1>, vector<8x7xf32>
    %c4_i32_147 = arith.constant 4 : i32
    %819 = vector.broadcast %c4_i32_147 : i32 to vector<8x7xi32>
    %820 = arith.select %817, %819, %811 : vector<8x7xi1>, vector<8x7xi32>
    %821 = vector.extract_strided_slice %778 {offsets = [0, 5], sizes = [8, 1], strides = [1, 1]} : vector<8x7xf32> to vector<8x1xf32>
    %822 = vector.extract_strided_slice %337 {offsets = [5, 0], sizes = [1, 7], strides = [1, 1]} : vector<7x7xf32> to vector<1x7xf32>
    %823 = vector.broadcast %821 : vector<8x1xf32> to vector<8x7xf32>
    %824 = vector.broadcast %822 : vector<1x7xf32> to vector<8x7xf32>
    %825 = arith.addf %823, %824 : vector<8x7xf32>
    %826 = arith.cmpf ogt, %825, %818 : vector<8x7xf32>
    %827 = arith.select %826, %825, %818 : vector<8x7xi1>, vector<8x7xf32>
    %c5_i32_148 = arith.constant 5 : i32
    %828 = vector.broadcast %c5_i32_148 : i32 to vector<8x7xi32>
    %829 = arith.select %826, %828, %820 : vector<8x7xi1>, vector<8x7xi32>
    %830 = vector.extract_strided_slice %778 {offsets = [0, 6], sizes = [8, 1], strides = [1, 1]} : vector<8x7xf32> to vector<8x1xf32>
    %831 = vector.extract_strided_slice %337 {offsets = [6, 0], sizes = [1, 7], strides = [1, 1]} : vector<7x7xf32> to vector<1x7xf32>
    %832 = vector.broadcast %830 : vector<8x1xf32> to vector<8x7xf32>
    %833 = vector.broadcast %831 : vector<1x7xf32> to vector<8x7xf32>
    %834 = arith.addf %832, %833 : vector<8x7xf32>
    %835 = arith.cmpf ogt, %834, %827 : vector<8x7xf32>
    %836 = arith.select %835, %834, %827 : vector<8x7xi1>, vector<8x7xf32>
    %c6_i32_149 = arith.constant 6 : i32
    %837 = vector.broadcast %c6_i32_149 : i32 to vector<8x7xi32>
    %838 = arith.select %835, %837, %829 : vector<8x7xi1>, vector<8x7xi32>
    %839 = vector.extract_strided_slice %335 {offsets = [7, 0], sizes = [1, 7], strides = [1, 1]} : vector<8x7xf32> to vector<1x7xf32>
    %840 = vector.broadcast %839 : vector<1x7xf32> to vector<8x7xf32>
    %841 = arith.addf %836, %840 : vector<8x7xf32>
    %842 = arith.addf %841, %336 : vector<8x7xf32>
    %c0_150 = arith.constant 0 : index
    %c0_151 = arith.constant 0 : index
    %843 = vector.load %arg10[%c0_150, %c0_151] : memref<1x7xf32, #tpu.memory_space<vmem>>, vector<1x7xf32>
    %844 = vector.broadcast %843 : vector<1x7xf32> to vector<8x7xf32>
    %845 = arith.addf %842, %844 : vector<8x7xf32>
    %846 = vector.extract_strided_slice %845 {offsets = [0, 0], sizes = [8, 1], strides = [1, 1]} : vector<8x7xf32> to vector<8x1xf32>
    %c0_i32_152 = arith.constant 0 : i32
    %847 = vector.broadcast %c0_i32_152 : i32 to vector<8x1xi32>
    %848 = vector.extract_strided_slice %845 {offsets = [0, 1], sizes = [8, 1], strides = [1, 1]} : vector<8x7xf32> to vector<8x1xf32>
    %849 = arith.cmpf ogt, %848, %846 : vector<8x1xf32>
    %850 = arith.select %849, %848, %846 : vector<8x1xi1>, vector<8x1xf32>
    %c1_i32_153 = arith.constant 1 : i32
    %851 = vector.broadcast %c1_i32_153 : i32 to vector<8x1xi32>
    %852 = arith.select %849, %851, %847 : vector<8x1xi1>, vector<8x1xi32>
    %853 = vector.extract_strided_slice %845 {offsets = [0, 2], sizes = [8, 1], strides = [1, 1]} : vector<8x7xf32> to vector<8x1xf32>
    %854 = arith.cmpf ogt, %853, %850 : vector<8x1xf32>
    %855 = arith.select %854, %853, %850 : vector<8x1xi1>, vector<8x1xf32>
    %c2_i32_154 = arith.constant 2 : i32
    %856 = vector.broadcast %c2_i32_154 : i32 to vector<8x1xi32>
    %857 = arith.select %854, %856, %852 : vector<8x1xi1>, vector<8x1xi32>
    %858 = vector.extract_strided_slice %845 {offsets = [0, 3], sizes = [8, 1], strides = [1, 1]} : vector<8x7xf32> to vector<8x1xf32>
    %859 = arith.cmpf ogt, %858, %855 : vector<8x1xf32>
    %860 = arith.select %859, %858, %855 : vector<8x1xi1>, vector<8x1xf32>
    %c3_i32_155 = arith.constant 3 : i32
    %861 = vector.broadcast %c3_i32_155 : i32 to vector<8x1xi32>
    %862 = arith.select %859, %861, %857 : vector<8x1xi1>, vector<8x1xi32>
    %863 = vector.extract_strided_slice %845 {offsets = [0, 4], sizes = [8, 1], strides = [1, 1]} : vector<8x7xf32> to vector<8x1xf32>
    %864 = arith.cmpf ogt, %863, %860 : vector<8x1xf32>
    %865 = arith.select %864, %863, %860 : vector<8x1xi1>, vector<8x1xf32>
    %c4_i32_156 = arith.constant 4 : i32
    %866 = vector.broadcast %c4_i32_156 : i32 to vector<8x1xi32>
    %867 = arith.select %864, %866, %862 : vector<8x1xi1>, vector<8x1xi32>
    %868 = vector.extract_strided_slice %845 {offsets = [0, 5], sizes = [8, 1], strides = [1, 1]} : vector<8x7xf32> to vector<8x1xf32>
    %869 = arith.cmpf ogt, %868, %865 : vector<8x1xf32>
    %870 = arith.select %869, %868, %865 : vector<8x1xi1>, vector<8x1xf32>
    %c5_i32_157 = arith.constant 5 : i32
    %871 = vector.broadcast %c5_i32_157 : i32 to vector<8x1xi32>
    %872 = arith.select %869, %871, %867 : vector<8x1xi1>, vector<8x1xi32>
    %873 = vector.extract_strided_slice %845 {offsets = [0, 6], sizes = [8, 1], strides = [1, 1]} : vector<8x7xf32> to vector<8x1xf32>
    %874 = arith.cmpf ogt, %873, %870 : vector<8x1xf32>
    %875 = arith.select %874, %873, %870 : vector<8x1xi1>, vector<8x1xf32>
    %c6_i32_158 = arith.constant 6 : i32
    %876 = vector.broadcast %c6_i32_158 : i32 to vector<8x1xi32>
    %877 = arith.select %874, %876, %872 : vector<8x1xi1>, vector<8x1xi32>
    %c0_159 = arith.constant 0 : index
    %c0_160 = arith.constant 0 : index
    %c0_161 = arith.constant 0 : index
    %878 = vector.load %arg11[%c0_159, %c0_160, %c0_161] : memref<1x8x1xf32, #tpu.memory_space<vmem>>, vector<1x8x1xf32>
    %879 = vector.shape_cast %878 : vector<1x8x1xf32> to vector<8x1xf32>
    %880 = vector.shape_cast %875 : vector<8x1xf32> to vector<1x8x1xf32>
    tpu.vector_store %arg11[%c0_159, %c0_160, %c0_161], %880 {strides = array<i32>} : memref<1x8x1xf32, #tpu.memory_space<vmem>>, vector<1x8x1xf32>,
    %881 = tpu.iota {dimensions = array<i32: 1>} : vector<8x8xi32>
    %c7_i32 = arith.constant 7 : i32
    %882 = vector.broadcast %c7_i32 : i32 to vector<8x8xi32>
    %883 = arith.cmpi eq, %881, %882 : vector<8x8xi32>
    %c0_i32_162 = arith.constant 0 : i32
    %884 = vector.shape_cast %877 : vector<8x1xi32> to vector<8x1xi32>
    %885 = vector.broadcast %884 : vector<8x1xi32> to vector<8x8xi32>
    %886 = vector.broadcast %c0_i32_162 : i32 to vector<8x8xi32>
    %887 = arith.select %883, %885, %886 : vector<8x8xi1>, vector<8x8xi32>
    %888 = vector.broadcast %877 : vector<8x1xi32> to vector<8x7xi32>
    %889 = arith.cmpi eq, %338, %888 : vector<8x7xi32>
    %c0_i32_163 = arith.constant 0 : i32
    %890 = vector.broadcast %c0_i32_163 : i32 to vector<8x7xi32>
    %891 = arith.select %889, %838, %890 : vector<8x7xi1>, vector<8x7xi32>
    %cst_164 = arith.constant dense<0> : vector<8xi32>
    %892 = vector.multi_reduction <add>, %891, %cst_164 [1] : vector<8x7xi32> to vector<8xi32>
    %893 = vector.shape_cast %892 : vector<8xi32> to vector<8x1xi32>
    %c6_i32_165 = arith.constant 6 : i32
    %894 = vector.broadcast %c6_i32_165 : i32 to vector<8x8xi32>
    %895 = arith.cmpi eq, %881, %894 : vector<8x8xi32>
    %896 = vector.shape_cast %893 : vector<8x1xi32> to vector<8x1xi32>
    %897 = vector.broadcast %896 : vector<8x1xi32> to vector<8x8xi32>
    %898 = arith.select %895, %897, %887 : vector<8x8xi1>, vector<8x8xi32>
    %899 = vector.broadcast %893 : vector<8x1xi32> to vector<8x7xi32>
    %900 = arith.cmpi eq, %338, %899 : vector<8x7xi32>
    %c0_i32_166 = arith.constant 0 : i32
    %901 = vector.broadcast %c0_i32_166 : i32 to vector<8x7xi32>
    %902 = arith.select %900, %774, %901 : vector<8x7xi1>, vector<8x7xi32>
    %cst_167 = arith.constant dense<0> : vector<8xi32>
    %903 = vector.multi_reduction <add>, %902, %cst_167 [1] : vector<8x7xi32> to vector<8xi32>
    %904 = vector.shape_cast %903 : vector<8xi32> to vector<8x1xi32>
    %c5_i32_168 = arith.constant 5 : i32
    %905 = vector.broadcast %c5_i32_168 : i32 to vector<8x8xi32>
    %906 = arith.cmpi eq, %881, %905 : vector<8x8xi32>
    %907 = vector.shape_cast %904 : vector<8x1xi32> to vector<8x1xi32>
    %908 = vector.broadcast %907 : vector<8x1xi32> to vector<8x8xi32>
    %909 = arith.select %906, %908, %898 : vector<8x8xi1>, vector<8x8xi32>
    %910 = vector.broadcast %904 : vector<8x1xi32> to vector<8x7xi32>
    %911 = arith.cmpi eq, %338, %910 : vector<8x7xi32>
    %c0_i32_169 = arith.constant 0 : i32
    %912 = vector.broadcast %c0_i32_169 : i32 to vector<8x7xi32>
    %913 = arith.select %911, %710, %912 : vector<8x7xi1>, vector<8x7xi32>
    %cst_170 = arith.constant dense<0> : vector<8xi32>
    %914 = vector.multi_reduction <add>, %913, %cst_170 [1] : vector<8x7xi32> to vector<8xi32>
    %915 = vector.shape_cast %914 : vector<8xi32> to vector<8x1xi32>
    %c4_i32_171 = arith.constant 4 : i32
    %916 = vector.broadcast %c4_i32_171 : i32 to vector<8x8xi32>
    %917 = arith.cmpi eq, %881, %916 : vector<8x8xi32>
    %918 = vector.shape_cast %915 : vector<8x1xi32> to vector<8x1xi32>
    %919 = vector.broadcast %918 : vector<8x1xi32> to vector<8x8xi32>
    %920 = arith.select %917, %919, %909 : vector<8x8xi1>, vector<8x8xi32>
    %921 = vector.broadcast %915 : vector<8x1xi32> to vector<8x7xi32>
    %922 = arith.cmpi eq, %338, %921 : vector<8x7xi32>
    %c0_i32_172 = arith.constant 0 : i32
    %923 = vector.broadcast %c0_i32_172 : i32 to vector<8x7xi32>
    %924 = arith.select %922, %646, %923 : vector<8x7xi1>, vector<8x7xi32>
    %cst_173 = arith.constant dense<0> : vector<8xi32>
    %925 = vector.multi_reduction <add>, %924, %cst_173 [1] : vector<8x7xi32> to vector<8xi32>
    %926 = vector.shape_cast %925 : vector<8xi32> to vector<8x1xi32>
    %c3_i32_174 = arith.constant 3 : i32
    %927 = vector.broadcast %c3_i32_174 : i32 to vector<8x8xi32>
    %928 = arith.cmpi eq, %881, %927 : vector<8x8xi32>
    %929 = vector.shape_cast %926 : vector<8x1xi32> to vector<8x1xi32>
    %930 = vector.broadcast %929 : vector<8x1xi32> to vector<8x8xi32>
    %931 = arith.select %928, %930, %920 : vector<8x8xi1>, vector<8x8xi32>
    %932 = vector.broadcast %926 : vector<8x1xi32> to vector<8x7xi32>
    %933 = arith.cmpi eq, %338, %932 : vector<8x7xi32>
    %c0_i32_175 = arith.constant 0 : i32
    %934 = vector.broadcast %c0_i32_175 : i32 to vector<8x7xi32>
    %935 = arith.select %933, %582, %934 : vector<8x7xi1>, vector<8x7xi32>
    %cst_176 = arith.constant dense<0> : vector<8xi32>
    %936 = vector.multi_reduction <add>, %935, %cst_176 [1] : vector<8x7xi32> to vector<8xi32>
    %937 = vector.shape_cast %936 : vector<8xi32> to vector<8x1xi32>
    %c2_i32_177 = arith.constant 2 : i32
    %938 = vector.broadcast %c2_i32_177 : i32 to vector<8x8xi32>
    %939 = arith.cmpi eq, %881, %938 : vector<8x8xi32>
    %940 = vector.shape_cast %937 : vector<8x1xi32> to vector<8x1xi32>
    %941 = vector.broadcast %940 : vector<8x1xi32> to vector<8x8xi32>
    %942 = arith.select %939, %941, %931 : vector<8x8xi1>, vector<8x8xi32>
    %943 = vector.broadcast %937 : vector<8x1xi32> to vector<8x7xi32>
    %944 = arith.cmpi eq, %338, %943 : vector<8x7xi32>
    %c0_i32_178 = arith.constant 0 : i32
    %945 = vector.broadcast %c0_i32_178 : i32 to vector<8x7xi32>
    %946 = arith.select %944, %518, %945 : vector<8x7xi1>, vector<8x7xi32>
    %cst_179 = arith.constant dense<0> : vector<8xi32>
    %947 = vector.multi_reduction <add>, %946, %cst_179 [1] : vector<8x7xi32> to vector<8xi32>
    %948 = vector.shape_cast %947 : vector<8xi32> to vector<8x1xi32>
    %c1_i32_180 = arith.constant 1 : i32
    %949 = vector.broadcast %c1_i32_180 : i32 to vector<8x8xi32>
    %950 = arith.cmpi eq, %881, %949 : vector<8x8xi32>
    %951 = vector.shape_cast %948 : vector<8x1xi32> to vector<8x1xi32>
    %952 = vector.broadcast %951 : vector<8x1xi32> to vector<8x8xi32>
    %953 = arith.select %950, %952, %942 : vector<8x8xi1>, vector<8x8xi32>
    %954 = vector.broadcast %948 : vector<8x1xi32> to vector<8x7xi32>
    %955 = arith.cmpi eq, %338, %954 : vector<8x7xi32>
    %c0_i32_181 = arith.constant 0 : i32
    %956 = vector.broadcast %c0_i32_181 : i32 to vector<8x7xi32>
    %957 = arith.select %955, %454, %956 : vector<8x7xi1>, vector<8x7xi32>
    %cst_182 = arith.constant dense<0> : vector<8xi32>
    %958 = vector.multi_reduction <add>, %957, %cst_182 [1] : vector<8x7xi32> to vector<8xi32>
    %959 = vector.shape_cast %958 : vector<8xi32> to vector<8x1xi32>
    %c0_i32_183 = arith.constant 0 : i32
    %960 = vector.broadcast %c0_i32_183 : i32 to vector<8x8xi32>
    %961 = arith.cmpi eq, %881, %960 : vector<8x8xi32>
    %962 = vector.shape_cast %959 : vector<8x1xi32> to vector<8x1xi32>
    %963 = vector.broadcast %962 : vector<8x1xi32> to vector<8x8xi32>
    %964 = arith.select %961, %963, %953 : vector<8x8xi1>, vector<8x8xi32>
    %c0_184 = arith.constant 0 : index
    %c0_185 = arith.constant 0 : index
    %c0_186 = arith.constant 0 : index
    %965 = vector.load %arg12[%c0_184, %c0_185, %c0_186] : memref<1x8x8xi32, #tpu.memory_space<vmem>>, vector<1x8x8xi32>
    %966 = vector.shape_cast %965 : vector<1x8x8xi32> to vector<8x8xi32>
    %967 = vector.shape_cast %964 : vector<8x8xi32> to vector<1x8x8xi32>
    tpu.vector_store %arg12[%c0_184, %c0_185, %c0_186], %967 {strides = array<i32>} : memref<1x8x8xi32, #tpu.memory_space<vmem>>, vector<1x8x8xi32>,
    return
  }
  func.func @transform_0(%arg0: i32) -> (i32, i32, i32) {
    %c0_i32 = arith.constant 0 : i32
    %c0_i32_0 = arith.constant 0 : i32
    %c0_i32_1 = arith.constant 0 : i32
    return %arg0, %c0_i32, %c0_i32_0 : i32, i32, i32
  }
  func.func @transform_1(%arg0: i32) -> (i32, i32) {
    %c0_i32 = arith.constant 0 : i32
    %c0_i32_0 = arith.constant 0 : i32
    %c0_i32_1 = arith.constant 0 : i32
    return %c0_i32, %c0_i32_0 : i32, i32
  }
  func.func @transform_2(%arg0: i32) -> (i32, i32) {
    %c0_i32 = arith.constant 0 : i32
    %c0_i32_0 = arith.constant 0 : i32
    %c0_i32_1 = arith.constant 0 : i32
    return %c0_i32, %c0_i32_0 : i32, i32
  }
  func.func @transform_3(%arg0: i32) -> (i32, i32) {
    %c0_i32 = arith.constant 0 : i32
    %c0_i32_0 = arith.constant 0 : i32
    %c0_i32_1 = arith.constant 0 : i32
    return %c0_i32, %c0_i32_0 : i32, i32
  }
  func.func @transform_4(%arg0: i32) -> (i32, i32) {
    %c0_i32 = arith.constant 0 : i32
    %c0_i32_0 = arith.constant 0 : i32
    %c0_i32_1 = arith.constant 0 : i32
    return %c0_i32, %c0_i32_0 : i32, i32
  }
  func.func @transform_5(%arg0: i32) -> (i32, i32) {
    %c0_i32 = arith.constant 0 : i32
    %c0_i32_0 = arith.constant 0 : i32
    %c0_i32_1 = arith.constant 0 : i32
    return %c0_i32, %c0_i32_0 : i32, i32
  }
  func.func @transform_6(%arg0: i32) -> (i32, i32) {
    %c0_i32 = arith.constant 0 : i32
    %c0_i32_0 = arith.constant 0 : i32
    %c0_i32_1 = arith.constant 0 : i32
    return %c0_i32, %c0_i32_0 : i32, i32
  }
  func.func @transform_7(%arg0: i32) -> (i32, i32) {
    %c0_i32 = arith.constant 0 : i32
    %c0_i32_0 = arith.constant 0 : i32
    %c0_i32_1 = arith.constant 0 : i32
    return %c0_i32, %c0_i32_0 : i32, i32
  }
  func.func @transform_8(%arg0: i32) -> (i32, i32) {
    %c0_i32 = arith.constant 0 : i32
    %c0_i32_0 = arith.constant 0 : i32
    %c0_i32_1 = arith.constant 0 : i32
    return %c0_i32, %c0_i32_0 : i32, i32
  }
  func.func @transform_9(%arg0: i32) -> (i32, i32) {
    %c0_i32 = arith.constant 0 : i32
    %c0_i32_0 = arith.constant 0 : i32
    %c0_i32_1 = arith.constant 0 : i32
    return %c0_i32, %c0_i32_0 : i32, i32
  }
  func.func @transform_10(%arg0: i32) -> (i32, i32, i32) {
    %c0_i32 = arith.constant 0 : i32
    %c0_i32_0 = arith.constant 0 : i32
    %c0_i32_1 = arith.constant 0 : i32
    return %arg0, %c0_i32, %c0_i32_0 : i32, i32, i32
  }
  func.func @transform_11(%arg0: i32) -> (i32, i32, i32) {
    %c0_i32 = arith.constant 0 : i32
    %c0_i32_0 = arith.constant 0 : i32
    %c0_i32_1 = arith.constant 0 : i32
    return %arg0, %c0_i32, %c0_i32_0 : i32, i32, i32
  }
}

</mosaic_0001>

<llo_original>
// kernel: forward_batch.1
$region0: #{forward_batch.1}
  #allocation0 [shape = 'u32[]', space=smem, size = 0x4, offset = 0x4, fixed_abs, tag = 'smem constant byte address 0x4 - core index']
  #allocation1 [shape = 'u32[144,128]{1,0:T(1,128)}', space=vmem, size = 0x12000, scoped, tag = 'internal scratch']
  %s0 = inlined_call_operand.vmem [shape: s32[2,8,1], index: 0, kind: input, shape index: {}]
  %s1 = inlined_call_operand.vmem [shape: f32[20,128], index: 1, kind: input, shape index: {}]
  %s2 = inlined_call_operand.vmem [shape: f32[1,128], index: 2, kind: input, shape index: {}]
  %s3 = inlined_call_operand.vmem [shape: f32[32,128], index: 3, kind: input, shape index: {}]
  %s4 = inlined_call_operand.vmem [shape: f32[1,32], index: 4, kind: input, shape index: {}]
  %s5 = inlined_call_operand.hbm [shape: f32[1,32], index: 5, kind: input, shape index: {}]
  %s6 = inlined_call_operand.vmem [shape: f32[32,14], index: 6, kind: input, shape index: {}]
  %s7 = inlined_call_operand.hbm [shape: f32[1,14], index: 7, kind: input, shape index: {}]
  %s8 = inlined_call_operand.vmem [shape: f32[7,7], index: 8, kind: input, shape index: {}]
  %s9 = inlined_call_operand.vmem [shape: f32[1,7], index: 9, kind: input, shape index: {}]
  %s10 = inlined_call_operand.vmem [shape: f32[2,8,1], index: 10, kind: output, shape index: {0}]
  %s11 = inlined_call_operand.hbm [shape: s32[2,8,8], index: 11, kind: output, shape index: {1}]
  %12 = xla_tuple %s10, %s11
  %s13 = sld [smem:[#allocation0]]
  $region89: #{forward_batch.1} parent=0
    _
  %s15 = ssub.s32 1, %s13
  %s16 = scalar_select 0, %s15, %s13
  $region1: #{forward_batch.1} parent=0
    #allocation2 [shape = 'u8[512]{0}', space=vmem, size = 0x400, scoped, tag = 'input window, operand 5, single buffered']
    #allocation3 [shape = 's32[2]{0}', space=sflag, size = 0x8, scoped, tag = 'scoped memory for forward_batch.1']
    #allocation4 [shape = 's32[2]{0}', space=sflag, size = 0x8, scoped, tag = 'scoped memory for forward_batch.1']
    #allocation5 [shape = 'u8[512]{0}', space=vmem, size = 0x400, scoped, tag = 'input window, operand 7, single buffered']
    #allocation6 [shape = 's32[1]{0}', space=sflag, size = 0x4, scoped, tag = 'scoped memory for forward_batch.1']
    #allocation7 [shape = 'u8[8192]{0}', space=vmem, size = 0x2000, scoped, tag = 'output window, operand 1']
    %17 = vsyncpa [#allocation3], 0
    %18 = vsyncpa [#allocation6], 0
    %19 = vsyncpa [#allocation4], 0
    %s20 = scalar_lea.sflag [#allocation4], 1
    %21 = vsyncpa %s20, 0
    loop: start=0, step=1, limit=4
    $region2: #{forward_batch.1} parent=1 // loop_pre_header
      _
    $region3: #{forward_batch.1} parent=1 // loop_header
      %s23 = sphi 0, %s27
      %p24 = scmp.ge.s32.totalorder %s23, 4
      %s33 = sphi 0, %s35
      %s36 = sphi 0, %s33
      %s37 = sphi 0, %s36
      %s53 = sphi 0, %s37
      %s57 = sphi 0, %s57
      %s59 = sphi 0, %s57
      %s60 = sphi 0, %s59
      %s74 = sphi 0, %s60
      %s78 = sphi 0, %s78
      %s80 = sphi 0, %s78
      %s81 = sphi 0, %s80
      %s95 = sphi 0, %s81
      %s99 = sphi 0, %s99
      %s101 = sphi 0, %s99
      %s102 = sphi 0, %s101
      %s116 = sphi 0, %s102
      %s120 = sphi 0, %s120
      %s122 = sphi 0, %s120
      %s123 = sphi 0, %s122
      %s137 = sphi 0, %s123
      %s141 = sphi 0, %s141
      %s143 = sphi 0, %s141
      %s144 = sphi 0, %s143
      %s158 = sphi 0, %s144
      %s162 = sphi 0, %s162
      %s164 = sphi 0, %s162
      %s165 = sphi 0, %s164
      %s179 = sphi 0, %s165
      %s183 = sphi 0, %s183
      %s185 = sphi 0, %s183
      %s186 = sphi 0, %s185
      %s200 = sphi 0, %s186
      %s204 = sphi 0, %s204
      %s206 = sphi 0, %s204
      %s207 = sphi 0, %s206
      %s221 = sphi 0, %s207
      %s225 = sphi 0, %s225
      %s227 = sphi 0, %s225
      %s228 = sphi 0, %s227
      %s242 = sphi 0, %s228
      %s248 = sphi 0, %s250
      %s251 = sphi 0, %s248
      %s252 = sphi 0, %s251
      %s268 = sphi 0, %s252
      %s274 = sphi 0, %s276
      %s277 = sphi 0, %s274
      %s278 = sphi 0, %s277
      %s294 = sphi 0, %s278
    $region4: #{forward_batch.1} parent=1 // loop_header_branch
      %26 = sbr.rel (%p24) target = $region8
    $region5: #{forward_batch.1} parent=1 // loop_body
      %s28 = ssub.s32 %s23, 1
      %s29 = ssub.s32 %s23, 2
      %s30 = sadd.s32 %s23, 1
      %s31 = ssub.s32 %s23, %s30
      %p32 = scmp.eq.s32.totalorder %s31, 0
      %s34 = sadd.s32 %s33, 1
      %s35 = scalar_select %p32, %s33, %s34
      %p38 = pneg %p32
      %p39 = scmp.eq.s32.totalorder %s23, 1
      %p40 = por %p38, %p39
      %p41 = scmp.ne.s32.totalorder %s33, %s36
      %p42 = scmp.eq.s32.totalorder %s23, 0
      %p43 = por %p41, %p42
      %p44 = scmp.ne.s32.totalorder %s33, %s36
      %p45 = scmp.eq.s32.totalorder %s28, 1
      %p46 = por %p44, %p45
      %p47 = scmp.ne.s32.totalorder %s36, %s37
      %p48 = scmp.eq.s32.totalorder %s28, 0
      %p49 = por %p47, %p48
      %p50 = scmp.ne.s32.totalorder %s36, %s37
      %p51 = scmp.eq.s32.totalorder %s29, 1
      %p52 = por %p50, %p51
      %p54 = scmp.ne.s32.totalorder %s37, %s53
      %p55 = scmp.eq.s32.totalorder %s29, 0
      %p56 = por %p54, %p55
      %s58 = sadd.s32 %s57, 1
      %p61 = scmp.eq.s32.totalorder %s23, 1
      %p62 = scmp.ne.s32.totalorder %s57, %s59
      %p63 = scmp.eq.s32.totalorder %s23, 0
      %p64 = por %p62, %p63
      %p65 = scmp.ne.s32.totalorder %s57, %s59
      %p66 = scmp.eq.s32.totalorder %s28, 1
      %p67 = por %p65, %p66
      %p68 = scmp.ne.s32.totalorder %s59, %s60
      %p69 = scmp.eq.s32.totalorder %s28, 0
      %p70 = por %p68, %p69
      %p71 = scmp.ne.s32.totalorder %s59, %s60
      %p72 = scmp.eq.s32.totalorder %s29, 1
      %p73 = por %p71, %p72
      %p75 = scmp.ne.s32.totalorder %s60, %s74
      %p76 = scmp.eq.s32.totalorder %s29, 0
      %p77 = por %p75, %p76
      %s79 = sadd.s32 %s78, 1
      %p82 = scmp.eq.s32.totalorder %s23, 1
      %p83 = scmp.ne.s32.totalorder %s78, %s80
      %p84 = scmp.eq.s32.totalorder %s23, 0
      %p85 = por %p83, %p84
      %p86 = scmp.ne.s32.totalorder %s78, %s80
      %p87 = scmp.eq.s32.totalorder %s28, 1
      %p88 = por %p86, %p87
      %p89 = scmp.ne.s32.totalorder %s80, %s81
      %p90 = scmp.eq.s32.totalorder %s28, 0
      %p91 = por %p89, %p90
      %p92 = scmp.ne.s32.totalorder %s80, %s81
      %p93 = scmp.eq.s32.totalorder %s29, 1
      %p94 = por %p92, %p93
      %p96 = scmp.ne.s32.totalorder %s81, %s95
      %p97 = scmp.eq.s32.totalorder %s29, 0
      %p98 = por %p96, %p97
      %s100 = sadd.s32 %s99, 1
      %p103 = scmp.eq.s32.totalorder %s23, 1
      %p104 = scmp.ne.s32.totalorder %s99, %s101
      %p105 = scmp.eq.s32.totalorder %s23, 0
      %p106 = por %p104, %p105
      %p107 = scmp.ne.s32.totalorder %s99, %s101
      %p108 = scmp.eq.s32.totalorder %s28, 1
      %p109 = por %p107, %p108
      %p110 = scmp.ne.s32.totalorder %s101, %s102
      %p111 = scmp.eq.s32.totalorder %s28, 0
      %p112 = por %p110, %p111
      %p113 = scmp.ne.s32.totalorder %s101, %s102
      %p114 = scmp.eq.s32.totalorder %s29, 1
      %p115 = por %p113, %p114
      %p117 = scmp.ne.s32.totalorder %s102, %s116
      %p118 = scmp.eq.s32.totalorder %s29, 0
      %p119 = por %p117, %p118
      %s121 = sadd.s32 %s120, 1
      %p124 = scmp.eq.s32.totalorder %s23, 1
      %p125 = scmp.ne.s32.totalorder %s120, %s122
      %p126 = scmp.eq.s32.totalorder %s23, 0
      %p127 = por %p125, %p126
      %p128 = scmp.ne.s32.totalorder %s120, %s122
      %p129 = scmp.eq.s32.totalorder %s28, 1
      %p130 = por %p128, %p129
      %p131 = scmp.ne.s32.totalorder %s122, %s123
      %p132 = scmp.eq.s32.totalorder %s28, 0
      %p133 = por %p131, %p132
      %p134 = scmp.ne.s32.totalorder %s122, %s123
      %p135 = scmp.eq.s32.totalorder %s29, 1
      %p136 = por %p134, %p135
      %p138 = scmp.ne.s32.totalorder %s123, %s137
      %p139 = scmp.eq.s32.totalorder %s29, 0
      %p140 = por %p138, %p139
      %s142 = sadd.s32 %s141, 1
      %p145 = scmp.eq.s32.totalorder %s23, 1
      %p146 = scmp.ne.s32.totalorder %s141, %s143
      %p147 = scmp.eq.s32.totalorder %s23, 0
      %p148 = por %p146, %p147
      %p149 = scmp.ne.s32.totalorder %s141, %s143
      %p150 = scmp.eq.s32.totalorder %s28, 1
      %p151 = por %p149, %p150
      %p152 = scmp.ne.s32.totalorder %s143, %s144
      %p153 = scmp.eq.s32.totalorder %s28, 0
      %p154 = por %p152, %p153
      %p155 = scmp.ne.s32.totalorder %s143, %s144
      %p156 = scmp.eq.s32.totalorder %s29, 1
      %p157 = por %p155, %p156
      %p159 = scmp.ne.s32.totalorder %s144, %s158
      %p160 = scmp.eq.s32.totalorder %s29, 0
      %p161 = por %p159, %p160
      %s163 = sadd.s32 %s162, 1
      %p166 = scmp.eq.s32.totalorder %s23, 1
      %p167 = scmp.ne.s32.totalorder %s162, %s164
      %p168 = scmp.eq.s32.totalorder %s23, 0
      %p169 = por %p167, %p168
      %p170 = scmp.ne.s32.totalorder %s162, %s164
      %p171 = scmp.eq.s32.totalorder %s28, 1
      %p172 = por %p170, %p171
      %p173 = scmp.ne.s32.totalorder %s164, %s165
      %p174 = scmp.eq.s32.totalorder %s28, 0
      %p175 = por %p173, %p174
      %p176 = scmp.ne.s32.totalorder %s164, %s165
      %p177 = scmp.eq.s32.totalorder %s29, 1
      %p178 = por %p176, %p177
      %p180 = scmp.ne.s32.totalorder %s165, %s179
      %p181 = scmp.eq.s32.totalorder %s29, 0
      %p182 = por %p180, %p181
      %s184 = sadd.s32 %s183, 1
      %p187 = scmp.eq.s32.totalorder %s23, 1
      %p188 = scmp.ne.s32.totalorder %s183, %s185
      %p189 = scmp.eq.s32.totalorder %s23, 0
      %p190 = por %p188, %p189
      %p191 = scmp.ne.s32.totalorder %s183, %s185
      %p192 = scmp.eq.s32.totalorder %s28, 1
      %p193 = por %p191, %p192
      %p194 = scmp.ne.s32.totalorder %s185, %s186
      %p195 = scmp.eq.s32.totalorder %s28, 0
      %p196 = por %p194, %p195
      %p197 = scmp.ne.s32.totalorder %s185, %s186
      %p198 = scmp.eq.s32.totalorder %s29, 1
      %p199 = por %p197, %p198
      %p201 = scmp.ne.s32.totalorder %s186, %s200
      %p202 = scmp.eq.s32.totalorder %s29, 0
      %p203 = por %p201, %p202
      %s205 = sadd.s32 %s204, 1
      %p208 = scmp.eq.s32.totalorder %s23, 1
      %p209 = scmp.ne.s32.totalorder %s204, %s206
      %p210 = scmp.eq.s32.totalorder %s23, 0
      %p211 = por %p209, %p210
      %p212 = scmp.ne.s32.totalorder %s204, %s206
      %p213 = scmp.eq.s32.totalorder %s28, 1
      %p214 = por %p212, %p213
      %p215 = scmp.ne.s32.totalorder %s206, %s207
      %p216 = scmp.eq.s32.totalorder %s28, 0
      %p217 = por %p215, %p216
      %p218 = scmp.ne.s32.totalorder %s206, %s207
      %p219 = scmp.eq.s32.totalorder %s29, 1
      %p220 = por %p218, %p219
      %p222 = scmp.ne.s32.totalorder %s207, %s221
      %p223 = scmp.eq.s32.totalorder %s29, 0
      %p224 = por %p222, %p223
      %s226 = sadd.s32 %s225, 1
      %p229 = scmp.eq.s32.totalorder %s23, 1
      %p230 = scmp.ne.s32.totalorder %s225, %s227
      %p231 = scmp.eq.s32.totalorder %s23, 0
      %p232 = por %p230, %p231
      %p233 = scmp.ne.s32.totalorder %s225, %s227
      %p234 = scmp.eq.s32.totalorder %s28, 1
      %p235 = por %p233, %p234
      %p236 = scmp.ne.s32.totalorder %s227, %s228
      %p237 = scmp.eq.s32.totalorder %s28, 0
      %p238 = por %p236, %p237
      %p239 = scmp.ne.s32.totalorder %s227, %s228
      %p240 = scmp.eq.s32.totalorder %s29, 1
      %p241 = por %p239, %p240
      %p243 = scmp.ne.s32.totalorder %s228, %s242
      %p244 = scmp.eq.s32.totalorder %s29, 0
      %p245 = por %p243, %p244
      %s246 = ssub.s32 %s23, %s30
      %p247 = scmp.eq.s32.totalorder %s246, 0
      %s249 = sadd.s32 %s248, 1
      %s250 = scalar_select %p247, %s248, %s249
      %p253 = pneg %p247
      %p254 = scmp.eq.s32.totalorder %s23, 1
      %p255 = por %p253, %p254
      %p256 = scmp.ne.s32.totalorder %s248, %s251
      %p257 = scmp.eq.s32.totalorder %s23, 0
      %p258 = por %p256, %p257
      %p259 = scmp.ne.s32.totalorder %s248, %s251
      %p260 = scmp.eq.s32.totalorder %s28, 1
      %p261 = por %p259, %p260
      %p262 = scmp.ne.s32.totalorder %s251, %s252
      %p263 = scmp.eq.s32.totalorder %s28, 0
      %p264 = por %p262, %p263
      %p265 = scmp.ne.s32.totalorder %s251, %s252
      %p266 = scmp.eq.s32.totalorder %s29, 1
      %p267 = por %p265, %p266
      %p269 = scmp.ne.s32.totalorder %s252, %s268
      %p270 = scmp.eq.s32.totalorder %s29, 0
      %p271 = por %p269, %p270
      %s272 = ssub.s32 %s23, %s30
      %p273 = scmp.eq.s32.totalorder %s272, 0
      %s275 = sadd.s32 %s274, 1
      %s276 = scalar_select %p273, %s274, %s275
      %p279 = pneg %p273
      %p280 = scmp.eq.s32.totalorder %s23, 1
      %p281 = por %p279, %p280
      %p282 = scmp.ne.s32.totalorder %s274, %s277
      %p283 = scmp.eq.s32.totalorder %s23, 0
      %p284 = por %p282, %p283
      %p285 = scmp.ne.s32.totalorder %s274, %s277
      %p286 = scmp.eq.s32.totalorder %s28, 1
      %p287 = por %p285, %p286
      %p288 = scmp.ne.s32.totalorder %s277, %s278
      %p289 = scmp.eq.s32.totalorder %s28, 0
      %p290 = por %p288, %p289
      %p291 = scmp.ne.s32.totalorder %s277, %s278
      %p292 = scmp.eq.s32.totalorder %s29, 1
      %p293 = por %p291, %p292
      %p295 = scmp.ne.s32.totalorder %s278, %s294
      %p296 = scmp.eq.s32.totalorder %s29, 0
      %p297 = por %p295, %p296
      %p298 = scmp.le.s32.totalorder 1, %s23
      %p299 = scmp.lt.s32.totalorder %s23, 3
      %p300 = pnand %p298, %p299
      %p301 = pneg %p300
      // Predicated region
      $region9: #{forward_batch.1} parent=5 // pred_check
        _
      $region10: #{forward_batch.1} parent=5 // pred_check_branch
        %303 = sbr.rel (%p300) target = $region12
      $region11: #{forward_batch.1} parent=5 // pred_region
        %s304 = ssub.s32 %s23, 1
        // Predicated region
        $region13: #{forward_batch.1} parent=11 // pred_check
          %p305 = pneg %p70
        $region14: #{forward_batch.1} parent=11 // pred_check_branch
          %307 = sbr.rel (%p305) target = $region16
        $region15: #{forward_batch.1} parent=11 // pred_region
          _
        $region16: #{forward_batch.1} parent=11 // pred_fallthru
          _
        // Predicated region
        $region17: #{forward_batch.1} parent=11 // pred_check
          %p308 = pneg %p91
        $region18: #{forward_batch.1} parent=11 // pred_check_branch
          %310 = sbr.rel (%p308) target = $region20
        $region19: #{forward_batch.1} parent=11 // pred_region
          _
        $region20: #{forward_batch.1} parent=11 // pred_fallthru
          _
        // Predicated region
        $region21: #{forward_batch.1} parent=11 // pred_check
          %p311 = pneg %p112
        $region22: #{forward_batch.1} parent=11 // pred_check_branch
          %313 = sbr.rel (%p311) target = $region24
        $region23: #{forward_batch.1} parent=11 // pred_region
          _
        $region24: #{forward_batch.1} parent=11 // pred_fallthru
          _
        // Predicated region
        $region25: #{forward_batch.1} parent=11 // pred_check
          %p314 = pneg %p133
        $region26: #{forward_batch.1} parent=11 // pred_check_branch
          %316 = sbr.rel (%p314) target = $region28
        $region27: #{forward_batch.1} parent=11 // pred_region
          _
        $region28: #{forward_batch.1} parent=11 // pred_fallthru
          _
        // Predicated region
        $region29: #{forward_batch.1} parent=11 // pred_check
          %p317 = pneg %p154
        $region30: #{forward_batch.1} parent=11 // pred_check_branch
          %319 = sbr.rel (%p317) target = $region32
        $region31: #{forward_batch.1} parent=11 // pred_region
          %s321 = ssub.s32 16, 16
          %322 = vsyncadd [#allocation3], %s321
          %s324 = sshll.u32 [#allocation2], 4
          %s325 = int_to_ptr.vmem [resolvable:$true] %s324
          %327 = dma.hbm_to_vmem [thread:$0]  %s5, 16, %s325, [#allocation3]
        $region32: #{forward_batch.1} parent=11 // pred_fallthru
          _
        // Predicated region
        $region33: #{forward_batch.1} parent=11 // pred_check
          %p328 = pneg %p175
        $region34: #{forward_batch.1} parent=11 // pred_check_branch
          %330 = sbr.rel (%p328) target = $region36
        $region35: #{forward_batch.1} parent=11 // pred_region
          _
        $region36: #{forward_batch.1} parent=11 // pred_fallthru
          _
        // Predicated region
        $region37: #{forward_batch.1} parent=11 // pred_check
          %p331 = pneg %p196
        $region38: #{forward_batch.1} parent=11 // pred_check_branch
          %333 = sbr.rel (%p331) target = $region40
        $region39: #{forward_batch.1} parent=11 // pred_region
          %s335 = ssub.s32 16, 16
          %336 = vsyncadd [#allocation6], %s335
          %s338 = sshll.u32 [#allocation5], 4
          %s339 = int_to_ptr.vmem [resolvable:$true] %s338
          %341 = dma.hbm_to_vmem [thread:$0]  %s7, 16, %s339, [#allocation6]
        $region40: #{forward_batch.1} parent=11 // pred_fallthru
          _
        // Predicated region
        $region41: #{forward_batch.1} parent=11 // pred_check
          %p342 = pneg %p217
        $region42: #{forward_batch.1} parent=11 // pred_check_branch
          %344 = sbr.rel (%p342) target = $region44
        $region43: #{forward_batch.1} parent=11 // pred_region
          _
        $region44: #{forward_batch.1} parent=11 // pred_fallthru
          _
        // Predicated region
        $region45: #{forward_batch.1} parent=11 // pred_check
          %p345 = pneg %p238
        $region46: #{forward_batch.1} parent=11 // pred_check_branch
          %347 = sbr.rel (%p345) target = $region48
        $region47: #{forward_batch.1} parent=11 // pred_region
          _
        $region48: #{forward_batch.1} parent=11 // pred_fallthru
          _
      $region12: #{forward_batch.1} parent=5 // pred_fallthru
        _
      %p348 = scmp.lt.s32.totalorder %s23, 2
      // Predicated region
      $region49: #{forward_batch.1} parent=5 // pred_check
        %p349 = pneg %p348
      $region50: #{forward_batch.1} parent=5 // pred_check_branch
        %351 = sbr.rel (%p349) target = $region52
      $region51: #{forward_batch.1} parent=5 // pred_region
        // Predicated region
        $region53: #{forward_batch.1} parent=51 // pred_check
          %p352 = pneg %p43
        $region54: #{forward_batch.1} parent=51 // pred_check_branch
          %354 = sbr.rel (%p352) target = $region56
        $region55: #{forward_batch.1} parent=51 // pred_region
          %p355 = scmp.lt.s32.totalorder %s23, 1
          %s356 = scalar_select %p355, %s23, 1
          %s357 = smul.addr %s356, 8
          %s358 = scalar_lea.vmem %s0, %s357
        $region56: #{forward_batch.1} parent=51 // pred_fallthru
          _
      $region52: #{forward_batch.1} parent=5 // pred_fallthru
        _
      %p359 = scmp.le.s32.totalorder 1, %s23
      %p360 = scmp.lt.s32.totalorder %s23, 3
      %p361 = pnand %p359, %p360
      %p362 = pneg %p361
      // Predicated region
      $region57: #{forward_batch.1} parent=5 // pred_check
        _
      $region58: #{forward_batch.1} parent=5 // pred_check_branch
        %364 = sbr.rel (%p361) target = $region60
      $region59: #{forward_batch.1} parent=5 // pred_region
        %s365 = ssub.s32 %s23, 1
        // Predicated region
        $region61: #{forward_batch.1} parent=59 // pred_check
          %p366 = pneg %p154
        $region62: #{forward_batch.1} parent=59 // pred_check_branch
          %368 = sbr.rel (%p366) target = $region64
        $region63: #{forward_batch.1} parent=59 // pred_region
          %369 = dma.done [#allocation3], 16
        $region64: #{forward_batch.1} parent=59 // pred_fallthru
          _
        // Predicated region
        $region65: #{forward_batch.1} parent=59 // pred_check
          %p370 = pneg %p196
        $region66: #{forward_batch.1} parent=59 // pred_check_branch
          %372 = sbr.rel (%p370) target = $region68
        $region67: #{forward_batch.1} parent=59 // pred_region
          %373 = dma.done [#allocation6], 16
        $region68: #{forward_batch.1} parent=59 // pred_fallthru
          _
        %p374 = scmp.lt.s32.totalorder %s28, 1
        %s375 = scalar_select %p374, %s28, 1
        %s376 = smul.addr %s375, 8
        %s377 = scalar_lea.vmem %s0, %s376
        %p378 = pneg %p49
        %p379 = pneg %p46
        %p380 = pneg %p70
        %p381 = pneg %p67
        %p382 = pneg %p91
        %p383 = pneg %p88
        %p384 = pneg %p112
        %p385 = pneg %p109
        %p386 = pneg %p133
        %p387 = pneg %p130
        %p388 = pneg %p154
        %p389 = pneg %p151
        %p390 = pneg %p175
        %p391 = pneg %p172
        %p392 = pneg %p196
        %p393 = pneg %p193
        %p394 = pneg %p217
        %p395 = pneg %p214
        %p396 = pneg %p238
        %p397 = pneg %p235
        %p398 = pneg %p264
        %p399 = pneg %p261
        %p400 = scmp.lt.s32.totalorder %s28, 1
        %s401 = scalar_select %p400, %s28, 1
        %s402 = smul.addr %s401, 8
        %s403 = scalar_lea.vmem %s10, %s402
        %p404 = pneg %p290
        %p405 = pneg %p287
        %s406 = sand.u32 %s277, 1
        %s407 = scalar_lea.sflag [#allocation4], %s406
        %s408 = sand.u32 %s277, 1
        %s409 = smul.addr %s408, 8
        %s410 = scalar_lea.vmem [#allocation7], %s409
        %p411 = scmp.lt.s32.totalorder %s28, 1
        %s412 = scalar_select %p411, %s28, 1
        %s413 = smul.addr %s412, 8
        %s414 = scalar_lea.vmem %s0, %s413
        %p415 = scmp.lt.s32.totalorder %s28, 1
        %s416 = scalar_select %p415, %s28, 1
        %s417 = smul.addr %s416, 8
        %s418 = scalar_lea.vmem %s10, %s417
        %v419 = vld [vmem:[%s414] sm:$0xff]
        %v420 = vlaneseq
        %v421 = vand.u32 %v420, 127
        %422 = vset.pattern.permute.xlu0 0
        %423 = vperm.xlu0 %422, %v419
        %v424 = vpop.permute.xlu0 %423
        %vm425 = vcmp.eq.s32.totalorder %v421, %v424
        %v426 = vsel %vm425, 1, 0
        %v427 = vcvt.s32.f32 %v426
        %v428 = vld [vmem:[%s1] sm:$0xff]
        %v429 = vld [vmem:[%s1 + $0x8] sm:$0xff]
        %v430 = vld [vmem:[%s1 + $0x10] sm:$0xf]
        %v431 = vld [vmem:[%s2] sm:$0x1]
        %v433 = vlaneseq
        %v434 = vshrl.u32 %v433, 7
        %v435 = vsub.s32 0, %v434
        %v436 = vrot.slane %v431, %v435
        %vm438 = vcmask 162816
        %v440 = vsel %vm438, %v427, 0
        %vm442 = vcmask 1043456
        %v444 = vsel %vm442, %v430, 0
        %446 = vmatprep.subr.mxu0 0.0
        %447 = vmatpush1.msra.mxu0 %v428
        %448 = vmatprep.subr.mxu0 0.0
        %449 = vmatpush1.msra.mxu0 %v429
        %450 = vmatprep.subr.mxu0 0.0
        %451 = vmatpush1.msra.mxu0 %v444
        %452 = vmatprep.subr.mxu0 0.0
        %453 = vmatpush1.msra.mxu0 0.0
        %454 = vmatprep.subr.mxu0 0.0
        %455 = vmatpush1.msra.mxu0 0.0
        %456 = vmatprep.subr.mxu0 0.0
        %457 = vmatpush1.msra.mxu0 0.0
        %458 = vmatprep.subr.mxu0 0.0
        %459 = vmatpush1.msra.mxu0 0.0
        %460 = vmatprep.subr.mxu0 0.0
        %461 = vmatpush1.msra.mxu0 0.0
        %462 = vmatprep.subr.mxu0 0.0
        %463 = vmatpush1.msra.mxu0 0.0
        %464 = vmatprep.subr.mxu0 0.0
        %465 = vmatpush1.msra.mxu0 0.0
        %466 = vmatprep.subr.mxu0 0.0
        %467 = vmatpush1.msra.mxu0 0.0
        %468 = vmatprep.subr.mxu0 0.0
        %469 = vmatpush1.msra.mxu0 0.0
        %470 = vmatprep.subr.mxu0 0.0
        %471 = vmatpush1.msra.mxu0 0.0
        %472 = vmatprep.subr.mxu0 0.0
        %473 = vmatpush1.msra.mxu0 0.0
        %474 = vmatprep.subr.mxu0 0.0
        %475 = vmatpush1.msra.mxu0 0.0
        %476 = vmatprep.subr.mxu0 0.0
        %477 = vmatpush1.msra.mxu0 0.0
        %478 = vmatprep.subr.mxu0 0.0
        %479 = vmatpush1.msra.mxu0 0.0
        %480 = vmatprep.subr.mxu0 0.0
        %481 = vmatpush1.msra.mxu0 0.0
        %482 = vmatprep.subr.mxu0 0.0
        %483 = vmatpush1.msra.mxu0 0.0
        %484 = vmatprep.subr.mxu0 0.0
        %485 = vmatpush1.msra.mxu0 0.0
        %486 = vmatprep.subr.mxu0 0.0
        %487 = vmatpush1.msra.mxu0 0.0
        %488 = vmatprep.subr.mxu0 0.0
        %489 = vmatpush1.msra.mxu0 0.0
        %490 = vmatprep.subr.mxu0 0.0
        %491 = vmatpush1.msra.mxu0 0.0
        %492 = vmatprep.subr.mxu0 0.0
        %493 = vmatpush1.msra.mxu0 0.0
        %494 = vmatprep.subr.mxu0 0.0
        %495 = vmatpush1.msra.mxu0 0.0
        %496 = vmatprep.subr.mxu0 0.0
        %497 = vmatpush1.msra.mxu0 0.0
        %498 = vmatprep.subr.mxu0 0.0
        %499 = vmatpush1.msra.mxu0 0.0
        %500 = vmatprep.subr.mxu0 0.0
        %501 = vmatpush1.msra.mxu0 0.0
        %502 = vmatprep.subr.mxu0 0.0
        %503 = vmatpush1.msra.mxu0 0.0
        %504 = vmatprep.subr.mxu0 0.0
        %505 = vmatpush1.msra.mxu0 0.0
        %506 = vmatprep.subr.mxu0 0.0
        %507 = vmatpush1.msra.mxu0 0.0
        %508 = vmatprep.subr.mxu0 0.0
        %509 = vmatpush1.msra.mxu0 0.0
        %510 = vmatprep.mubr.f32.mxu0 0.0
        %511 = vmatmul.mubr.f32.gmra.mrb[0].mxu0 %v440
        %v512 = vpop.f32.mrb[0].mxu0
        %v513 = vadd.f32 %v436, %v512
        %v514 = vpop.f32.mrb[0].mxu0
        %515 = vdwg.mxu0
        %vm516 = vcmp.lt.s32.totalorder %v421, 0
        %v517 = vsub.s32 0, %v421
        %v518 = vsel %vm516, %v517, %v421
        %v519 = vshrl.u32 %v518, 5
        %v520 = vand.u32 %v518, 31
        %v521 = vsub.s32 0, %v520
        %v522 = vsel %vm516, %v521, %v520
        %vm523 = vcmp.ne.s32.totalorder %v522, 0
        %vm524 = vcmp.lt.s32.totalorder %v522, 0
        %vm525 = vmand %vm524, %vm523
        %v526 = vadd.s32 %v522, 32
        %v527 = vsel %vm525, %v526, %v522
        %vm528 = vcmp.lt.s32.totalorder %v527, 16
        %vm529 = vcmp.lt.s32.totalorder %v421, 16
        %v530 = vld [vmem:[%s3] sm:$0xff]
        %v531 = vld [vmem:[%s3 + $0x8] sm:$0xff]
        %v532 = vld [vmem:[%s3 + $0x10] sm:$0xff]
        %v533 = vld [vmem:[%s3 + $0x18] sm:$0xff]
        %v534 = vld [vmem:[%s4] sm:$0x1]
        %v535 = vld [vmem:[#allocation2] sm:$0x1]
        %v537 = vrot.slane %v513, 7
        %v539 = vsel %vm528, %v513, %v537
        %vm540 = vcmask 261120
        %v542 = vsel %vm540, %v534, 0
        %544 = vmatprep.subr.mxu0 0.0
        %545 = vmatpush1.msra.mxu0 %v530
        %546 = vmatprep.subr.mxu0 0.0
        %547 = vmatpush1.msra.mxu0 %v531
        %548 = vmatprep.subr.mxu0 0.0
        %549 = vmatpush1.msra.mxu0 %v532
        %550 = vmatprep.subr.mxu0 0.0
        %551 = vmatpush1.msra.mxu0 %v533
        %552 = vmatprep.subr.mxu0 0.0
        %553 = vmatpush1.msra.mxu0 0.0
        %554 = vmatprep.subr.mxu0 0.0
        %555 = vmatpush1.msra.mxu0 0.0
        %556 = vmatprep.subr.mxu0 0.0
        %557 = vmatpush1.msra.mxu0 0.0
        %558 = vmatprep.subr.mxu0 0.0
        %559 = vmatpush1.msra.mxu0 0.0
        %560 = vmatprep.subr.mxu0 0.0
        %561 = vmatpush1.msra.mxu0 0.0
        %562 = vmatprep.subr.mxu0 0.0
        %563 = vmatpush1.msra.mxu0 0.0
        %564 = vmatprep.subr.mxu0 0.0
        %565 = vmatpush1.msra.mxu0 0.0
        %566 = vmatprep.subr.mxu0 0.0
        %567 = vmatpush1.msra.mxu0 0.0
        %568 = vmatprep.subr.mxu0 0.0
        %569 = vmatpush1.msra.mxu0 0.0
        %570 = vmatprep.subr.mxu0 0.0
        %571 = vmatpush1.msra.mxu0 0.0
        %572 = vmatprep.subr.mxu0 0.0
        %573 = vmatpush1.msra.mxu0 0.0
        %574 = vmatprep.subr.mxu0 0.0
        %575 = vmatpush1.msra.mxu0 0.0
        %576 = vmatprep.subr.mxu0 0.0
        %577 = vmatpush1.msra.mxu0 0.0
        %578 = vmatprep.subr.mxu0 0.0
        %579 = vmatpush1.msra.mxu0 0.0
        %580 = vmatprep.subr.mxu0 0.0
        %581 = vmatpush1.msra.mxu0 0.0
        %582 = vmatprep.subr.mxu0 0.0
        %583 = vmatpush1.msra.mxu0 0.0
        %584 = vmatprep.subr.mxu0 0.0
        %585 = vmatpush1.msra.mxu0 0.0
        %586 = vmatprep.subr.mxu0 0.0
        %587 = vmatpush1.msra.mxu0 0.0
        %588 = vmatprep.subr.mxu0 0.0
        %589 = vmatpush1.msra.mxu0 0.0
        %590 = vmatprep.subr.mxu0 0.0
        %591 = vmatpush1.msra.mxu0 0.0
        %592 = vmatprep.subr.mxu0 0.0
        %593 = vmatpush1.msra.mxu0 0.0
        %594 = vmatprep.subr.mxu0 0.0
        %595 = vmatpush1.msra.mxu0 0.0
        %596 = vmatprep.subr.mxu0 0.0
        %597 = vmatpush1.msra.mxu0 0.0
        %598 = vmatprep.subr.mxu0 0.0
        %599 = vmatpush1.msra.mxu0 0.0
        %600 = vmatprep.subr.mxu0 0.0
        %601 = vmatpush1.msra.mxu0 0.0
        %602 = vmatprep.subr.mxu0 0.0
        %603 = vmatpush1.msra.mxu0 0.0
        %604 = vmatprep.subr.mxu0 0.0
        %605 = vmatpush1.msra.mxu0 0.0
        %606 = vmatprep.subr.mxu0 0.0
        %607 = vmatpush1.msra.mxu0 0.0
        %608 = vmatprep.mubr.f32.mxu0 0.0
        %609 = vmatmul.mubr.f32.gmra.mrb[0].mxu0 %v542
        %v610 = vpop.f32.mrb[0].mxu0
        %v611 = vadd.f32 0.0, %v610
        %v612 = vpop.f32.mrb[0].mxu0
        %613 = vdwg.mxu0
        %v614 = vadd.f32 %v539, %v611
        %v615 = vmul.f32 %v614, 0.5
        %v616 = vtanh.pop %v615
        %v617 = vadd.f32 %v616, 1.0
        %v618 = vmul.f32 %v617, 0.5
        %v619 = vtanh.pop %v614
        %v621 = vlaneseq
        %v622 = vshrl.u32 %v621, 7
        %v623 = vsub.s32 0, %v622
        %v624 = vrot.slane %v535, %v623
        %625 = vrot.lane.b32.xlu0 %v624, 32
        %v626 = vpop.permute.xlu0 %625
        %v628 = vmul.f32 %v618, %v626
        %630 = vrot.lane.b32.xlu0 %v619, 64
        %v631 = vpop.permute.xlu0 %630
        %v633 = vmul.f32 %v618, %v631
        %635 = vrot.lane.b32.xlu0 %v633, 32
        %v636 = vpop.permute.xlu0 %635
        %v638 = vadd.f32 %v628, %v636
        %v639 = vtanh.pop %v638
        %641 = vrot.lane.b32.xlu0 %v639, 64
        %v642 = vpop.permute.xlu0 %641
        %v644 = vmul.f32 %v618, %v642
        %v645 = vrot.slane %v513, 5
        %v647 = vsel %vm528, %v513, %v645
        %649 = vrot.lane.b32.xlu0 %v644, 32
        %v650 = vpop.permute.xlu0 %649
        %v651 = vsel %vm540, %v650, 0
        %653 = vmatprep.subr.mxu0 0.0
        %654 = vmatpush1.msra.mxu0 %v530
        %655 = vmatprep.subr.mxu0 0.0
        %656 = vmatpush1.msra.mxu0 %v531
        %657 = vmatprep.subr.mxu0 0.0
        %658 = vmatpush1.msra.mxu0 %v532
        %659 = vmatprep.subr.mxu0 0.0
        %660 = vmatpush1.msra.mxu0 %v533
        %661 = vmatprep.subr.mxu0 0.0
        %662 = vmatpush1.msra.mxu0 0.0
        %663 = vmatprep.subr.mxu0 0.0
        %664 = vmatpush1.msra.mxu0 0.0
        %665 = vmatprep.subr.mxu0 0.0
        %666 = vmatpush1.msra.mxu0 0.0
        %667 = vmatprep.subr.mxu0 0.0
        %668 = vmatpush1.msra.mxu0 0.0
        %669 = vmatprep.subr.mxu0 0.0
        %670 = vmatpush1.msra.mxu0 0.0
        %671 = vmatprep.subr.mxu0 0.0
        %672 = vmatpush1.msra.mxu0 0.0
        %673 = vmatprep.subr.mxu0 0.0
        %674 = vmatpush1.msra.mxu0 0.0
        %675 = vmatprep.subr.mxu0 0.0
        %676 = vmatpush1.msra.mxu0 0.0
        %677 = vmatprep.subr.mxu0 0.0
        %678 = vmatpush1.msra.mxu0 0.0
        %679 = vmatprep.subr.mxu0 0.0
        %680 = vmatpush1.msra.mxu0 0.0
        %681 = vmatprep.subr.mxu0 0.0
        %682 = vmatpush1.msra.mxu0 0.0
        %683 = vmatprep.subr.mxu0 0.0
        %684 = vmatpush1.msra.mxu0 0.0
        %685 = vmatprep.subr.mxu0 0.0
        %686 = vmatpush1.msra.mxu0 0.0
        %687 = vmatprep.subr.mxu0 0.0
        %688 = vmatpush1.msra.mxu0 0.0
        %689 = vmatprep.subr.mxu0 0.0
        %690 = vmatpush1.msra.mxu0 0.0
        %691 = vmatprep.subr.mxu0 0.0
        %692 = vmatpush1.msra.mxu0 0.0
        %693 = vmatprep.subr.mxu0 0.0
        %694 = vmatpush1.msra.mxu0 0.0
        %695 = vmatprep.subr.mxu0 0.0
        %696 = vmatpush1.msra.mxu0 0.0
        %697 = vmatprep.subr.mxu0 0.0
        %698 = vmatpush1.msra.mxu0 0.0
        %699 = vmatprep.subr.mxu0 0.0
        %700 = vmatpush1.msra.mxu0 0.0
        %701 = vmatprep.subr.mxu0 0.0
        %702 = vmatpush1.msra.mxu0 0.0
        %703 = vmatprep.subr.mxu0 0.0
        %704 = vmatpush1.msra.mxu0 0.0
        %705 = vmatprep.subr.mxu0 0.0
        %706 = vmatpush1.msra.mxu0 0.0
        %707 = vmatprep.subr.mxu0 0.0
        %708 = vmatpush1.msra.mxu0 0.0
        %709 = vmatprep.subr.mxu0 0.0
        %710 = vmatpush1.msra.mxu0 0.0
        %711 = vmatprep.subr.mxu0 0.0
        %712 = vmatpush1.msra.mxu0 0.0
        %713 = vmatprep.subr.mxu0 0.0
        %714 = vmatpush1.msra.mxu0 0.0
        %715 = vmatprep.subr.mxu0 0.0
        %716 = vmatpush1.msra.mxu0 0.0
        %717 = vmatprep.mubr.f32.mxu0 0.0
        %718 = vmatmul.mubr.f32.gmra.mrb[0].mxu0 %v651
        %v719 = vpop.f32.mrb[0].mxu0
        %v720 = vadd.f32 0.0, %v719
        %v721 = vpop.f32.mrb[0].mxu0
        %722 = vdwg.mxu0
        %v724 = vrot.slane %v720, 7
        %v726 = vadd.f32 %v647, %v724
        %v727 = vmul.f32 %v726, 0.5
        %v728 = vtanh.pop %v727
        %v729 = vadd.f32 %v728, 1.0
        %v730 = vmul.f32 %v729, 0.5
        %v731 = vtanh.pop %v726
        %v733 = vrot.slane %v638, 7
        %v735 = vmul.f32 %v730, %v733
        %737 = vrot.lane.b32.xlu0 %v731, 64
        %v738 = vpop.permute.xlu0 %737
        %v740 = vmul.f32 %v730, %v738
        %742 = vrot.lane.b32.xlu0 %v740, 32
        %v743 = vpop.permute.xlu0 %742
        %v745 = vadd.f32 %v735, %v743
        %v746 = vtanh.pop %v745
        %748 = vrot.lane.b32.xlu0 %v746, 64
        %v749 = vpop.permute.xlu0 %748
        %v751 = vmul.f32 %v730, %v749
        %v752 = vrot.slane %v513, 3
        %v754 = vsel %vm528, %v513, %v752
        %v756 = vrot.slane %v751, 1
        %757 = vrot.lane.b32.xlu0 %v756, 32
        %v758 = vpop.permute.xlu0 %757
        %v759 = vsel %vm540, %v758, 0
        %761 = vmatprep.subr.mxu0 0.0
        %762 = vmatpush1.msra.mxu0 %v530
        %763 = vmatprep.subr.mxu0 0.0
        %764 = vmatpush1.msra.mxu0 %v531
        %765 = vmatprep.subr.mxu0 0.0
        %766 = vmatpush1.msra.mxu0 %v532
        %767 = vmatprep.subr.mxu0 0.0
        %768 = vmatpush1.msra.mxu0 %v533
        %769 = vmatprep.subr.mxu0 0.0
        %770 = vmatpush1.msra.mxu0 0.0
        %771 = vmatprep.subr.mxu0 0.0
        %772 = vmatpush1.msra.mxu0 0.0
        %773 = vmatprep.subr.mxu0 0.0
        %774 = vmatpush1.msra.mxu0 0.0
        %775 = vmatprep.subr.mxu0 0.0
        %776 = vmatpush1.msra.mxu0 0.0
        %777 = vmatprep.subr.mxu0 0.0
        %778 = vmatpush1.msra.mxu0 0.0
        %779 = vmatprep.subr.mxu0 0.0
        %780 = vmatpush1.msra.mxu0 0.0
        %781 = vmatprep.subr.mxu0 0.0
        %782 = vmatpush1.msra.mxu0 0.0
        %783 = vmatprep.subr.mxu0 0.0
        %784 = vmatpush1.msra.mxu0 0.0
        %785 = vmatprep.subr.mxu0 0.0
        %786 = vmatpush1.msra.mxu0 0.0
        %787 = vmatprep.subr.mxu0 0.0
        %788 = vmatpush1.msra.mxu0 0.0
        %789 = vmatprep.subr.mxu0 0.0
        %790 = vmatpush1.msra.mxu0 0.0
        %791 = vmatprep.subr.mxu0 0.0
        %792 = vmatpush1.msra.mxu0 0.0
        %793 = vmatprep.subr.mxu0 0.0
        %794 = vmatpush1.msra.mxu0 0.0
        %795 = vmatprep.subr.mxu0 0.0
        %796 = vmatpush1.msra.mxu0 0.0
        %797 = vmatprep.subr.mxu0 0.0
        %798 = vmatpush1.msra.mxu0 0.0
        %799 = vmatprep.subr.mxu0 0.0
        %800 = vmatpush1.msra.mxu0 0.0
        %801 = vmatprep.subr.mxu0 0.0
        %802 = vmatpush1.msra.mxu0 0.0
        %803 = vmatprep.subr.mxu0 0.0
        %804 = vmatpush1.msra.mxu0 0.0
        %805 = vmatprep.subr.mxu0 0.0
        %806 = vmatpush1.msra.mxu0 0.0
        %807 = vmatprep.subr.mxu0 0.0
        %808 = vmatpush1.msra.mxu0 0.0
        %809 = vmatprep.subr.mxu0 0.0
        %810 = vmatpush1.msra.mxu0 0.0
        %811 = vmatprep.subr.mxu0 0.0
        %812 = vmatpush1.msra.mxu0 0.0
        %813 = vmatprep.subr.mxu0 0.0
        %814 = vmatpush1.msra.mxu0 0.0
        %815 = vmatprep.subr.mxu0 0.0
        %816 = vmatpush1.msra.mxu0 0.0
        %817 = vmatprep.subr.mxu0 0.0
        %818 = vmatpush1.msra.mxu0 0.0
        %819 = vmatprep.subr.mxu0 0.0
        %820 = vmatpush1.msra.mxu0 0.0
        %821 = vmatprep.subr.mxu0 0.0
        %822 = vmatpush1.msra.mxu0 0.0
        %823 = vmatprep.subr.mxu0 0.0
        %824 = vmatpush1.msra.mxu0 0.0
        %825 = vmatprep.mubr.f32.mxu0 0.0
        %826 = vmatmul.mubr.f32.gmra.mrb[0].mxu0 %v759
        %v827 = vpop.f32.mrb[0].mxu0
        %v828 = vadd.f32 0.0, %v827
        %v829 = vpop.f32.mrb[0].mxu0
        %830 = vdwg.mxu0
        %v832 = vrot.slane %v828, 6
        %v834 = vadd.f32 %v754, %v832
        %v835 = vmul.f32 %v834, 0.5
        %v836 = vtanh.pop %v835
        %v837 = vadd.f32 %v836, 1.0
        %v838 = vmul.f32 %v837, 0.5
        %v839 = vtanh.pop %v834
        %v841 = vrot.slane %v745, 7
        %v843 = vmul.f32 %v838, %v841
        %845 = vrot.lane.b32.xlu0 %v839, 64
        %v846 = vpop.permute.xlu0 %845
        %v848 = vmul.f32 %v838, %v846
        %850 = vrot.lane.b32.xlu0 %v848, 32
        %v851 = vpop.permute.xlu0 %850
        %v853 = vadd.f32 %v843, %v851
        %v854 = vtanh.pop %v853
        %856 = vrot.lane.b32.xlu0 %v854, 64
        %v857 = vpop.permute.xlu0 %856
        %v859 = vmul.f32 %v838, %v857
        %v860 = vrot.slane %v513, 1
        %v862 = vsel %vm528, %v513, %v860
        %v864 = vrot.slane %v859, 2
        %865 = vrot.lane.b32.xlu0 %v864, 32
        %v866 = vpop.permute.xlu0 %865
        %v867 = vsel %vm540, %v866, 0
        %869 = vmatprep.subr.mxu0 0.0
        %870 = vmatpush1.msra.mxu0 %v530
        %871 = vmatprep.subr.mxu0 0.0
        %872 = vmatpush1.msra.mxu0 %v531
        %873 = vmatprep.subr.mxu0 0.0
        %874 = vmatpush1.msra.mxu0 %v532
        %875 = vmatprep.subr.mxu0 0.0
        %876 = vmatpush1.msra.mxu0 %v533
        %877 = vmatprep.subr.mxu0 0.0
        %878 = vmatpush1.msra.mxu0 0.0
        %879 = vmatprep.subr.mxu0 0.0
        %880 = vmatpush1.msra.mxu0 0.0
        %881 = vmatprep.subr.mxu0 0.0
        %882 = vmatpush1.msra.mxu0 0.0
        %883 = vmatprep.subr.mxu0 0.0
        %884 = vmatpush1.msra.mxu0 0.0
        %885 = vmatprep.subr.mxu0 0.0
        %886 = vmatpush1.msra.mxu0 0.0
        %887 = vmatprep.subr.mxu0 0.0
        %888 = vmatpush1.msra.mxu0 0.0
        %889 = vmatprep.subr.mxu0 0.0
        %890 = vmatpush1.msra.mxu0 0.0
        %891 = vmatprep.subr.mxu0 0.0
        %892 = vmatpush1.msra.mxu0 0.0
        %893 = vmatprep.subr.mxu0 0.0
        %894 = vmatpush1.msra.mxu0 0.0
        %895 = vmatprep.subr.mxu0 0.0
        %896 = vmatpush1.msra.mxu0 0.0
        %897 = vmatprep.subr.mxu0 0.0
        %898 = vmatpush1.msra.mxu0 0.0
        %899 = vmatprep.subr.mxu0 0.0
        %900 = vmatpush1.msra.mxu0 0.0
        %901 = vmatprep.subr.mxu0 0.0
        %902 = vmatpush1.msra.mxu0 0.0
        %903 = vmatprep.subr.mxu0 0.0
        %904 = vmatpush1.msra.mxu0 0.0
        %905 = vmatprep.subr.mxu0 0.0
        %906 = vmatpush1.msra.mxu0 0.0
        %907 = vmatprep.subr.mxu0 0.0
        %908 = vmatpush1.msra.mxu0 0.0
        %909 = vmatprep.subr.mxu0 0.0
        %910 = vmatpush1.msra.mxu0 0.0
        %911 = vmatprep.subr.mxu0 0.0
        %912 = vmatpush1.msra.mxu0 0.0
        %913 = vmatprep.subr.mxu0 0.0
        %914 = vmatpush1.msra.mxu0 0.0
        %915 = vmatprep.subr.mxu0 0.0
        %916 = vmatpush1.msra.mxu0 0.0
        %917 = vmatprep.subr.mxu0 0.0
        %918 = vmatpush1.msra.mxu0 0.0
        %919 = vmatprep.subr.mxu0 0.0
        %920 = vmatpush1.msra.mxu0 0.0
        %921 = vmatprep.subr.mxu0 0.0
        %922 = vmatpush1.msra.mxu0 0.0
        %923 = vmatprep.subr.mxu0 0.0
        %924 = vmatpush1.msra.mxu0 0.0
        %925 = vmatprep.subr.mxu0 0.0
        %926 = vmatpush1.msra.mxu0 0.0
        %927 = vmatprep.subr.mxu0 0.0
        %928 = vmatpush1.msra.mxu0 0.0
        %929 = vmatprep.subr.mxu0 0.0
        %930 = vmatpush1.msra.mxu0 0.0
        %931 = vmatprep.subr.mxu0 0.0
        %932 = vmatpush1.msra.mxu0 0.0
        %933 = vmatprep.mubr.f32.mxu0 0.0
        %934 = vmatmul.mubr.f32.gmra.mrb[0].mxu0 %v867
        %v935 = vpop.f32.mrb[0].mxu0
        %v936 = vadd.f32 0.0, %v935
        %v937 = vpop.f32.mrb[0].mxu0
        %938 = vdwg.mxu0
        %v940 = vrot.slane %v936, 5
        %v942 = vadd.f32 %v862, %v940
        %v943 = vmul.f32 %v942, 0.5
        %v944 = vtanh.pop %v943
        %v945 = vadd.f32 %v944, 1.0
        %v946 = vmul.f32 %v945, 0.5
        %v947 = vtanh.pop %v942
        %v949 = vrot.slane %v853, 7
        %v951 = vmul.f32 %v946, %v949
        %953 = vrot.lane.b32.xlu0 %v947, 64
        %v954 = vpop.permute.xlu0 %953
        %v956 = vmul.f32 %v946, %v954
        %958 = vrot.lane.b32.xlu0 %v956, 32
        %v959 = vpop.permute.xlu0 %958
        %v961 = vadd.f32 %v951, %v959
        %v962 = vtanh.pop %v961
        %964 = vrot.lane.b32.xlu0 %v962, 64
        %v965 = vpop.permute.xlu0 %964
        %v967 = vmul.f32 %v946, %v965
        %v969 = vrot.slane %v967, 3
        %970 = vrot.lane.b32.xlu0 %v969, 32
        %v971 = vpop.permute.xlu0 %970
        %v972 = vsel %vm540, %v971, 0
        %974 = vmatprep.subr.mxu0 0.0
        %975 = vmatpush1.msra.mxu0 %v530
        %976 = vmatprep.subr.mxu0 0.0
        %977 = vmatpush1.msra.mxu0 %v531
        %978 = vmatprep.subr.mxu0 0.0
        %979 = vmatpush1.msra.mxu0 %v532
        %980 = vmatprep.subr.mxu0 0.0
        %981 = vmatpush1.msra.mxu0 %v533
        %982 = vmatprep.subr.mxu0 0.0
        %983 = vmatpush1.msra.mxu0 0.0
        %984 = vmatprep.subr.mxu0 0.0
        %985 = vmatpush1.msra.mxu0 0.0
        %986 = vmatprep.subr.mxu0 0.0
        %987 = vmatpush1.msra.mxu0 0.0
        %988 = vmatprep.subr.mxu0 0.0
        %989 = vmatpush1.msra.mxu0 0.0
        %990 = vmatprep.subr.mxu0 0.0
        %991 = vmatpush1.msra.mxu0 0.0
        %992 = vmatprep.subr.mxu0 0.0
        %993 = vmatpush1.msra.mxu0 0.0
        %994 = vmatprep.subr.mxu0 0.0
        %995 = vmatpush1.msra.mxu0 0.0
        %996 = vmatprep.subr.mxu0 0.0
        %997 = vmatpush1.msra.mxu0 0.0
        %998 = vmatprep.subr.mxu0 0.0
        %999 = vmatpush1.msra.mxu0 0.0
        %1000 = vmatprep.subr.mxu0 0.0
        %1001 = vmatpush1.msra.mxu0 0.0
        %1002 = vmatprep.subr.mxu0 0.0
        %1003 = vmatpush1.msra.mxu0 0.0
        %1004 = vmatprep.subr.mxu0 0.0
        %1005 = vmatpush1.msra.mxu0 0.0
        %1006 = vmatprep.subr.mxu0 0.0
        %1007 = vmatpush1.msra.mxu0 0.0
        %1008 = vmatprep.subr.mxu0 0.0
        %1009 = vmatpush1.msra.mxu0 0.0
        %1010 = vmatprep.subr.mxu0 0.0
        %1011 = vmatpush1.msra.mxu0 0.0
        %1012 = vmatprep.subr.mxu0 0.0
        %1013 = vmatpush1.msra.mxu0 0.0
        %1014 = vmatprep.subr.mxu0 0.0
        %1015 = vmatpush1.msra.mxu0 0.0
        %1016 = vmatprep.subr.mxu0 0.0
        %1017 = vmatpush1.msra.mxu0 0.0
        %1018 = vmatprep.subr.mxu0 0.0
        %1019 = vmatpush1.msra.mxu0 0.0
        %1020 = vmatprep.subr.mxu0 0.0
        %1021 = vmatpush1.msra.mxu0 0.0
        %1022 = vmatprep.subr.mxu0 0.0
        %1023 = vmatpush1.msra.mxu0 0.0
        %1024 = vmatprep.subr.mxu0 0.0
        %1025 = vmatpush1.msra.mxu0 0.0
        %1026 = vmatprep.subr.mxu0 0.0
        %1027 = vmatpush1.msra.mxu0 0.0
        %1028 = vmatprep.subr.mxu0 0.0
        %1029 = vmatpush1.msra.mxu0 0.0
        %1030 = vmatprep.subr.mxu0 0.0
        %1031 = vmatpush1.msra.mxu0 0.0
        %1032 = vmatprep.subr.mxu0 0.0
        %1033 = vmatpush1.msra.mxu0 0.0
        %1034 = vmatprep.subr.mxu0 0.0
        %1035 = vmatpush1.msra.mxu0 0.0
        %1036 = vmatprep.subr.mxu0 0.0
        %1037 = vmatpush1.msra.mxu0 0.0
        %1038 = vmatprep.mubr.f32.mxu0 0.0
        %1039 = vmatmul.mubr.f32.gmra.mrb[0].mxu0 %v972
        %v1040 = vpop.f32.mrb[0].mxu0
        %v1041 = vadd.f32 0.0, %v1040
        %v1042 = vpop.f32.mrb[0].mxu0
        %1043 = vdwg.mxu0
        %v1045 = vrot.slane %v1041, 4
        %v1047 = vadd.f32 %v539, %v1045
        %v1048 = vmul.f32 %v1047, 0.5
        %v1049 = vtanh.pop %v1048
        %v1050 = vadd.f32 %v1049, 1.0
        %v1051 = vmul.f32 %v1050, 0.5
        %v1052 = vtanh.pop %v1047
        %v1054 = vrot.slane %v961, 7
        %v1056 = vmul.f32 %v1051, %v1054
        %1058 = vrot.lane.b32.xlu0 %v1052, 64
        %v1059 = vpop.permute.xlu0 %1058
        %v1061 = vmul.f32 %v1051, %v1059
        %1063 = vrot.lane.b32.xlu0 %v1061, 32
        %v1064 = vpop.permute.xlu0 %1063
        %v1066 = vadd.f32 %v1056, %v1064
        %v1067 = vtanh.pop %v1066
        %1069 = vrot.lane.b32.xlu0 %v1067, 64
        %v1070 = vpop.permute.xlu0 %1069
        %v1072 = vmul.f32 %v1051, %v1070
        %v1074 = vrot.slane %v1072, 4
        %1075 = vrot.lane.b32.xlu0 %v1074, 32
        %v1076 = vpop.permute.xlu0 %1075
        %v1077 = vsel %vm540, %v1076, 0
        %1079 = vmatprep.subr.mxu0 0.0
        %1080 = vmatpush1.msra.mxu0 %v530
        %1081 = vmatprep.subr.mxu0 0.0
        %1082 = vmatpush1.msra.mxu0 %v531
        %1083 = vmatprep.subr.mxu0 0.0
        %1084 = vmatpush1.msra.mxu0 %v532
        %1085 = vmatprep.subr.mxu0 0.0
        %1086 = vmatpush1.msra.mxu0 %v533
        %1087 = vmatprep.subr.mxu0 0.0
        %1088 = vmatpush1.msra.mxu0 0.0
        %1089 = vmatprep.subr.mxu0 0.0
        %1090 = vmatpush1.msra.mxu0 0.0
        %1091 = vmatprep.subr.mxu0 0.0
        %1092 = vmatpush1.msra.mxu0 0.0
        %1093 = vmatprep.subr.mxu0 0.0
        %1094 = vmatpush1.msra.mxu0 0.0
        %1095 = vmatprep.subr.mxu0 0.0
        %1096 = vmatpush1.msra.mxu0 0.0
        %1097 = vmatprep.subr.mxu0 0.0
        %1098 = vmatpush1.msra.mxu0 0.0
        %1099 = vmatprep.subr.mxu0 0.0
        %1100 = vmatpush1.msra.mxu0 0.0
        %1101 = vmatprep.subr.mxu0 0.0
        %1102 = vmatpush1.msra.mxu0 0.0
        %1103 = vmatprep.subr.mxu0 0.0
        %1104 = vmatpush1.msra.mxu0 0.0
        %1105 = vmatprep.subr.mxu0 0.0
        %1106 = vmatpush1.msra.mxu0 0.0
        %1107 = vmatprep.subr.mxu0 0.0
        %1108 = vmatpush1.msra.mxu0 0.0
        %1109 = vmatprep.subr.mxu0 0.0
        %1110 = vmatpush1.msra.mxu0 0.0
        %1111 = vmatprep.subr.mxu0 0.0
        %1112 = vmatpush1.msra.mxu0 0.0
        %1113 = vmatprep.subr.mxu0 0.0
        %1114 = vmatpush1.msra.mxu0 0.0
        %1115 = vmatprep.subr.mxu0 0.0
        %1116 = vmatpush1.msra.mxu0 0.0
        %1117 = vmatprep.subr.mxu0 0.0
        %1118 = vmatpush1.msra.mxu0 0.0
        %1119 = vmatprep.subr.mxu0 0.0
        %1120 = vmatpush1.msra.mxu0 0.0
        %1121 = vmatprep.subr.mxu0 0.0
        %1122 = vmatpush1.msra.mxu0 0.0
        %1123 = vmatprep.subr.mxu0 0.0
        %1124 = vmatpush1.msra.mxu0 0.0
        %1125 = vmatprep.subr.mxu0 0.0
        %1126 = vmatpush1.msra.mxu0 0.0
        %1127 = vmatprep.subr.mxu0 0.0
        %1128 = vmatpush1.msra.mxu0 0.0
        %1129 = vmatprep.subr.mxu0 0.0
        %1130 = vmatpush1.msra.mxu0 0.0
        %1131 = vmatprep.subr.mxu0 0.0
        %1132 = vmatpush1.msra.mxu0 0.0
        %1133 = vmatprep.subr.mxu0 0.0
        %1134 = vmatpush1.msra.mxu0 0.0
        %1135 = vmatprep.subr.mxu0 0.0
        %1136 = vmatpush1.msra.mxu0 0.0
        %1137 = vmatprep.subr.mxu0 0.0
        %1138 = vmatpush1.msra.mxu0 0.0
        %1139 = vmatprep.subr.mxu0 0.0
        %1140 = vmatpush1.msra.mxu0 0.0
        %1141 = vmatprep.subr.mxu0 0.0
        %1142 = vmatpush1.msra.mxu0 0.0
        %1143 = vmatprep.mubr.f32.mxu0 0.0
        %1144 = vmatmul.mubr.f32.gmra.mrb[0].mxu0 %v1077
        %v1145 = vpop.f32.mrb[0].mxu0
        %v1146 = vadd.f32 0.0, %v1145
        %v1147 = vpop.f32.mrb[0].mxu0
        %1148 = vdwg.mxu0
        %v1150 = vrot.slane %v1146, 3
        %v1152 = vadd.f32 %v647, %v1150
        %v1153 = vmul.f32 %v1152, 0.5
        %v1154 = vtanh.pop %v1153
        %v1155 = vadd.f32 %v1154, 1.0
        %v1156 = vmul.f32 %v1155, 0.5
        %v1157 = vtanh.pop %v1152
        %v1159 = vrot.slane %v1066, 7
        %v1161 = vmul.f32 %v1156, %v1159
        %1163 = vrot.lane.b32.xlu0 %v1157, 64
        %v1164 = vpop.permute.xlu0 %1163
        %v1166 = vmul.f32 %v1156, %v1164
        %1168 = vrot.lane.b32.xlu0 %v1166, 32
        %v1169 = vpop.permute.xlu0 %1168
        %v1171 = vadd.f32 %v1161, %v1169
        %v1172 = vtanh.pop %v1171
        %1174 = vrot.lane.b32.xlu0 %v1172, 64
        %v1175 = vpop.permute.xlu0 %1174
        %v1177 = vmul.f32 %v1156, %v1175
        %v1179 = vrot.slane %v1177, 5
        %1180 = vrot.lane.b32.xlu0 %v1179, 32
        %v1181 = vpop.permute.xlu0 %1180
        %v1182 = vsel %vm540, %v1181, 0
        %1184 = vmatprep.subr.mxu0 0.0
        %1185 = vmatpush1.msra.mxu0 %v530
        %1186 = vmatprep.subr.mxu0 0.0
        %1187 = vmatpush1.msra.mxu0 %v531
        %1188 = vmatprep.subr.mxu0 0.0
        %1189 = vmatpush1.msra.mxu0 %v532
        %1190 = vmatprep.subr.mxu0 0.0
        %1191 = vmatpush1.msra.mxu0 %v533
        %1192 = vmatprep.subr.mxu0 0.0
        %1193 = vmatpush1.msra.mxu0 0.0
        %1194 = vmatprep.subr.mxu0 0.0
        %1195 = vmatpush1.msra.mxu0 0.0
        %1196 = vmatprep.subr.mxu0 0.0
        %1197 = vmatpush1.msra.mxu0 0.0
        %1198 = vmatprep.subr.mxu0 0.0
        %1199 = vmatpush1.msra.mxu0 0.0
        %1200 = vmatprep.subr.mxu0 0.0
        %1201 = vmatpush1.msra.mxu0 0.0
        %1202 = vmatprep.subr.mxu0 0.0
        %1203 = vmatpush1.msra.mxu0 0.0
        %1204 = vmatprep.subr.mxu0 0.0
        %1205 = vmatpush1.msra.mxu0 0.0
        %1206 = vmatprep.subr.mxu0 0.0
        %1207 = vmatpush1.msra.mxu0 0.0
        %1208 = vmatprep.subr.mxu0 0.0
        %1209 = vmatpush1.msra.mxu0 0.0
        %1210 = vmatprep.subr.mxu0 0.0
        %1211 = vmatpush1.msra.mxu0 0.0
        %1212 = vmatprep.subr.mxu0 0.0
        %1213 = vmatpush1.msra.mxu0 0.0
        %1214 = vmatprep.subr.mxu0 0.0
        %1215 = vmatpush1.msra.mxu0 0.0
        %1216 = vmatprep.subr.mxu0 0.0
        %1217 = vmatpush1.msra.mxu0 0.0
        %1218 = vmatprep.subr.mxu0 0.0
        %1219 = vmatpush1.msra.mxu0 0.0
        %1220 = vmatprep.subr.mxu0 0.0
        %1221 = vmatpush1.msra.mxu0 0.0
        %1222 = vmatprep.subr.mxu0 0.0
        %1223 = vmatpush1.msra.mxu0 0.0
        %1224 = vmatprep.subr.mxu0 0.0
        %1225 = vmatpush1.msra.mxu0 0.0
        %1226 = vmatprep.subr.mxu0 0.0
        %1227 = vmatpush1.msra.mxu0 0.0
        %1228 = vmatprep.subr.mxu0 0.0
        %1229 = vmatpush1.msra.mxu0 0.0
        %1230 = vmatprep.subr.mxu0 0.0
        %1231 = vmatpush1.msra.mxu0 0.0
        %1232 = vmatprep.subr.mxu0 0.0
        %1233 = vmatpush1.msra.mxu0 0.0
        %1234 = vmatprep.subr.mxu0 0.0
        %1235 = vmatpush1.msra.mxu0 0.0
        %1236 = vmatprep.subr.mxu0 0.0
        %1237 = vmatpush1.msra.mxu0 0.0
        %1238 = vmatprep.subr.mxu0 0.0
        %1239 = vmatpush1.msra.mxu0 0.0
        %1240 = vmatprep.subr.mxu0 0.0
        %1241 = vmatpush1.msra.mxu0 0.0
        %1242 = vmatprep.subr.mxu0 0.0
        %1243 = vmatpush1.msra.mxu0 0.0
        %1244 = vmatprep.subr.mxu0 0.0
        %1245 = vmatpush1.msra.mxu0 0.0
        %1246 = vmatprep.subr.mxu0 0.0
        %1247 = vmatpush1.msra.mxu0 0.0
        %1248 = vmatprep.mubr.f32.mxu0 0.0
        %1249 = vmatmul.mubr.f32.gmra.mrb[0].mxu0 %v1182
        %v1250 = vpop.f32.mrb[0].mxu0
        %v1251 = vadd.f32 0.0, %v1250
        %v1252 = vpop.f32.mrb[0].mxu0
        %1253 = vdwg.mxu0
        %v1255 = vrot.slane %v1251, 2
        %v1257 = vadd.f32 %v754, %v1255
        %v1258 = vmul.f32 %v1257, 0.5
        %v1259 = vtanh.pop %v1258
        %v1260 = vadd.f32 %v1259, 1.0
        %v1261 = vmul.f32 %v1260, 0.5
        %v1262 = vtanh.pop %v1257
        %v1264 = vrot.slane %v1171, 7
        %v1266 = vmul.f32 %v1261, %v1264
        %1268 = vrot.lane.b32.xlu0 %v1262, 64
        %v1269 = vpop.permute.xlu0 %1268
        %v1271 = vmul.f32 %v1261, %v1269
        %1273 = vrot.lane.b32.xlu0 %v1271, 32
        %v1274 = vpop.permute.xlu0 %1273
        %v1276 = vadd.f32 %v1266, %v1274
        %v1277 = vtanh.pop %v1276
        %1279 = vrot.lane.b32.xlu0 %v1277, 64
        %v1280 = vpop.permute.xlu0 %1279
        %v1282 = vmul.f32 %v1261, %v1280
        %v1284 = vrot.slane %v1282, 6
        %1285 = vrot.lane.b32.xlu0 %v1284, 32
        %v1286 = vpop.permute.xlu0 %1285
        %v1287 = vsel %vm540, %v1286, 0
        %1289 = vmatprep.subr.mxu0 0.0
        %1290 = vmatpush1.msra.mxu0 %v530
        %1291 = vmatprep.subr.mxu0 0.0
        %1292 = vmatpush1.msra.mxu0 %v531
        %1293 = vmatprep.subr.mxu0 0.0
        %1294 = vmatpush1.msra.mxu0 %v532
        %1295 = vmatprep.subr.mxu0 0.0
        %1296 = vmatpush1.msra.mxu0 %v533
        %1297 = vmatprep.subr.mxu0 0.0
        %1298 = vmatpush1.msra.mxu0 0.0
        %1299 = vmatprep.subr.mxu0 0.0
        %1300 = vmatpush1.msra.mxu0 0.0
        %1301 = vmatprep.subr.mxu0 0.0
        %1302 = vmatpush1.msra.mxu0 0.0
        %1303 = vmatprep.subr.mxu0 0.0
        %1304 = vmatpush1.msra.mxu0 0.0
        %1305 = vmatprep.subr.mxu0 0.0
        %1306 = vmatpush1.msra.mxu0 0.0
        %1307 = vmatprep.subr.mxu0 0.0
        %1308 = vmatpush1.msra.mxu0 0.0
        %1309 = vmatprep.subr.mxu0 0.0
        %1310 = vmatpush1.msra.mxu0 0.0
        %1311 = vmatprep.subr.mxu0 0.0
        %1312 = vmatpush1.msra.mxu0 0.0
        %1313 = vmatprep.subr.mxu0 0.0
        %1314 = vmatpush1.msra.mxu0 0.0
        %1315 = vmatprep.subr.mxu0 0.0
        %1316 = vmatpush1.msra.mxu0 0.0
        %1317 = vmatprep.subr.mxu0 0.0
        %1318 = vmatpush1.msra.mxu0 0.0
        %1319 = vmatprep.subr.mxu0 0.0
        %1320 = vmatpush1.msra.mxu0 0.0
        %1321 = vmatprep.subr.mxu0 0.0
        %1322 = vmatpush1.msra.mxu0 0.0
        %1323 = vmatprep.subr.mxu0 0.0
        %1324 = vmatpush1.msra.mxu0 0.0
        %1325 = vmatprep.subr.mxu0 0.0
        %1326 = vmatpush1.msra.mxu0 0.0
        %1327 = vmatprep.subr.mxu0 0.0
        %1328 = vmatpush1.msra.mxu0 0.0
        %1329 = vmatprep.subr.mxu0 0.0
        %1330 = vmatpush1.msra.mxu0 0.0
        %1331 = vmatprep.subr.mxu0 0.0
        %1332 = vmatpush1.msra.mxu0 0.0
        %1333 = vmatprep.subr.mxu0 0.0
        %1334 = vmatpush1.msra.mxu0 0.0
        %1335 = vmatprep.subr.mxu0 0.0
        %1336 = vmatpush1.msra.mxu0 0.0
        %1337 = vmatprep.subr.mxu0 0.0
        %1338 = vmatpush1.msra.mxu0 0.0
        %1339 = vmatprep.subr.mxu0 0.0
        %1340 = vmatpush1.msra.mxu0 0.0
        %1341 = vmatprep.subr.mxu0 0.0
        %1342 = vmatpush1.msra.mxu0 0.0
        %1343 = vmatprep.subr.mxu0 0.0
        %1344 = vmatpush1.msra.mxu0 0.0
        %1345 = vmatprep.subr.mxu0 0.0
        %1346 = vmatpush1.msra.mxu0 0.0
        %1347 = vmatprep.subr.mxu0 0.0
        %1348 = vmatpush1.msra.mxu0 0.0
        %1349 = vmatprep.subr.mxu0 0.0
        %1350 = vmatpush1.msra.mxu0 0.0
        %1351 = vmatprep.subr.mxu0 0.0
        %1352 = vmatpush1.msra.mxu0 0.0
        %1353 = vmatprep.mubr.f32.mxu0 0.0
        %1354 = vmatmul.mubr.f32.gmra.mrb[0].mxu0 %v1287
        %v1355 = vpop.f32.mrb[0].mxu0
        %v1356 = vadd.f32 0.0, %v1355
        %v1357 = vpop.f32.mrb[0].mxu0
        %1358 = vdwg.mxu0
        %v1360 = vrot.slane %v1356, 1
        %v1362 = vadd.f32 %v862, %v1360
        %v1363 = vmul.f32 %v1362, 0.5
        %v1364 = vtanh.pop %v1363
        %v1365 = vadd.f32 %v1364, 1.0
        %v1366 = vmul.f32 %v1365, 0.5
        %v1367 = vtanh.pop %v1362
        %v1369 = vrot.slane %v1276, 7
        %v1371 = vmul.f32 %v1366, %v1369
        %1373 = vrot.lane.b32.xlu0 %v1367, 64
        %v1374 = vpop.permute.xlu0 %1373
        %v1376 = vmul.f32 %v1366, %v1374
        %1378 = vrot.lane.b32.xlu0 %v1376, 32
        %v1379 = vpop.permute.xlu0 %1378
        %v1381 = vadd.f32 %v1371, %v1379
        %v1382 = vtanh.pop %v1381
        %1384 = vrot.lane.b32.xlu0 %v1382, 64
        %v1385 = vpop.permute.xlu0 %1384
        %v1387 = vmul.f32 %v1366, %v1385
        %vm1388 = vcmask 1040384
        %v1389 = vsel %vm1388, %v644, %v751
        %vm1390 = vcmask 1041408
        %v1391 = vsel %vm1390, %v1389, %v859
        %vm1392 = vcmask 1042432
        %v1393 = vsel %vm1392, %v1391, %v967
        %v1394 = vsel %vm442, %v1393, %v1072
        %vm1395 = vcmask 1044480
        %v1396 = vsel %vm1395, %v1394, %v1177
        %vm1397 = vcmask 1045504
        %v1398 = vsel %vm1397, %v1396, %v1282
        %vm1399 = vcmask 1046528
        %v1400 = vsel %vm1399, %v1398, %v1387
        %v1402 = vrot.slane %v1387, 7
        %v1404 = vrot.slane %v1282, 5
        %v1406 = vrot.slane %v1177, 3
        %v1408 = vrot.slane %v1072, 1
        %v1410 = vrot.slane %v967, 7
        %v1412 = vrot.slane %v859, 5
        %v1414 = vrot.slane %v751, 3
        %v1416 = vrot.slane %v644, 1
        %v1418 = vsel %vm1388, %v1402, %v1404
        %v1419 = vsel %vm1390, %v1418, %v1406
        %v1420 = vsel %vm1392, %v1419, %v1408
        %v1421 = vsel %vm442, %v1420, %v1410
        %v1422 = vsel %vm1395, %v1421, %v1412
        %v1423 = vsel %vm1397, %v1422, %v1414
        %v1424 = vsel %vm1399, %v1423, %v1416
        %v1425 = vsel %vm529, 1, 0
        %vm1426 = vcmp.eq.s32.totalorder %v1425, 1
        %1428 = vrot.lane.b32.xlu0 %v1400, 32
        %v1429 = vpop.permute.xlu0 %1428
        %1432 = vrot.lane.b32.xlu0 %v1424, 32
        %v1433 = vpop.permute.xlu0 %1432
        %v1435 = vsel %vm1426, %v1429, %v1433
        %v1436 = vld [vmem:[%s6] sm:$0xff]
        %v1437 = vld [vmem:[%s6 + $0x8] sm:$0xff]
        %v1438 = vld [vmem:[%s6 + $0x10] sm:$0xff]
        %v1439 = vld [vmem:[%s6 + $0x18] sm:$0xff]
        %v1440 = vld [vmem:[#allocation5] sm:$0x1]
        %v1442 = vlaneseq
        %v1443 = vshrl.u32 %v1442, 7
        %v1444 = vsub.s32 0, %v1443
        %v1445 = vrot.slane %v1440, %v1444
        %v1448 = vsel %vm540, %v1435, 0
        %1450 = vmatprep.subr.mxu0 0.0
        %1451 = vmatpush1.msra.mxu0 %v1436
        %1452 = vmatprep.subr.mxu0 0.0
        %1453 = vmatpush1.msra.mxu0 %v1437
        %1454 = vmatprep.subr.mxu0 0.0
        %1455 = vmatpush1.msra.mxu0 %v1438
        %1456 = vmatprep.subr.mxu0 0.0
        %1457 = vmatpush1.msra.mxu0 %v1439
        %1458 = vmatprep.subr.mxu0 0.0
        %1459 = vmatpush1.msra.mxu0 0.0
        %1460 = vmatprep.subr.mxu0 0.0
        %1461 = vmatpush1.msra.mxu0 0.0
        %1462 = vmatprep.subr.mxu0 0.0
        %1463 = vmatpush1.msra.mxu0 0.0
        %1464 = vmatprep.subr.mxu0 0.0
        %1465 = vmatpush1.msra.mxu0 0.0
        %1466 = vmatprep.subr.mxu0 0.0
        %1467 = vmatpush1.msra.mxu0 0.0
        %1468 = vmatprep.subr.mxu0 0.0
        %1469 = vmatpush1.msra.mxu0 0.0
        %1470 = vmatprep.subr.mxu0 0.0
        %1471 = vmatpush1.msra.mxu0 0.0
        %1472 = vmatprep.subr.mxu0 0.0
        %1473 = vmatpush1.msra.mxu0 0.0
        %1474 = vmatprep.subr.mxu0 0.0
        %1475 = vmatpush1.msra.mxu0 0.0
        %1476 = vmatprep.subr.mxu0 0.0
        %1477 = vmatpush1.msra.mxu0 0.0
        %1478 = vmatprep.subr.mxu0 0.0
        %1479 = vmatpush1.msra.mxu0 0.0
        %1480 = vmatprep.subr.mxu0 0.0
        %1481 = vmatpush1.msra.mxu0 0.0
        %1482 = vmatprep.subr.mxu0 0.0
        %1483 = vmatpush1.msra.mxu0 0.0
        %1484 = vmatprep.subr.mxu0 0.0
        %1485 = vmatpush1.msra.mxu0 0.0
        %1486 = vmatprep.subr.mxu0 0.0
        %1487 = vmatpush1.msra.mxu0 0.0
        %1488 = vmatprep.subr.mxu0 0.0
        %1489 = vmatpush1.msra.mxu0 0.0
        %1490 = vmatprep.subr.mxu0 0.0
        %1491 = vmatpush1.msra.mxu0 0.0
        %1492 = vmatprep.subr.mxu0 0.0
        %1493 = vmatpush1.msra.mxu0 0.0
        %1494 = vmatprep.subr.mxu0 0.0
        %1495 = vmatpush1.msra.mxu0 0.0
        %1496 = vmatprep.subr.mxu0 0.0
        %1497 = vmatpush1.msra.mxu0 0.0
        %1498 = vmatprep.subr.mxu0 0.0
        %1499 = vmatpush1.msra.mxu0 0.0
        %1500 = vmatprep.subr.mxu0 0.0
        %1501 = vmatpush1.msra.mxu0 0.0
        %1502 = vmatprep.subr.mxu0 0.0
        %1503 = vmatpush1.msra.mxu0 0.0
        %1504 = vmatprep.subr.mxu0 0.0
        %1505 = vmatpush1.msra.mxu0 0.0
        %1506 = vmatprep.subr.mxu0 0.0
        %1507 = vmatpush1.msra.mxu0 0.0
        %1508 = vmatprep.subr.mxu0 0.0
        %1509 = vmatpush1.msra.mxu0 0.0
        %1510 = vmatprep.subr.mxu0 0.0
        %1511 = vmatpush1.msra.mxu0 0.0
        %1512 = vmatprep.subr.mxu0 0.0
        %1513 = vmatpush1.msra.mxu0 0.0
        %1514 = vmatprep.mubr.f32.mxu0 0.0
        %1515 = vmatmul.mubr.f32.gmra.mrb[0].mxu0 %v1448
        %v1516 = vpop.f32.mrb[0].mxu0
        %v1517 = vadd.f32 %v1445, %v1516
        %v1518 = vpop.f32.mrb[0].mxu0
        %1519 = vdwg.mxu0
        %v1520 = vld [vmem:[%s8] sm:$0x7f]
        %vm1521 = vcmp.eq.s32.totalorder %v421, 4
        %v1522 = vsel %vm1521, 0.0, -10000.0
        %1524 = vset.pattern.permute.xlu0 0
        %1525 = vperm.xlu0 %1524, %v1522
        %v1526 = vpop.permute.xlu0 %1525
        %v1528 = vlaneseq
        %v1529 = vshrl.u32 %v1528, 7
        %v1530 = vsub.s32 0, %v1529
        %v1531 = vrot.slane %v1520, %v1530
        %v1532 = vadd.f32 %v1526, %v1531
        %1533 = vset.pattern.permute.xlu0 1
        %1534 = vperm.xlu0 %1533, %v1522
        %v1535 = vpop.permute.xlu0 %1534
        %v1537 = vlaneseq
        %v1538 = vshrl.u32 %v1537, 7
        %v1539 = vsub.s32 1, %v1538
        %v1540 = vrot.slane %v1520, %v1539
        %v1541 = vadd.f32 %v1535, %v1540
        %vm1542 = vcmp.gt.f32.partialorder %v1541, %v1532
        %v1543 = vsel %vm1542, %v1541, %v1532
        %1544 = vset.pattern.permute.xlu0 2
        %1545 = vperm.xlu0 %1544, %v1522
        %v1546 = vpop.permute.xlu0 %1545
        %v1548 = vlaneseq
        %v1549 = vshrl.u32 %v1548, 7
        %v1550 = vsub.s32 2, %v1549
        %v1551 = vrot.slane %v1520, %v1550
        %v1552 = vadd.f32 %v1546, %v1551
        %vm1553 = vcmp.gt.f32.partialorder %v1552, %v1543
        %v1554 = vsel %vm1553, %v1552, %v1543
        %1555 = vset.pattern.permute.xlu0 3
        %1556 = vperm.xlu0 %1555, %v1522
        %v1557 = vpop.permute.xlu0 %1556
        %v1559 = vlaneseq
        %v1560 = vshrl.u32 %v1559, 7
        %v1561 = vsub.s32 3, %v1560
        %v1562 = vrot.slane %v1520, %v1561
        %v1563 = vadd.f32 %v1557, %v1562
        %vm1564 = vcmp.gt.f32.partialorder %v1563, %v1554
        %v1565 = vsel %vm1564, %v1563, %v1554
        %1566 = vset.pattern.permute.xlu0 4
        %1567 = vperm.xlu0 %1566, %v1522
        %v1568 = vpop.permute.xlu0 %1567
        %v1570 = vlaneseq
        %v1571 = vshrl.u32 %v1570, 7
        %v1572 = vsub.s32 4, %v1571
        %v1573 = vrot.slane %v1520, %v1572
        %v1574 = vadd.f32 %v1568, %v1573
        %vm1575 = vcmp.gt.f32.partialorder %v1574, %v1565
        %v1576 = vsel %vm1575, %v1574, %v1565
        %1577 = vset.pattern.permute.xlu0 5
        %1578 = vperm.xlu0 %1577, %v1522
        %v1579 = vpop.permute.xlu0 %1578
        %v1581 = vlaneseq
        %v1582 = vshrl.u32 %v1581, 7
        %v1583 = vsub.s32 5, %v1582
        %v1584 = vrot.slane %v1520, %v1583
        %v1585 = vadd.f32 %v1579, %v1584
        %vm1586 = vcmp.gt.f32.partialorder %v1585, %v1576
        %v1587 = vsel %vm1586, %v1585, %v1576
        %1588 = vset.pattern.permute.xlu0 6
        %1589 = vperm.xlu0 %1588, %v1522
        %v1590 = vpop.permute.xlu0 %1589
        %v1592 = vlaneseq
        %v1593 = vshrl.u32 %v1592, 7
        %v1594 = vsub.s32 6, %v1593
        %v1595 = vrot.slane %v1520, %v1594
        %v1596 = vadd.f32 %v1590, %v1595
        %vm1597 = vcmp.gt.f32.partialorder %v1596, %v1587
        %v1598 = vsel %vm1597, %v1596, %v1587
        %v1599 = vlaneseq
        %v1600 = vshrl.u32 %v1599, 7
        %v1601 = vsub.s32 0, %v1600
        %v1602 = vrot.slane %v1517, %v1601
        %v1603 = vadd.f32 %v1598, %v1602
        %1605 = vrot.lane.b32.xlu0 %v1517, 121
        %v1606 = vpop.permute.xlu0 %1605
        %v1608 = vadd.f32 %v1603, %v1606
        %1610 = vset.pattern.permute.xlu0 0
        %1611 = vperm.xlu0 %1610, %v1608
        %v1612 = vpop.permute.xlu0 %1611
        %v1614 = vadd.f32 %v1612, %v1531
        %1615 = vset.pattern.permute.xlu0 1
        %1616 = vperm.xlu0 %1615, %v1608
        %v1617 = vpop.permute.xlu0 %1616
        %v1619 = vadd.f32 %v1617, %v1540
        %vm1620 = vcmp.gt.f32.partialorder %v1619, %v1614
        %v1621 = vsel %vm1620, %v1619, %v1614
        %v1622 = vsel %vm1620, 1, 0
        %1623 = vset.pattern.permute.xlu0 2
        %1624 = vperm.xlu0 %1623, %v1608
        %v1625 = vpop.permute.xlu0 %1624
        %v1627 = vadd.f32 %v1625, %v1551
        %vm1628 = vcmp.gt.f32.partialorder %v1627, %v1621
        %v1629 = vsel %vm1628, %v1627, %v1621
        %v1630 = vsel %vm1628, 2, %v1622
        %1631 = vset.pattern.permute.xlu0 3
        %1632 = vperm.xlu0 %1631, %v1608
        %v1633 = vpop.permute.xlu0 %1632
        %v1635 = vadd.f32 %v1633, %v1562
        %vm1636 = vcmp.gt.f32.partialorder %v1635, %v1629
        %v1637 = vsel %vm1636, %v1635, %v1629
        %v1638 = vsel %vm1636, 3, %v1630
        %1639 = vset.pattern.permute.xlu0 4
        %1640 = vperm.xlu0 %1639, %v1608
        %v1641 = vpop.permute.xlu0 %1640
        %v1643 = vadd.f32 %v1641, %v1573
        %vm1644 = vcmp.gt.f32.partialorder %v1643, %v1637
        %v1645 = vsel %vm1644, %v1643, %v1637
        %v1646 = vsel %vm1644, 4, %v1638
        %1647 = vset.pattern.permute.xlu0 5
        %1648 = vperm.xlu0 %1647, %v1608
        %v1649 = vpop.permute.xlu0 %1648
        %v1651 = vadd.f32 %v1649, %v1584
        %vm1652 = vcmp.gt.f32.partialorder %v1651, %v1645
        %v1653 = vsel %vm1652, %v1651, %v1645
        %v1654 = vsel %vm1652, 5, %v1646
        %1655 = vset.pattern.permute.xlu0 6
        %1656 = vperm.xlu0 %1655, %v1608
        %v1657 = vpop.permute.xlu0 %1656
        %v1659 = vadd.f32 %v1657, %v1595
        %vm1660 = vcmp.gt.f32.partialorder %v1659, %v1653
        %v1661 = vsel %vm1660, %v1659, %v1653
        %v1662 = vsel %vm1660, 6, %v1654
        %v1663 = vlaneseq
        %v1664 = vshrl.u32 %v1663, 7
        %v1665 = vsub.s32 1, %v1664
        %v1666 = vrot.slane %v1517, %v1665
        %v1667 = vadd.f32 %v1661, %v1666
        %v1668 = vadd.f32 %v1667, %v1606
        %1670 = vset.pattern.permute.xlu0 0
        %1671 = vperm.xlu0 %1670, %v1668
        %v1672 = vpop.permute.xlu0 %1671
        %v1674 = vadd.f32 %v1672, %v1531
        %1675 = vset.pattern.permute.xlu0 1
        %1676 = vperm.xlu0 %1675, %v1668
        %v1677 = vpop.permute.xlu0 %1676
        %v1679 = vadd.f32 %v1677, %v1540
        %vm1680 = vcmp.gt.f32.partialorder %v1679, %v1674
        %v1681 = vsel %vm1680, %v1679, %v1674
        %v1682 = vsel %vm1680, 1, 0
        %1683 = vset.pattern.permute.xlu0 2
        %1684 = vperm.xlu0 %1683, %v1668
        %v1685 = vpop.permute.xlu0 %1684
        %v1687 = vadd.f32 %v1685, %v1551
        %vm1688 = vcmp.gt.f32.partialorder %v1687, %v1681
        %v1689 = vsel %vm1688, %v1687, %v1681
        %v1690 = vsel %vm1688, 2, %v1682
        %1691 = vset.pattern.permute.xlu0 3
        %1692 = vperm.xlu0 %1691, %v1668
        %v1693 = vpop.permute.xlu0 %1692
        %v1695 = vadd.f32 %v1693, %v1562
        %vm1696 = vcmp.gt.f32.partialorder %v1695, %v1689
        %v1697 = vsel %vm1696, %v1695, %v1689
        %v1698 = vsel %vm1696, 3, %v1690
        %1699 = vset.pattern.permute.xlu0 4
        %1700 = vperm.xlu0 %1699, %v1668
        %v1701 = vpop.permute.xlu0 %1700
        %v1703 = vadd.f32 %v1701, %v1573
        %vm1704 = vcmp.gt.f32.partialorder %v1703, %v1697
        %v1705 = vsel %vm1704, %v1703, %v1697
        %v1706 = vsel %vm1704, 4, %v1698
        %1707 = vset.pattern.permute.xlu0 5
        %1708 = vperm.xlu0 %1707, %v1668
        %v1709 = vpop.permute.xlu0 %1708
        %v1711 = vadd.f32 %v1709, %v1584
        %vm1712 = vcmp.gt.f32.partialorder %v1711, %v1705
        %v1713 = vsel %vm1712, %v1711, %v1705
        %v1714 = vsel %vm1712, 5, %v1706
        %1715 = vset.pattern.permute.xlu0 6
        %1716 = vperm.xlu0 %1715, %v1668
        %v1717 = vpop.permute.xlu0 %1716
        %v1719 = vadd.f32 %v1717, %v1595
        %vm1720 = vcmp.gt.f32.partialorder %v1719, %v1713
        %v1721 = vsel %vm1720, %v1719, %v1713
        %v1722 = vsel %vm1720, 6, %v1714
        %v1723 = vlaneseq
        %v1724 = vshrl.u32 %v1723, 7
        %v1725 = vsub.s32 2, %v1724
        %v1726 = vrot.slane %v1517, %v1725
        %v1727 = vadd.f32 %v1721, %v1726
        %v1728 = vadd.f32 %v1727, %v1606
        %1730 = vset.pattern.permute.xlu0 0
        %1731 = vperm.xlu0 %1730, %v1728
        %v1732 = vpop.permute.xlu0 %1731
        %v1734 = vadd.f32 %v1732, %v1531
        %1735 = vset.pattern.permute.xlu0 1
        %1736 = vperm.xlu0 %1735, %v1728
        %v1737 = vpop.permute.xlu0 %1736
        %v1739 = vadd.f32 %v1737, %v1540
        %vm1740 = vcmp.gt.f32.partialorder %v1739, %v1734
        %v1741 = vsel %vm1740, %v1739, %v1734
        %v1742 = vsel %vm1740, 1, 0
        %1743 = vset.pattern.permute.xlu0 2
        %1744 = vperm.xlu0 %1743, %v1728
        %v1745 = vpop.permute.xlu0 %1744
        %v1747 = vadd.f32 %v1745, %v1551
        %vm1748 = vcmp.gt.f32.partialorder %v1747, %v1741
        %v1749 = vsel %vm1748, %v1747, %v1741
        %v1750 = vsel %vm1748, 2, %v1742
        %1751 = vset.pattern.permute.xlu0 3
        %1752 = vperm.xlu0 %1751, %v1728
        %v1753 = vpop.permute.xlu0 %1752
        %v1755 = vadd.f32 %v1753, %v1562
        %vm1756 = vcmp.gt.f32.partialorder %v1755, %v1749
        %v1757 = vsel %vm1756, %v1755, %v1749
        %v1758 = vsel %vm1756, 3, %v1750
        %1759 = vset.pattern.permute.xlu0 4
        %1760 = vperm.xlu0 %1759, %v1728
        %v1761 = vpop.permute.xlu0 %1760
        %v1763 = vadd.f32 %v1761, %v1573
        %vm1764 = vcmp.gt.f32.partialorder %v1763, %v1757
        %v1765 = vsel %vm1764, %v1763, %v1757
        %v1766 = vsel %vm1764, 4, %v1758
        %1767 = vset.pattern.permute.xlu0 5
        %1768 = vperm.xlu0 %1767, %v1728
        %v1769 = vpop.permute.xlu0 %1768
        %v1771 = vadd.f32 %v1769, %v1584
        %vm1772 = vcmp.gt.f32.partialorder %v1771, %v1765
        %v1773 = vsel %vm1772, %v1771, %v1765
        %v1774 = vsel %vm1772, 5, %v1766
        %1775 = vset.pattern.permute.xlu0 6
        %1776 = vperm.xlu0 %1775, %v1728
        %v1777 = vpop.permute.xlu0 %1776
        %v1779 = vadd.f32 %v1777, %v1595
        %vm1780 = vcmp.gt.f32.partialorder %v1779, %v1773
        %v1781 = vsel %vm1780, %v1779, %v1773
        %v1782 = vsel %vm1780, 6, %v1774
        %v1783 = vlaneseq
        %v1784 = vshrl.u32 %v1783, 7
        %v1785 = vsub.s32 3, %v1784
        %v1786 = vrot.slane %v1517, %v1785
        %v1787 = vadd.f32 %v1781, %v1786
        %v1788 = vadd.f32 %v1787, %v1606
        %1790 = vset.pattern.permute.xlu0 0
        %1791 = vperm.xlu0 %1790, %v1788
        %v1792 = vpop.permute.xlu0 %1791
        %v1794 = vadd.f32 %v1792, %v1531
        %1795 = vset.pattern.permute.xlu0 1
        %1796 = vperm.xlu0 %1795, %v1788
        %v1797 = vpop.permute.xlu0 %1796
        %v1799 = vadd.f32 %v1797, %v1540
        %vm1800 = vcmp.gt.f32.partialorder %v1799, %v1794
        %v1801 = vsel %vm1800, %v1799, %v1794
        %v1802 = vsel %vm1800, 1, 0
        %1803 = vset.pattern.permute.xlu0 2
        %1804 = vperm.xlu0 %1803, %v1788
        %v1805 = vpop.permute.xlu0 %1804
        %v1807 = vadd.f32 %v1805, %v1551
        %vm1808 = vcmp.gt.f32.partialorder %v1807, %v1801
        %v1809 = vsel %vm1808, %v1807, %v1801
        %v1810 = vsel %vm1808, 2, %v1802
        %1811 = vset.pattern.permute.xlu0 3
        %1812 = vperm.xlu0 %1811, %v1788
        %v1813 = vpop.permute.xlu0 %1812
        %v1815 = vadd.f32 %v1813, %v1562
        %vm1816 = vcmp.gt.f32.partialorder %v1815, %v1809
        %v1817 = vsel %vm1816, %v1815, %v1809
        %v1818 = vsel %vm1816, 3, %v1810
        %1819 = vset.pattern.permute.xlu0 4
        %1820 = vperm.xlu0 %1819, %v1788
        %v1821 = vpop.permute.xlu0 %1820
        %v1823 = vadd.f32 %v1821, %v1573
        %vm1824 = vcmp.gt.f32.partialorder %v1823, %v1817
        %v1825 = vsel %vm1824, %v1823, %v1817
        %v1826 = vsel %vm1824, 4, %v1818
        %1827 = vset.pattern.permute.xlu0 5
        %1828 = vperm.xlu0 %1827, %v1788
        %v1829 = vpop.permute.xlu0 %1828
        %v1831 = vadd.f32 %v1829, %v1584
        %vm1832 = vcmp.gt.f32.partialorder %v1831, %v1825
        %v1833 = vsel %vm1832, %v1831, %v1825
        %v1834 = vsel %vm1832, 5, %v1826
        %1835 = vset.pattern.permute.xlu0 6
        %1836 = vperm.xlu0 %1835, %v1788
        %v1837 = vpop.permute.xlu0 %1836
        %v1839 = vadd.f32 %v1837, %v1595
        %vm1840 = vcmp.gt.f32.partialorder %v1839, %v1833
        %v1841 = vsel %vm1840, %v1839, %v1833
        %v1842 = vsel %vm1840, 6, %v1834
        %v1843 = vlaneseq
        %v1844 = vshrl.u32 %v1843, 7
        %v1845 = vsub.s32 4, %v1844
        %v1846 = vrot.slane %v1517, %v1845
        %v1847 = vadd.f32 %v1841, %v1846
        %v1848 = vadd.f32 %v1847, %v1606
        %1850 = vset.pattern.permute.xlu0 0
        %1851 = vperm.xlu0 %1850, %v1848
        %v1852 = vpop.permute.xlu0 %1851
        %v1854 = vadd.f32 %v1852, %v1531
        %1855 = vset.pattern.permute.xlu0 1
        %1856 = vperm.xlu0 %1855, %v1848
        %v1857 = vpop.permute.xlu0 %1856
        %v1859 = vadd.f32 %v1857, %v1540
        %vm1860 = vcmp.gt.f32.partialorder %v1859, %v1854
        %v1861 = vsel %vm1860, %v1859, %v1854
        %v1862 = vsel %vm1860, 1, 0
        %1863 = vset.pattern.permute.xlu0 2
        %1864 = vperm.xlu0 %1863, %v1848
        %v1865 = vpop.permute.xlu0 %1864
        %v1867 = vadd.f32 %v1865, %v1551
        %vm1868 = vcmp.gt.f32.partialorder %v1867, %v1861
        %v1869 = vsel %vm1868, %v1867, %v1861
        %v1870 = vsel %vm1868, 2, %v1862
        %1871 = vset.pattern.permute.xlu0 3
        %1872 = vperm.xlu0 %1871, %v1848
        %v1873 = vpop.permute.xlu0 %1872
        %v1875 = vadd.f32 %v1873, %v1562
        %vm1876 = vcmp.gt.f32.partialorder %v1875, %v1869
        %v1877 = vsel %vm1876, %v1875, %v1869
        %v1878 = vsel %vm1876, 3, %v1870
        %1879 = vset.pattern.permute.xlu0 4
        %1880 = vperm.xlu0 %1879, %v1848
        %v1881 = vpop.permute.xlu0 %1880
        %v1883 = vadd.f32 %v1881, %v1573
        %vm1884 = vcmp.gt.f32.partialorder %v1883, %v1877
        %v1885 = vsel %vm1884, %v1883, %v1877
        %v1886 = vsel %vm1884, 4, %v1878
        %1887 = vset.pattern.permute.xlu0 5
        %1888 = vperm.xlu0 %1887, %v1848
        %v1889 = vpop.permute.xlu0 %1888
        %v1891 = vadd.f32 %v1889, %v1584
        %vm1892 = vcmp.gt.f32.partialorder %v1891, %v1885
        %v1893 = vsel %vm1892, %v1891, %v1885
        %v1894 = vsel %vm1892, 5, %v1886
        %1895 = vset.pattern.permute.xlu0 6
        %1896 = vperm.xlu0 %1895, %v1848
        %v1897 = vpop.permute.xlu0 %1896
        %v1899 = vadd.f32 %v1897, %v1595
        %vm1900 = vcmp.gt.f32.partialorder %v1899, %v1893
        %v1901 = vsel %vm1900, %v1899, %v1893
        %v1902 = vsel %vm1900, 6, %v1894
        %v1903 = vlaneseq
        %v1904 = vshrl.u32 %v1903, 7
        %v1905 = vsub.s32 5, %v1904
        %v1906 = vrot.slane %v1517, %v1905
        %v1907 = vadd.f32 %v1901, %v1906
        %v1908 = vadd.f32 %v1907, %v1606
        %1910 = vset.pattern.permute.xlu0 0
        %1911 = vperm.xlu0 %1910, %v1908
        %v1912 = vpop.permute.xlu0 %1911
        %v1914 = vadd.f32 %v1912, %v1531
        %1915 = vset.pattern.permute.xlu0 1
        %1916 = vperm.xlu0 %1915, %v1908
        %v1917 = vpop.permute.xlu0 %1916
        %v1919 = vadd.f32 %v1917, %v1540
        %vm1920 = vcmp.gt.f32.partialorder %v1919, %v1914
        %v1921 = vsel %vm1920, %v1919, %v1914
        %v1922 = vsel %vm1920, 1, 0
        %1923 = vset.pattern.permute.xlu0 2
        %1924 = vperm.xlu0 %1923, %v1908
        %v1925 = vpop.permute.xlu0 %1924
        %v1927 = vadd.f32 %v1925, %v1551
        %vm1928 = vcmp.gt.f32.partialorder %v1927, %v1921
        %v1929 = vsel %vm1928, %v1927, %v1921
        %v1930 = vsel %vm1928, 2, %v1922
        %1931 = vset.pattern.permute.xlu0 3
        %1932 = vperm.xlu0 %1931, %v1908
        %v1933 = vpop.permute.xlu0 %1932
        %v1935 = vadd.f32 %v1933, %v1562
        %vm1936 = vcmp.gt.f32.partialorder %v1935, %v1929
        %v1937 = vsel %vm1936, %v1935, %v1929
        %v1938 = vsel %vm1936, 3, %v1930
        %1939 = vset.pattern.permute.xlu0 4
        %1940 = vperm.xlu0 %1939, %v1908
        %v1941 = vpop.permute.xlu0 %1940
        %v1943 = vadd.f32 %v1941, %v1573
        %vm1944 = vcmp.gt.f32.partialorder %v1943, %v1937
        %v1945 = vsel %vm1944, %v1943, %v1937
        %v1946 = vsel %vm1944, 4, %v1938
        %1947 = vset.pattern.permute.xlu0 5
        %1948 = vperm.xlu0 %1947, %v1908
        %v1949 = vpop.permute.xlu0 %1948
        %v1951 = vadd.f32 %v1949, %v1584
        %vm1952 = vcmp.gt.f32.partialorder %v1951, %v1945
        %v1953 = vsel %vm1952, %v1951, %v1945
        %v1954 = vsel %vm1952, 5, %v1946
        %1955 = vset.pattern.permute.xlu0 6
        %1956 = vperm.xlu0 %1955, %v1908
        %v1957 = vpop.permute.xlu0 %1956
        %v1959 = vadd.f32 %v1957, %v1595
        %vm1960 = vcmp.gt.f32.partialorder %v1959, %v1953
        %v1961 = vsel %vm1960, %v1959, %v1953
        %v1962 = vsel %vm1960, 6, %v1954
        %v1963 = vlaneseq
        %v1964 = vshrl.u32 %v1963, 7
        %v1965 = vsub.s32 6, %v1964
        %v1966 = vrot.slane %v1517, %v1965
        %v1967 = vadd.f32 %v1961, %v1966
        %v1968 = vadd.f32 %v1967, %v1606
        %1970 = vset.pattern.permute.xlu0 0
        %1971 = vperm.xlu0 %1970, %v1968
        %v1972 = vpop.permute.xlu0 %1971
        %v1974 = vadd.f32 %v1972, %v1531
        %1975 = vset.pattern.permute.xlu0 1
        %1976 = vperm.xlu0 %1975, %v1968
        %v1977 = vpop.permute.xlu0 %1976
        %v1979 = vadd.f32 %v1977, %v1540
        %vm1980 = vcmp.gt.f32.partialorder %v1979, %v1974
        %v1981 = vsel %vm1980, %v1979, %v1974
        %v1982 = vsel %vm1980, 1, 0
        %1983 = vset.pattern.permute.xlu0 2
        %1984 = vperm.xlu0 %1983, %v1968
        %v1985 = vpop.permute.xlu0 %1984
        %v1987 = vadd.f32 %v1985, %v1551
        %vm1988 = vcmp.gt.f32.partialorder %v1987, %v1981
        %v1989 = vsel %vm1988, %v1987, %v1981
        %v1990 = vsel %vm1988, 2, %v1982
        %1991 = vset.pattern.permute.xlu0 3
        %1992 = vperm.xlu0 %1991, %v1968
        %v1993 = vpop.permute.xlu0 %1992
        %v1995 = vadd.f32 %v1993, %v1562
        %vm1996 = vcmp.gt.f32.partialorder %v1995, %v1989
        %v1997 = vsel %vm1996, %v1995, %v1989
        %v1998 = vsel %vm1996, 3, %v1990
        %1999 = vset.pattern.permute.xlu0 4
        %2000 = vperm.xlu0 %1999, %v1968
        %v2001 = vpop.permute.xlu0 %2000
        %v2003 = vadd.f32 %v2001, %v1573
        %vm2004 = vcmp.gt.f32.partialorder %v2003, %v1997
        %v2005 = vsel %vm2004, %v2003, %v1997
        %v2006 = vsel %vm2004, 4, %v1998
        %2007 = vset.pattern.permute.xlu0 5
        %2008 = vperm.xlu0 %2007, %v1968
        %v2009 = vpop.permute.xlu0 %2008
        %v2011 = vadd.f32 %v2009, %v1584
        %vm2012 = vcmp.gt.f32.partialorder %v2011, %v2005
        %v2013 = vsel %vm2012, %v2011, %v2005
        %v2014 = vsel %vm2012, 5, %v2006
        %2015 = vset.pattern.permute.xlu0 6
        %2016 = vperm.xlu0 %2015, %v1968
        %v2017 = vpop.permute.xlu0 %2016
        %v2019 = vadd.f32 %v2017, %v1595
        %vm2020 = vcmp.gt.f32.partialorder %v2019, %v2013
        %v2021 = vsel %vm2020, %v2019, %v2013
        %v2022 = vsel %vm2020, 6, %v2014
        %v2023 = vlaneseq
        %v2024 = vshrl.u32 %v2023, 7
        %v2025 = vsub.s32 7, %v2024
        %v2026 = vrot.slane %v1517, %v2025
        %v2027 = vadd.f32 %v2021, %v2026
        %v2028 = vadd.f32 %v2027, %v1606
        %v2029 = vld [vmem:[%s9] sm:$0x1]
        %v2031 = vlaneseq
        %v2032 = vshrl.u32 %v2031, 7
        %v2033 = vsub.s32 0, %v2032
        %v2034 = vrot.slane %v2029, %v2033
        %v2036 = vadd.f32 %v2028, %v2034
        %2038 = vrot.lane.b32.xlu0 %v2036, 1
        %v2039 = vpop.permute.xlu0 %2038
        %vm2041 = vcmp.gt.f32.partialorder %v2036, %v2039
        %v2042 = vsel %vm2041, %v2036, %v2039
        %v2043 = vsel %vm2041, 1, 0
        %2045 = vrot.lane.b32.xlu0 %v2042, 1
        %v2046 = vpop.permute.xlu0 %2045
        %vm2048 = vcmp.gt.f32.partialorder %v2036, %v2046
        %v2049 = vsel %vm2048, %v2036, %v2046
        %2050 = vrot.lane.b32.xlu0 %v2043, 1
        %v2051 = vpop.permute.xlu0 %2050
        %v2052 = vsel %vm2048, 2, %v2051
        %2054 = vrot.lane.b32.xlu0 %v2049, 1
        %v2055 = vpop.permute.xlu0 %2054
        %vm2057 = vcmp.gt.f32.partialorder %v2036, %v2055
        %v2058 = vsel %vm2057, %v2036, %v2055
        %2059 = vrot.lane.b32.xlu0 %v2052, 1
        %v2060 = vpop.permute.xlu0 %2059
        %v2061 = vsel %vm2057, 3, %v2060
        %2063 = vrot.lane.b32.xlu0 %v2058, 1
        %v2064 = vpop.permute.xlu0 %2063
        %vm2066 = vcmp.gt.f32.partialorder %v2036, %v2064
        %v2067 = vsel %vm2066, %v2036, %v2064
        %2068 = vrot.lane.b32.xlu0 %v2061, 1
        %v2069 = vpop.permute.xlu0 %2068
        %v2070 = vsel %vm2066, 4, %v2069
        %2072 = vrot.lane.b32.xlu0 %v2067, 1
        %v2073 = vpop.permute.xlu0 %2072
        %vm2075 = vcmp.gt.f32.partialorder %v2036, %v2073
        %v2076 = vsel %vm2075, %v2036, %v2073
        %2077 = vrot.lane.b32.xlu0 %v2070, 1
        %v2078 = vpop.permute.xlu0 %2077
        %v2079 = vsel %vm2075, 5, %v2078
        %2081 = vrot.lane.b32.xlu0 %v2076, 1
        %v2082 = vpop.permute.xlu0 %2081
        %vm2084 = vcmp.gt.f32.partialorder %v2036, %v2082
        %v2085 = vsel %vm2084, %v2036, %v2082
        %2086 = vrot.lane.b32.xlu0 %v2079, 1
        %v2087 = vpop.permute.xlu0 %2086
        %v2088 = vsel %vm2084, 6, %v2087
        %2090 = vrot.lane.b32.xlu0 %v2085, 122
        %v2091 = vpop.permute.xlu0 %2090
        %vm2093 = vcmask 7168
        %2094 = vst.msk [vmem:[%s418] sm:$0xff] %vm2093, %v2091
        %vm2095 = vcmp.eq.s32.totalorder %v421, 7
        %2096 = vset.pattern.permute.xlu0 6
        %2097 = vperm.xlu0 %2096, %v2088
        %v2098 = vpop.permute.xlu0 %2097
        %v2099 = vsel %vm2095, %v2098, 0
        %vm2100 = vcmp.eq.s32.totalorder %v421, %v2098
        %v2101 = vsel %vm2100, %v2022, 0
        %vm2102 = vcmask 56320
        %v2103 = vsel %vm2102, %v2101, 0
        %v2104 = vand.u32 %v2103, 65535
        %v2105 = vshrl.u32 %v2103, 16
        %v2106 = vcvt.s32.f32 %v2104
        %v2107 = vcvt.s32.f32 %v2105
        %2108 = vadd.xlane.f32.xlu0 %v2106
        %v2109 = vpop.xlane.xlu0 %2108
        %2110 = vadd.xlane.f32.xlu0 %v2107
        %v2111 = vpop.xlane.xlu0 %2110
        %v2112 = vcvt.f32.s32 %v2109
        %v2113 = vcvt.f32.s32 %v2111
        %v2114 = vshll.u32 %v2113, 16
        %v2115 = vadd.s32 %v2114, %v2112
        %vm2116 = vcmp.eq.s32.totalorder %v421, 6
        %v2117 = vsel %vm2116, %v2115, %v2099
        %vm2118 = vcmp.eq.s32.totalorder %v421, %v2115
        %v2119 = vsel %vm2118, %v1962, 0
        %v2120 = vsel %vm2102, %v2119, 0
        %v2121 = vand.u32 %v2120, 65535
        %v2122 = vshrl.u32 %v2120, 16
        %v2123 = vcvt.s32.f32 %v2121
        %v2124 = vcvt.s32.f32 %v2122
        %2125 = vadd.xlane.f32.xlu0 %v2123
        %v2126 = vpop.xlane.xlu0 %2125
        %2127 = vadd.xlane.f32.xlu0 %v2124
        %v2128 = vpop.xlane.xlu0 %2127
        %v2129 = vcvt.f32.s32 %v2126
        %v2130 = vcvt.f32.s32 %v2128
        %v2131 = vshll.u32 %v2130, 16
        %v2132 = vadd.s32 %v2131, %v2129
        %vm2133 = vcmp.eq.s32.totalorder %v421, 5
        %v2134 = vsel %vm2133, %v2132, %v2117
        %vm2135 = vcmp.eq.s32.totalorder %v421, %v2132
        %v2136 = vsel %vm2135, %v1902, 0
        %v2137 = vsel %vm2102, %v2136, 0
        %v2138 = vand.u32 %v2137, 65535
        %v2139 = vshrl.u32 %v2137, 16
        %v2140 = vcvt.s32.f32 %v2138
        %v2141 = vcvt.s32.f32 %v2139
        %2142 = vadd.xlane.f32.xlu0 %v2140
        %v2143 = vpop.xlane.xlu0 %2142
        %2144 = vadd.xlane.f32.xlu0 %v2141
        %v2145 = vpop.xlane.xlu0 %2144
        %v2146 = vcvt.f32.s32 %v2143
        %v2147 = vcvt.f32.s32 %v2145
        %v2148 = vshll.u32 %v2147, 16
        %v2149 = vadd.s32 %v2148, %v2146
        %v2150 = vsel %vm1521, %v2149, %v2134
        %vm2151 = vcmp.eq.s32.totalorder %v421, %v2149
        %v2152 = vsel %vm2151, %v1842, 0
        %v2153 = vsel %vm2102, %v2152, 0
        %v2154 = vand.u32 %v2153, 65535
        %v2155 = vshrl.u32 %v2153, 16
        %v2156 = vcvt.s32.f32 %v2154
        %v2157 = vcvt.s32.f32 %v2155
        %2158 = vadd.xlane.f32.xlu0 %v2156
        %v2159 = vpop.xlane.xlu0 %2158
        %2160 = vadd.xlane.f32.xlu0 %v2157
        %v2161 = vpop.xlane.xlu0 %2160
        %v2162 = vcvt.f32.s32 %v2159
        %v2163 = vcvt.f32.s32 %v2161
        %v2164 = vshll.u32 %v2163, 16
        %v2165 = vadd.s32 %v2164, %v2162
        %vm2166 = vcmp.eq.s32.totalorder %v421, 3
        %v2167 = vsel %vm2166, %v2165, %v2150
        %vm2168 = vcmp.eq.s32.totalorder %v421, %v2165
        %v2169 = vsel %vm2168, %v1782, 0
        %v2170 = vsel %vm2102, %v2169, 0
        %v2171 = vand.u32 %v2170, 65535
        %v2172 = vshrl.u32 %v2170, 16
        %v2173 = vcvt.s32.f32 %v2171
        %v2174 = vcvt.s32.f32 %v2172
        %2175 = vadd.xlane.f32.xlu0 %v2173
        %v2176 = vpop.xlane.xlu0 %2175
        %2177 = vadd.xlane.f32.xlu0 %v2174
        %v2178 = vpop.xlane.xlu0 %2177
        %v2179 = vcvt.f32.s32 %v2176
        %v2180 = vcvt.f32.s32 %v2178
        %v2181 = vshll.u32 %v2180, 16
        %v2182 = vadd.s32 %v2181, %v2179
        %vm2183 = vcmp.eq.s32.totalorder %v421, 2
        %v2184 = vsel %vm2183, %v2182, %v2167
        %vm2185 = vcmp.eq.s32.totalorder %v421, %v2182
        %v2186 = vsel %vm2185, %v1722, 0
        %v2187 = vsel %vm2102, %v2186, 0
        %v2188 = vand.u32 %v2187, 65535
        %v2189 = vshrl.u32 %v2187, 16
        %v2190 = vcvt.s32.f32 %v2188
        %v2191 = vcvt.s32.f32 %v2189
        %2192 = vadd.xlane.f32.xlu0 %v2190
        %v2193 = vpop.xlane.xlu0 %2192
        %2194 = vadd.xlane.f32.xlu0 %v2191
        %v2195 = vpop.xlane.xlu0 %2194
        %v2196 = vcvt.f32.s32 %v2193
        %v2197 = vcvt.f32.s32 %v2195
        %v2198 = vshll.u32 %v2197, 16
        %v2199 = vadd.s32 %v2198, %v2196
        %vm2200 = vcmp.eq.s32.totalorder %v421, 1
        %v2201 = vsel %vm2200, %v2199, %v2184
        %vm2202 = vcmp.eq.s32.totalorder %v421, %v2199
        %v2203 = vsel %vm2202, %v1662, 0
        %v2204 = vsel %vm2102, %v2203, 0
        %v2205 = vand.u32 %v2204, 65535
        %v2206 = vshrl.u32 %v2204, 16
        %v2207 = vcvt.s32.f32 %v2205
        %v2208 = vcvt.s32.f32 %v2206
        %2209 = vadd.xlane.f32.xlu0 %v2207
        %v2210 = vpop.xlane.xlu0 %2209
        %2211 = vadd.xlane.f32.xlu0 %v2208
        %v2212 = vpop.xlane.xlu0 %2211
        %v2213 = vcvt.f32.s32 %v2210
        %v2214 = vcvt.f32.s32 %v2212
        %v2215 = vshll.u32 %v2214, 16
        %v2216 = vadd.s32 %v2215, %v2213
        %vm2217 = vcmp.eq.s32.totalorder %v421, 0
        %v2218 = vsel %vm2217, %v2216, %v2201
        %vm2219 = vcmask 64512
        %2220 = vst.msk [vmem:[%s410] sm:$0xff] %vm2219, %v2218
        %p2221 = scmp.lt.s32.totalorder %s28, 1
        %s2222 = scalar_select %p2221, %s28, 1
        %s2223 = smul.addr %s2222, 8
        %s2224 = scalar_lea.vmem %s10, %s2223
        %s2225 = sand.u32 %s277, 1
        %s2226 = scalar_lea.sflag [#allocation4], %s2225
        %s2227 = sand.u32 %s277, 1
        %s2228 = smul.addr %s2227, 8
        %s2229 = scalar_lea.vmem [#allocation7], %s2228
        // Predicated region
        $region69: #{forward_batch.1} parent=59 // pred_check
          %p2230 = pneg %p261
        $region70: #{forward_batch.1} parent=59 // pred_check_branch
          %2232 = sbr.rel (%p2230) target = $region72
        $region71: #{forward_batch.1} parent=59 // pred_region
          _
        $region72: #{forward_batch.1} parent=59 // pred_fallthru
          _
        // Predicated region
        $region73: #{forward_batch.1} parent=59 // pred_check
          %p2233 = pneg %p287
        $region74: #{forward_batch.1} parent=59 // pred_check_branch
          %2235 = sbr.rel (%p2233) target = $region76
        $region75: #{forward_batch.1} parent=59 // pred_region
          %s2237 = ssub.s32 128, 128
          %2238 = vsyncadd %s2226, %s2237
          %s2239 = smul.addr %s28, 128
          %s2240 = scalar_lea.hbm %s11, %s2239
          %s2242 = sshll.u32 %s2229, 4
          %s2243 = int_to_ptr.vmem [resolvable:$true] %s2242
          %2245 = dma.vmem_to_hbm [thread:$0]  %s2243, 128, %s2240, %s2226
        $region76: #{forward_batch.1} parent=59 // pred_fallthru
          _
      $region60: #{forward_batch.1} parent=5 // pred_fallthru
        _
      %p2246 = scmp.le.s32.totalorder 2, %s23
      // Predicated region
      $region77: #{forward_batch.1} parent=5 // pred_check
        %p2247 = pneg %p2246
      $region78: #{forward_batch.1} parent=5 // pred_check_branch
        %2249 = sbr.rel (%p2247) target = $region80
      $region79: #{forward_batch.1} parent=5 // pred_region
        %s2250 = ssub.s32 %s23, 2
        // Predicated region
        $region81: #{forward_batch.1} parent=79 // pred_check
          %p2251 = pneg %p267
        $region82: #{forward_batch.1} parent=79 // pred_check_branch
          %2253 = sbr.rel (%p2251) target = $region84
        $region83: #{forward_batch.1} parent=79 // pred_region
          %p2254 = scmp.lt.s32.totalorder %s29, 1
          %s2255 = scalar_select %p2254, %s29, 1
          %s2256 = smul.addr %s2255, 8
          %s2257 = scalar_lea.vmem %s10, %s2256
        $region84: #{forward_batch.1} parent=79 // pred_fallthru
          _
        // Predicated region
        $region85: #{forward_batch.1} parent=79 // pred_check
          %p2258 = pneg %p293
        $region86: #{forward_batch.1} parent=79 // pred_check_branch
          %2260 = sbr.rel (%p2258) target = $region88
        $region87: #{forward_batch.1} parent=79 // pred_region
          %s2261 = sand.u32 %s278, 1
          %s2262 = scalar_lea.sflag [#allocation4], %s2261
          %s2263 = sand.u32 %s278, 1
          %s2264 = smul.addr %s2263, 8
          %s2265 = scalar_lea.vmem [#allocation7], %s2264
          %2266 = dma.done %s2262, 128
        $region88: #{forward_batch.1} parent=79 // pred_fallthru
          _
      $region80: #{forward_batch.1} parent=5 // pred_fallthru
        _
    $region6: #{forward_batch.1} parent=1 // loop_footer
      %s27 = sadd.s32 1, %s23
    $region7: #{forward_batch.1} parent=1 // loop_footer_branch
      %22 = sbr.rel target = $region3
    $region8: #{forward_batch.1} parent=1 // loop_exit
      _
    %2267 = vsyncpa [#allocation3], 1
    %s2268 = scalar_lea.sflag [#allocation3], 1
    %2269 = vsyncpa %s2268, 1
    %2270 = vsyncpa [#allocation6], 1
    %2271 = vsyncpa [#allocation4], 1
    %s2272 = scalar_lea.sflag [#allocation4], 1
    %2273 = vsyncpa %s2272, 1

</llo_original>
